<compile_context>
chip_gen: v5e
topology: v5e:2x2
jax: 0.10.0
libtpu: 0.0.40
codegen_flags: <defaults>
</compile_context>

<pallas_src>
import jax
import jax.numpy as jnp
import numpy as np
from jax import lax
from jax.experimental import pallas as pl
from jax.experimental.pallas import tpu as pltpu


def _upconv_flow_kernel(x_ref, w_ref, b1_ref, w2t_ref, b2_ref,
                        conv_ref, flow_ref):
    # x_ref   : (1, 1, Hs+2, W+2, Cin)   original-res tile (clamped halo + edge-pad)
    # w_ref   : (16, Cin, Cout)          phase-folded 3x3 weights (py, px, a, b)
    # b1_ref  : (1, Cout)
    # w2t_ref : (2, Cout)                transposed 1x1 ("predict_flow") weights
    # b2_ref  : (2, 1, 1)
    # conv_ref: (1, 2, 2, Hs, W, Cout)   dims: (batch, row phase, col phase, row, col, ch)
    # flow_ref: (1, 2, 2, 2, Hs, W)      dims: (batch, flow ch, row phase, col phase, row, col)
    hs = conv_ref.shape[3]
    w = conv_ref.shape[4]
    cout = conv_ref.shape[5]

    xt = x_ref[0, 0]                     # (Hs+2, W+2, Cin)
    b1 = b1_ref[0]                       # (Cout,)

    for py in range(2):                  # output row phase
        for px in range(2):              # output column phase
            acc = jnp.zeros((hs, w, cout), jnp.float32)
            for a in range(2):           # folded row taps
                for b in range(2):       # folded column taps
                    xs = xt[py + a:py + a + hs, px + b:px + b + w, :]
                    wt = w_ref[(py * 2 + px) * 4 + a * 2 + b]   # (Cin, Cout)
                    acc = acc + lax.dot_general(
                        xs, wt,
                        dimension_numbers=(((2,), (0,)), ((), ())),
                        preferred_element_type=jnp.float32)
            conv = jnp.maximum(acc + b1, 0.0)                   # bias + ReLU
            conv_ref[0, py, px] = conv.astype(conv_ref.dtype)

            # 1x1 conv -> tanh -> *256, one lane-dense (Hs, W) slab per channel.
            for c in range(2):
                f = jnp.sum(conv * w2t_ref[c], axis=-1) + b2_ref[c]
                flow_ref[0, c, py, px] = (jnp.tanh(f) * 256.0).astype(flow_ref.dtype)


def _round_up(x, m):
    return ((x + m - 1) // m) * m


def _pick_h_tile(H, W, cin, cout, budget_bytes=16 * 1024 * 1024):
    """Pick Hs = original-resolution rows per tile (output tile height = 2*Hs)."""
    def step_bytes(hs):
        cin_l = _round_up(cin, 128)
        cout_l = _round_up(cout, 128)
        x_blk = (hs + 2) * _round_up(W + 2, 8) * cin_l * 4           # input tile
        conv_blk = 4 * hs * _round_up(W, 8) * cout_l * 4             # conv out tile
        flow_blk = 8 * _round_up(hs, 8) * _round_up(W, 128) * 4      # flow out tile
        acc = hs * _round_up(W, 8) * cout_l * 4                      # live accumulator
        return 2 * x_blk + 2 * conv_blk + 2 * flow_blk + 2 * acc

    divisors = [d for d in range(1, H + 1) if H % d == 0]
    # Hs is the second-minor dim of the flow output block -> multiple of 8
    # unless it spans the whole array.
    valid = [d for d in divisors if d % 8 == 0 or d == H]
    multi = [d for d in valid if d < H and step_bytes(d) <= budget_bytes]
    if multi:                    # prefer >=2 tiles (pipelining / megacore split)
        return max(multi)
    fit = [d for d in valid if step_bytes(d) <= budget_bytes]
    if fit:
        return max(fit)
    return min(valid)            # last resort: smallest legal tile


@jax.jit
def upsample_conv2d_and_predict_flow(x_nchw, w1_hwio, b1, w2_io, b2):
    """Forward of the PyTorch module.

    x_nchw : (N, Cin, H, W) float32
    w1_hwio: (3, 3, Cin, Cout)  (torch Conv2d weight (Cout,Cin,3,3) -> HWIO)
    b1     : (Cout,)
    w2_io  : (Cout, 2)          (torch Conv2d weight (2,Cout,1,1) -> (Cout,2))
    b2     : (2,)
    Returns (cat([conv, flow], dim=1), flow), both NCHW.
    """
    N, Cin, H, W = x_nchw.shape
    Cout = w1_hwio.shape[-1]
    Ho, Wo = 2 * H, 2 * W

    hs = _pick_h_tile(H, W, Cin, Cout)
    n_h = H // hs

    # ---- cheap original-resolution prep (no upsampled tensor in HBM) ----
    x = jnp.transpose(x_nchw, (0, 2, 3, 1))                          # NHWC
    x = jnp.pad(x, ((0, 0), (0, 0), (1, 1), (0, 0)), mode="edge")    # W halo
    # Overlapping H tiles with a 1-row clamped halo on each side.  Combined
    # with the phase-folded weights below, edge clamping == ReflectionPad2d(1)
    # applied after a nearest-x2 upsample.
    row_idx = np.clip(
        np.arange(n_h)[:, None] * hs + np.arange(hs + 2)[None, :] - 1, 0, H - 1)
    x_tiles = x[:, row_idx]                        # (N, n_h, hs+2, W+2, Cin)

    # Fold BOTH the row and the column upsample into the 3x3 weights: per
    # output phase (py, px) the conv reduces to a 2x2 tap stencil on the
    # original-resolution image with summed weights.
    row_fold = [
        [w1_hwio[0], w1_hwio[1] + w1_hwio[2]],     # py = 0: taps a = 0, 1
        [w1_hwio[0] + w1_hwio[1], w1_hwio[2]],     # py = 1
    ]
    w_taps = []
    for py in range(2):
        for px in range(2):
            for a in range(2):
                A = row_fold[py][a]                # (3, Cin, Cout) over kernel cols
                if px == 0:
                    col_fold = [A[0], A[1] + A[2]]
                else:
                    col_fold = [A[0] + A[1], A[2]]
                for b in range(2):
                    w_taps.append(col_fold[b])
    w_fold = jnp.stack(w_taps, axis=0)             # (16, Cin, Cout)

    b1_2d = b1.reshape(1, Cout)
    w2_t = jnp.transpose(w2_io)                    # (2, Cout)
    b2_3d = b2.reshape(2, 1, 1)

    flops = 2 * N * Ho * Wo * (4 * Cin * Cout) + 2 * N * Ho * Wo * (2 * Cout)
    bytes_accessed = 4 * (x_tiles.size + w_fold.size + b1.size + w2_io.size
                          + b2.size + N * Ho * Wo * Cout + N * Ho * Wo * 2)

    conv_ph, flow_ph = pl.pallas_call(
        _upconv_flow_kernel,
        out_shape=(
            jax.ShapeDtypeStruct((N, 2, 2, H, W, Cout), jnp.float32),
            jax.ShapeDtypeStruct((N, 2, 2, 2, H, W), jnp.float32),
        ),
        grid_spec=pltpu.PrefetchScalarGridSpec(
            num_scalar_prefetch=0,
            grid=(N, n_h),
            in_specs=[
                pl.BlockSpec((1, 1, hs + 2, W + 2, Cin),
                             lambda n, t: (n, t, 0, 0, 0)),
                pl.BlockSpec((16, Cin, Cout), lambda n, t: (0, 0, 0)),
                pl.BlockSpec((1, Cout), lambda n, t: (0, 0)),
                pl.BlockSpec((2, Cout), lambda n, t: (0, 0)),
                pl.BlockSpec((2, 1, 1), lambda n, t: (0, 0, 0)),
            ],
            out_specs=[
                pl.BlockSpec((1, 2, 2, hs, W, Cout),
                             lambda n, t: (n, 0, 0, t, 0, 0)),
                pl.BlockSpec((1, 2, 2, 2, hs, W),
                             lambda n, t: (n, 0, 0, 0, t, 0)),
            ],
        ),
        compiler_params=pltpu.CompilerParams(
            dimension_semantics=("parallel", "parallel"),
            vmem_limit_bytes=48 * 1024 * 1024),
        cost_estimate=pl.CostEstimate(
            flops=flops,
            transcendentals=2 * N * Ho * Wo,
            bytes_accessed=bytes_accessed),
    )(x_tiles, w_fold, b1_2d, w2_t, b2_3d)

    # ---- layout plumbing back to the module's NCHW outputs ----
    # conv_ph[n, py, px, i, j, co] -> conv[n, co, 2i+py, 2j+px]
    conv_nchw = jnp.transpose(conv_ph, (0, 5, 3, 1, 4, 2)).reshape(N, Cout, Ho, Wo)
    # flow_ph[n, c, py, px, i, j] -> flow[n, c, 2i+py, 2j+px]
    flow_nchw = jnp.transpose(flow_ph, (0, 1, 4, 2, 5, 3)).reshape(N, 2, Ho, Wo)
    return jnp.concatenate([conv_nchw, flow_nchw], axis=1), flow_nchw


def _reference(x_nchw, w1_hwio, b1, w2_io, b2):
    """Pure-JAX (XLA conv) reference for numerical validation."""
    x = jnp.transpose(x_nchw, (0, 2, 3, 1))
    x_up = jnp.repeat(jnp.repeat(x, 2, axis=1), 2, axis=2)
    x_pad = jnp.pad(x_up, ((0, 0), (1, 1), (1, 1), (0, 0)), mode="reflect")
    conv = lax.conv_general_dilated(
        x_pad, w1_hwio, window_strides=(1, 1), padding="VALID",
        dimension_numbers=("NHWC", "HWIO", "NHWC"))
    conv = jnp.maximum(conv + b1, 0.0)
    flow = jnp.tanh(jnp.einsum("nhwc,co->nhwo", conv, w2_io) + b2) * 256.0
    conv_nchw = jnp.transpose(conv, (0, 3, 1, 2))
    flow_nchw = jnp.transpose(flow, (0, 3, 1, 2))
    return jnp.concatenate([conv_nchw, flow_nchw], axis=1), flow_nchw


if __name__ == "__main__":
    # Small, deterministic example consistent with the module (NCHW input).
    N, Cin, H, W = 2, 4, 16, 16
    Cout = 8
    key = jax.random.PRNGKey(0)
    kx, kw1, kb1, kw2, kb2 = jax.random.split(key, 5)

    x = jax.random.normal(kx, (N, Cin, H, W), jnp.float32)
    # Conv2d(Cin, Cout, 3): torch weight (Cout, Cin, 3, 3) -> HWIO here.
    fan1 = Cin * 3 * 3
    w1 = jax.random.uniform(kw1, (3, 3, Cin, Cout), jnp.float32,
                            minval=-1.0, maxval=1.0) / np.sqrt(fan1)
    b1 = jax.random.uniform(kb1, (Cout,), jnp.float32,
                            minval=-1.0, maxval=1.0) / np.sqrt(fan1)
    # Conv2d(Cout, 2, 1): torch weight (2, Cout, 1, 1) -> (Cout, 2) here.
    fan2 = Cout
    w2 = jax.random.uniform(kw2, (Cout, 2), jnp.float32,
                            minval=-1.0, maxval=1.0) / np.sqrt(fan2)
    b2 = jax.random.uniform(kb2, (2,), jnp.float32,
                            minval=-1.0, maxval=1.0) / np.sqrt(fan2)

    out_cat, flow = upsample_conv2d_and_predict_flow(x, w1, b1, w2, b2)
    jax.block_until_ready((out_cat, flow))

    assert out_cat.shape == (N, Cout + 2, 2 * H, 2 * W), out_cat.shape
    assert flow.shape == (N, 2, 2 * H, 2 * W), flow.shape

    ref_cat, ref_flow = _reference(x, w1, b1, w2, b2)
    np.testing.assert_allclose(np.asarray(out_cat), np.asarray(ref_cat),
                               rtol=1e-4, atol=2e-3)
    np.testing.assert_allclose(np.asarray(flow), np.asarray(ref_flow),
                               rtol=1e-4, atol=2e-3)

    print("KERNEL_OK")
</pallas_src>

<mosaic_0001>
module attributes {stable_mosaic.version = 11 : i64} {
  func.func @_upconv_flow_kernel(%arg0: i32, %arg1: i32, %arg2: memref<1x1x10x18x4xf32, #tpu.memory_space<vmem>>, %arg3: memref<16x4x8xf32, #tpu.memory_space<vmem>>, %arg4: memref<1x8xf32, #tpu.memory_space<vmem>>, %arg5: memref<2x8xf32, #tpu.memory_space<vmem>>, %arg6: memref<2x1x1xf32, #tpu.memory_space<vmem>>, %arg7: memref<1x2x2x8x16x8xf32, #tpu.memory_space<vmem>>, %arg8: memref<1x2x2x2x8x16xf32, #tpu.memory_space<vmem>>) attributes {dimension_semantics = [#tpu.dimension_semantics<parallel>, #tpu.dimension_semantics<parallel>], iteration_bounds = array<i64: 2, 2>, scalar_prefetch = 0 : i64, scratch_operands = 0 : i64, tpu.core_type = #tpu.core_type<tc>, window_params = [{transform_indices = @transform_0, window_bounds = array<i64: 1, 1, 10, 18, 4>}, {pipeline_mode = #tpu.pipeline_mode<synchronous>, transform_indices = @transform_1, window_bounds = array<i64: 16, 4, 8>}, {pipeline_mode = #tpu.pipeline_mode<synchronous>, transform_indices = @transform_2, window_bounds = array<i64: 1, 8>}, {pipeline_mode = #tpu.pipeline_mode<synchronous>, transform_indices = @transform_3, window_bounds = array<i64: 2, 8>}, {pipeline_mode = #tpu.pipeline_mode<synchronous>, transform_indices = @transform_4, window_bounds = array<i64: 2, 1, 1>}, {transform_indices = @transform_5, window_bounds = array<i64: 1, 2, 2, 8, 16, 8>}, {transform_indices = @transform_6, window_bounds = array<i64: 1, 2, 2, 2, 8, 16>}]} {
    %c0 = arith.constant 0 : index
    %c0_0 = arith.constant 0 : index
    %c0_1 = arith.constant 0 : index
    %c0_2 = arith.constant 0 : index
    %c0_3 = arith.constant 0 : index
    %0 = vector.load %arg2[%c0, %c0_0, %c0_1, %c0_2, %c0_3] : memref<1x1x10x18x4xf32, #tpu.memory_space<vmem>>, vector<1x1x10x18x4xf32>
    %1 = vector.shape_cast %0 : vector<1x1x10x18x4xf32> to vector<10x18x4xf32>
    %c0_4 = arith.constant 0 : index
    %c0_5 = arith.constant 0 : index
    %2 = vector.load %arg4[%c0_4, %c0_5] : memref<1x8xf32, #tpu.memory_space<vmem>>, vector<1x8xf32>
    %3 = vector.shape_cast %2 : vector<1x8xf32> to vector<8xf32>
    %cst = arith.constant 0.000000e+00 : f32
    %4 = vector.broadcast %cst : f32 to vector<8x16x8xf32>
    %5 = vector.extract_strided_slice %1 {offsets = [0, 0, 0], sizes = [8, 16, 4], strides = [1, 1, 1]} : vector<10x18x4xf32> to vector<8x16x4xf32>
    %c0_6 = arith.constant 0 : index
    %c0_7 = arith.constant 0 : index
    %c0_8 = arith.constant 0 : index
    %6 = vector.load %arg3[%c0_6, %c0_7, %c0_8] : memref<16x4x8xf32, #tpu.memory_space<vmem>>, vector<1x4x8xf32>
    %7 = vector.shape_cast %6 : vector<1x4x8xf32> to vector<4x8xf32>
    %cst_9 = arith.constant dense<0.000000e+00> : vector<8x16x8xf32>
    %8 = tpu.matmul %5, %7, %cst_9 {dimension_numbers = #tpu.dot_dimension_numbers<[2], [0], [0, 1], [1], [0, 0, 0, 1, 1, 1], [], []>} : vector<8x16x4xf32>, vector<4x8xf32>, vector<8x16x8xf32> -> vector<8x16x8xf32>
    %9 = arith.addf %4, %8 : vector<8x16x8xf32>
    %10 = vector.extract_strided_slice %1 {offsets = [0, 1, 0], sizes = [8, 16, 4], strides = [1, 1, 1]} : vector<10x18x4xf32> to vector<8x16x4xf32>
    %c1 = arith.constant 1 : index
    %c0_10 = arith.constant 0 : index
    %c0_11 = arith.constant 0 : index
    %11 = vector.load %arg3[%c1, %c0_10, %c0_11] : memref<16x4x8xf32, #tpu.memory_space<vmem>>, vector<1x4x8xf32>
    %12 = vector.shape_cast %11 : vector<1x4x8xf32> to vector<4x8xf32>
    %cst_12 = arith.constant dense<0.000000e+00> : vector<8x16x8xf32>
    %13 = tpu.matmul %10, %12, %cst_12 {dimension_numbers = #tpu.dot_dimension_numbers<[2], [0], [0, 1], [1], [0, 0, 0, 1, 1, 1], [], []>} : vector<8x16x4xf32>, vector<4x8xf32>, vector<8x16x8xf32> -> vector<8x16x8xf32>
    %14 = arith.addf %9, %13 : vector<8x16x8xf32>
    %15 = vector.extract_strided_slice %1 {offsets = [1, 0, 0], sizes = [8, 16, 4], strides = [1, 1, 1]} : vector<10x18x4xf32> to vector<8x16x4xf32>
    %c2 = arith.constant 2 : index
    %c0_13 = arith.constant 0 : index
    %c0_14 = arith.constant 0 : index
    %16 = vector.load %arg3[%c2, %c0_13, %c0_14] : memref<16x4x8xf32, #tpu.memory_space<vmem>>, vector<1x4x8xf32>
    %17 = vector.shape_cast %16 : vector<1x4x8xf32> to vector<4x8xf32>
    %cst_15 = arith.constant dense<0.000000e+00> : vector<8x16x8xf32>
    %18 = tpu.matmul %15, %17, %cst_15 {dimension_numbers = #tpu.dot_dimension_numbers<[2], [0], [0, 1], [1], [0, 0, 0, 1, 1, 1], [], []>} : vector<8x16x4xf32>, vector<4x8xf32>, vector<8x16x8xf32> -> vector<8x16x8xf32>
    %19 = arith.addf %14, %18 : vector<8x16x8xf32>
    %20 = vector.extract_strided_slice %1 {offsets = [1, 1, 0], sizes = [8, 16, 4], strides = [1, 1, 1]} : vector<10x18x4xf32> to vector<8x16x4xf32>
    %c3 = arith.constant 3 : index
    %c0_16 = arith.constant 0 : index
    %c0_17 = arith.constant 0 : index
    %21 = vector.load %arg3[%c3, %c0_16, %c0_17] : memref<16x4x8xf32, #tpu.memory_space<vmem>>, vector<1x4x8xf32>
    %22 = vector.shape_cast %21 : vector<1x4x8xf32> to vector<4x8xf32>
    %cst_18 = arith.constant dense<0.000000e+00> : vector<8x16x8xf32>
    %23 = tpu.matmul %20, %22, %cst_18 {dimension_numbers = #tpu.dot_dimension_numbers<[2], [0], [0, 1], [1], [0, 0, 0, 1, 1, 1], [], []>} : vector<8x16x4xf32>, vector<4x8xf32>, vector<8x16x8xf32> -> vector<8x16x8xf32>
    %24 = arith.addf %19, %23 : vector<8x16x8xf32>
    %25 = vector.shape_cast %3 : vector<8xf32> to vector<1x1x8xf32>
    %26 = vector.broadcast %25 : vector<1x1x8xf32> to vector<8x16x8xf32>
    %27 = arith.addf %24, %26 : vector<8x16x8xf32>
    %cst_19 = arith.constant 0.000000e+00 : f32
    %28 = vector.broadcast %cst_19 : f32 to vector<8x16x8xf32>
    %29 = arith.maximumf %27, %28 : vector<8x16x8xf32>
    %c0_20 = arith.constant 0 : index
    %c0_21 = arith.constant 0 : index
    %c0_22 = arith.constant 0 : index
    %c0_23 = arith.constant 0 : index
    %c0_24 = arith.constant 0 : index
    %c0_25 = arith.constant 0 : index
    %30 = vector.load %arg7[%c0_20, %c0_21, %c0_22, %c0_23, %c0_24, %c0_25] : memref<1x2x2x8x16x8xf32, #tpu.memory_space<vmem>>, vector<1x1x1x8x16x8xf32>
    %31 = vector.shape_cast %30 : vector<1x1x1x8x16x8xf32> to vector<8x16x8xf32>
    %32 = vector.shape_cast %29 : vector<8x16x8xf32> to vector<1x1x1x8x16x8xf32>
    tpu.vector_store %arg7[%c0_20, %c0_21, %c0_22, %c0_23, %c0_24, %c0_25], %32 {strides = array<i32>} : memref<1x2x2x8x16x8xf32, #tpu.memory_space<vmem>>, vector<1x1x1x8x16x8xf32>,
    %c0_26 = arith.constant 0 : index
    %c0_27 = arith.constant 0 : index
    %33 = vector.load %arg5[%c0_26, %c0_27] : memref<2x8xf32, #tpu.memory_space<vmem>>, vector<1x8xf32>
    %34 = vector.shape_cast %33 : vector<1x8xf32> to vector<8xf32>
    %35 = vector.shape_cast %34 : vector<8xf32> to vector<1x1x8xf32>
    %36 = vector.broadcast %35 : vector<1x1x8xf32> to vector<8x16x8xf32>
    %37 = arith.mulf %29, %36 : vector<8x16x8xf32>
    %cst_28 = arith.constant dense<0.000000e+00> : vector<8x16xf32>
    %38 = vector.multi_reduction <add>, %37, %cst_28 [2] : vector<8x16x8xf32> to vector<8x16xf32>
    %c0_29 = arith.constant 0 : index
    %c0_30 = arith.constant 0 : index
    %c0_31 = arith.constant 0 : index
    %39 = vector.load %arg6[%c0_29, %c0_30, %c0_31] : memref<2x1x1xf32, #tpu.memory_space<vmem>>, vector<1x1x1xf32>
    %40 = vector.shape_cast %39 : vector<1x1x1xf32> to vector<1x1xf32>
    %41 = vector.broadcast %40 : vector<1x1xf32> to vector<8x16xf32>
    %42 = arith.addf %38, %41 : vector<8x16xf32>
    %43 = math.tanh %42 : vector<8x16xf32>
    %cst_32 = arith.constant 2.560000e+02 : f32
    %44 = vector.broadcast %cst_32 : f32 to vector<8x16xf32>
    %45 = arith.mulf %43, %44 : vector<8x16xf32>
    %c0_33 = arith.constant 0 : index
    %c0_34 = arith.constant 0 : index
    %c0_35 = arith.constant 0 : index
    %c0_36 = arith.constant 0 : index
    %c0_37 = arith.constant 0 : index
    %c0_38 = arith.constant 0 : index
    %46 = vector.load %arg8[%c0_33, %c0_34, %c0_35, %c0_36, %c0_37, %c0_38] : memref<1x2x2x2x8x16xf32, #tpu.memory_space<vmem>>, vector<1x1x1x1x8x16xf32>
    %47 = vector.shape_cast %46 : vector<1x1x1x1x8x16xf32> to vector<8x16xf32>
    %48 = vector.shape_cast %45 : vector<8x16xf32> to vector<1x1x1x1x8x16xf32>
    tpu.vector_store %arg8[%c0_33, %c0_34, %c0_35, %c0_36, %c0_37, %c0_38], %48 {strides = array<i32>} : memref<1x2x2x2x8x16xf32, #tpu.memory_space<vmem>>, vector<1x1x1x1x8x16xf32>,
    %c1_39 = arith.constant 1 : index
    %c0_40 = arith.constant 0 : index
    %49 = vector.load %arg5[%c1_39, %c0_40] : memref<2x8xf32, #tpu.memory_space<vmem>>, vector<1x8xf32>
    %50 = vector.shape_cast %49 : vector<1x8xf32> to vector<8xf32>
    %51 = vector.shape_cast %50 : vector<8xf32> to vector<1x1x8xf32>
    %52 = vector.broadcast %51 : vector<1x1x8xf32> to vector<8x16x8xf32>
    %53 = arith.mulf %29, %52 : vector<8x16x8xf32>
    %cst_41 = arith.constant dense<0.000000e+00> : vector<8x16xf32>
    %54 = vector.multi_reduction <add>, %53, %cst_41 [2] : vector<8x16x8xf32> to vector<8x16xf32>
    %c1_42 = arith.constant 1 : index
    %c0_43 = arith.constant 0 : index
    %c0_44 = arith.constant 0 : index
    %55 = vector.load %arg6[%c1_42, %c0_43, %c0_44] : memref<2x1x1xf32, #tpu.memory_space<vmem>>, vector<1x1x1xf32>
    %56 = vector.shape_cast %55 : vector<1x1x1xf32> to vector<1x1xf32>
    %57 = vector.broadcast %56 : vector<1x1xf32> to vector<8x16xf32>
    %58 = arith.addf %54, %57 : vector<8x16xf32>
    %59 = math.tanh %58 : vector<8x16xf32>
    %cst_45 = arith.constant 2.560000e+02 : f32
    %60 = vector.broadcast %cst_45 : f32 to vector<8x16xf32>
    %61 = arith.mulf %59, %60 : vector<8x16xf32>
    %c0_46 = arith.constant 0 : index
    %c1_47 = arith.constant 1 : index
    %c0_48 = arith.constant 0 : index
    %c0_49 = arith.constant 0 : index
    %c0_50 = arith.constant 0 : index
    %c0_51 = arith.constant 0 : index
    %62 = vector.load %arg8[%c0_46, %c1_47, %c0_48, %c0_49, %c0_50, %c0_51] : memref<1x2x2x2x8x16xf32, #tpu.memory_space<vmem>>, vector<1x1x1x1x8x16xf32>
    %63 = vector.shape_cast %62 : vector<1x1x1x1x8x16xf32> to vector<8x16xf32>
    %64 = vector.shape_cast %61 : vector<8x16xf32> to vector<1x1x1x1x8x16xf32>
    tpu.vector_store %arg8[%c0_46, %c1_47, %c0_48, %c0_49, %c0_50, %c0_51], %64 {strides = array<i32>} : memref<1x2x2x2x8x16xf32, #tpu.memory_space<vmem>>, vector<1x1x1x1x8x16xf32>,
    %cst_52 = arith.constant 0.000000e+00 : f32
    %65 = vector.broadcast %cst_52 : f32 to vector<8x16x8xf32>
    %66 = vector.extract_strided_slice %1 {offsets = [0, 1, 0], sizes = [8, 16, 4], strides = [1, 1, 1]} : vector<10x18x4xf32> to vector<8x16x4xf32>
    %c4 = arith.constant 4 : index
    %c0_53 = arith.constant 0 : index
    %c0_54 = arith.constant 0 : index
    %67 = vector.load %arg3[%c4, %c0_53, %c0_54] : memref<16x4x8xf32, #tpu.memory_space<vmem>>, vector<1x4x8xf32>
    %68 = vector.shape_cast %67 : vector<1x4x8xf32> to vector<4x8xf32>
    %cst_55 = arith.constant dense<0.000000e+00> : vector<8x16x8xf32>
    %69 = tpu.matmul %66, %68, %cst_55 {dimension_numbers = #tpu.dot_dimension_numbers<[2], [0], [0, 1], [1], [0, 0, 0, 1, 1, 1], [], []>} : vector<8x16x4xf32>, vector<4x8xf32>, vector<8x16x8xf32> -> vector<8x16x8xf32>
    %70 = arith.addf %65, %69 : vector<8x16x8xf32>
    %71 = vector.extract_strided_slice %1 {offsets = [0, 2, 0], sizes = [8, 16, 4], strides = [1, 1, 1]} : vector<10x18x4xf32> to vector<8x16x4xf32>
    %c5 = arith.constant 5 : index
    %c0_56 = arith.constant 0 : index
    %c0_57 = arith.constant 0 : index
    %72 = vector.load %arg3[%c5, %c0_56, %c0_57] : memref<16x4x8xf32, #tpu.memory_space<vmem>>, vector<1x4x8xf32>
    %73 = vector.shape_cast %72 : vector<1x4x8xf32> to vector<4x8xf32>
    %cst_58 = arith.constant dense<0.000000e+00> : vector<8x16x8xf32>
    %74 = tpu.matmul %71, %73, %cst_58 {dimension_numbers = #tpu.dot_dimension_numbers<[2], [0], [0, 1], [1], [0, 0, 0, 1, 1, 1], [], []>} : vector<8x16x4xf32>, vector<4x8xf32>, vector<8x16x8xf32> -> vector<8x16x8xf32>
    %75 = arith.addf %70, %74 : vector<8x16x8xf32>
    %76 = vector.extract_strided_slice %1 {offsets = [1, 1, 0], sizes = [8, 16, 4], strides = [1, 1, 1]} : vector<10x18x4xf32> to vector<8x16x4xf32>
    %c6 = arith.constant 6 : index
    %c0_59 = arith.constant 0 : index
    %c0_60 = arith.constant 0 : index
    %77 = vector.load %arg3[%c6, %c0_59, %c0_60] : memref<16x4x8xf32, #tpu.memory_space<vmem>>, vector<1x4x8xf32>
    %78 = vector.shape_cast %77 : vector<1x4x8xf32> to vector<4x8xf32>
    %cst_61 = arith.constant dense<0.000000e+00> : vector<8x16x8xf32>
    %79 = tpu.matmul %76, %78, %cst_61 {dimension_numbers = #tpu.dot_dimension_numbers<[2], [0], [0, 1], [1], [0, 0, 0, 1, 1, 1], [], []>} : vector<8x16x4xf32>, vector<4x8xf32>, vector<8x16x8xf32> -> vector<8x16x8xf32>
    %80 = arith.addf %75, %79 : vector<8x16x8xf32>
    %81 = vector.extract_strided_slice %1 {offsets = [1, 2, 0], sizes = [8, 16, 4], strides = [1, 1, 1]} : vector<10x18x4xf32> to vector<8x16x4xf32>
    %c7 = arith.constant 7 : index
    %c0_62 = arith.constant 0 : index
    %c0_63 = arith.constant 0 : index
    %82 = vector.load %arg3[%c7, %c0_62, %c0_63] : memref<16x4x8xf32, #tpu.memory_space<vmem>>, vector<1x4x8xf32>
    %83 = vector.shape_cast %82 : vector<1x4x8xf32> to vector<4x8xf32>
    %cst_64 = arith.constant dense<0.000000e+00> : vector<8x16x8xf32>
    %84 = tpu.matmul %81, %83, %cst_64 {dimension_numbers = #tpu.dot_dimension_numbers<[2], [0], [0, 1], [1], [0, 0, 0, 1, 1, 1], [], []>} : vector<8x16x4xf32>, vector<4x8xf32>, vector<8x16x8xf32> -> vector<8x16x8xf32>
    %85 = arith.addf %80, %84 : vector<8x16x8xf32>
    %86 = vector.shape_cast %3 : vector<8xf32> to vector<1x1x8xf32>
    %87 = vector.broadcast %86 : vector<1x1x8xf32> to vector<8x16x8xf32>
    %88 = arith.addf %85, %87 : vector<8x16x8xf32>
    %cst_65 = arith.constant 0.000000e+00 : f32
    %89 = vector.broadcast %cst_65 : f32 to vector<8x16x8xf32>
    %90 = arith.maximumf %88, %89 : vector<8x16x8xf32>
    %c0_66 = arith.constant 0 : index
    %c0_67 = arith.constant 0 : index
    %c1_68 = arith.constant 1 : index
    %c0_69 = arith.constant 0 : index
    %c0_70 = arith.constant 0 : index
    %c0_71 = arith.constant 0 : index
    %91 = vector.load %arg7[%c0_66, %c0_67, %c1_68, %c0_69, %c0_70, %c0_71] : memref<1x2x2x8x16x8xf32, #tpu.memory_space<vmem>>, vector<1x1x1x8x16x8xf32>
    %92 = vector.shape_cast %91 : vector<1x1x1x8x16x8xf32> to vector<8x16x8xf32>
    %93 = vector.shape_cast %90 : vector<8x16x8xf32> to vector<1x1x1x8x16x8xf32>
    tpu.vector_store %arg7[%c0_66, %c0_67, %c1_68, %c0_69, %c0_70, %c0_71], %93 {strides = array<i32>} : memref<1x2x2x8x16x8xf32, #tpu.memory_space<vmem>>, vector<1x1x1x8x16x8xf32>,
    %c0_72 = arith.constant 0 : index
    %c0_73 = arith.constant 0 : index
    %94 = vector.load %arg5[%c0_72, %c0_73] : memref<2x8xf32, #tpu.memory_space<vmem>>, vector<1x8xf32>
    %95 = vector.shape_cast %94 : vector<1x8xf32> to vector<8xf32>
    %96 = vector.shape_cast %95 : vector<8xf32> to vector<1x1x8xf32>
    %97 = vector.broadcast %96 : vector<1x1x8xf32> to vector<8x16x8xf32>
    %98 = arith.mulf %90, %97 : vector<8x16x8xf32>
    %cst_74 = arith.constant dense<0.000000e+00> : vector<8x16xf32>
    %99 = vector.multi_reduction <add>, %98, %cst_74 [2] : vector<8x16x8xf32> to vector<8x16xf32>
    %c0_75 = arith.constant 0 : index
    %c0_76 = arith.constant 0 : index
    %c0_77 = arith.constant 0 : index
    %100 = vector.load %arg6[%c0_75, %c0_76, %c0_77] : memref<2x1x1xf32, #tpu.memory_space<vmem>>, vector<1x1x1xf32>
    %101 = vector.shape_cast %100 : vector<1x1x1xf32> to vector<1x1xf32>
    %102 = vector.broadcast %101 : vector<1x1xf32> to vector<8x16xf32>
    %103 = arith.addf %99, %102 : vector<8x16xf32>
    %104 = math.tanh %103 : vector<8x16xf32>
    %cst_78 = arith.constant 2.560000e+02 : f32
    %105 = vector.broadcast %cst_78 : f32 to vector<8x16xf32>
    %106 = arith.mulf %104, %105 : vector<8x16xf32>
    %c0_79 = arith.constant 0 : index
    %c0_80 = arith.constant 0 : index
    %c0_81 = arith.constant 0 : index
    %c1_82 = arith.constant 1 : index
    %c0_83 = arith.constant 0 : index
    %c0_84 = arith.constant 0 : index
    %107 = vector.load %arg8[%c0_79, %c0_80, %c0_81, %c1_82, %c0_83, %c0_84] : memref<1x2x2x2x8x16xf32, #tpu.memory_space<vmem>>, vector<1x1x1x1x8x16xf32>
    %108 = vector.shape_cast %107 : vector<1x1x1x1x8x16xf32> to vector<8x16xf32>
    %109 = vector.shape_cast %106 : vector<8x16xf32> to vector<1x1x1x1x8x16xf32>
    tpu.vector_store %arg8[%c0_79, %c0_80, %c0_81, %c1_82, %c0_83, %c0_84], %109 {strides = array<i32>} : memref<1x2x2x2x8x16xf32, #tpu.memory_space<vmem>>, vector<1x1x1x1x8x16xf32>,
    %c1_85 = arith.constant 1 : index
    %c0_86 = arith.constant 0 : index
    %110 = vector.load %arg5[%c1_85, %c0_86] : memref<2x8xf32, #tpu.memory_space<vmem>>, vector<1x8xf32>
    %111 = vector.shape_cast %110 : vector<1x8xf32> to vector<8xf32>
    %112 = vector.shape_cast %111 : vector<8xf32> to vector<1x1x8xf32>
    %113 = vector.broadcast %112 : vector<1x1x8xf32> to vector<8x16x8xf32>
    %114 = arith.mulf %90, %113 : vector<8x16x8xf32>
    %cst_87 = arith.constant dense<0.000000e+00> : vector<8x16xf32>
    %115 = vector.multi_reduction <add>, %114, %cst_87 [2] : vector<8x16x8xf32> to vector<8x16xf32>
    %c1_88 = arith.constant 1 : index
    %c0_89 = arith.constant 0 : index
    %c0_90 = arith.constant 0 : index
    %116 = vector.load %arg6[%c1_88, %c0_89, %c0_90] : memref<2x1x1xf32, #tpu.memory_space<vmem>>, vector<1x1x1xf32>
    %117 = vector.shape_cast %116 : vector<1x1x1xf32> to vector<1x1xf32>
    %118 = vector.broadcast %117 : vector<1x1xf32> to vector<8x16xf32>
    %119 = arith.addf %115, %118 : vector<8x16xf32>
    %120 = math.tanh %119 : vector<8x16xf32>
    %cst_91 = arith.constant 2.560000e+02 : f32
    %121 = vector.broadcast %cst_91 : f32 to vector<8x16xf32>
    %122 = arith.mulf %120, %121 : vector<8x16xf32>
    %c0_92 = arith.constant 0 : index
    %c1_93 = arith.constant 1 : index
    %c0_94 = arith.constant 0 : index
    %c1_95 = arith.constant 1 : index
    %c0_96 = arith.constant 0 : index
    %c0_97 = arith.constant 0 : index
    %123 = vector.load %arg8[%c0_92, %c1_93, %c0_94, %c1_95, %c0_96, %c0_97] : memref<1x2x2x2x8x16xf32, #tpu.memory_space<vmem>>, vector<1x1x1x1x8x16xf32>
    %124 = vector.shape_cast %123 : vector<1x1x1x1x8x16xf32> to vector<8x16xf32>
    %125 = vector.shape_cast %122 : vector<8x16xf32> to vector<1x1x1x1x8x16xf32>
    tpu.vector_store %arg8[%c0_92, %c1_93, %c0_94, %c1_95, %c0_96, %c0_97], %125 {strides = array<i32>} : memref<1x2x2x2x8x16xf32, #tpu.memory_space<vmem>>, vector<1x1x1x1x8x16xf32>,
    %cst_98 = arith.constant 0.000000e+00 : f32
    %126 = vector.broadcast %cst_98 : f32 to vector<8x16x8xf32>
    %127 = vector.extract_strided_slice %1 {offsets = [1, 0, 0], sizes = [8, 16, 4], strides = [1, 1, 1]} : vector<10x18x4xf32> to vector<8x16x4xf32>
    %c8 = arith.constant 8 : index
    %c0_99 = arith.constant 0 : index
    %c0_100 = arith.constant 0 : index
    %128 = vector.load %arg3[%c8, %c0_99, %c0_100] : memref<16x4x8xf32, #tpu.memory_space<vmem>>, vector<1x4x8xf32>
    %129 = vector.shape_cast %128 : vector<1x4x8xf32> to vector<4x8xf32>
    %cst_101 = arith.constant dense<0.000000e+00> : vector<8x16x8xf32>
    %130 = tpu.matmul %127, %129, %cst_101 {dimension_numbers = #tpu.dot_dimension_numbers<[2], [0], [0, 1], [1], [0, 0, 0, 1, 1, 1], [], []>} : vector<8x16x4xf32>, vector<4x8xf32>, vector<8x16x8xf32> -> vector<8x16x8xf32>
    %131 = arith.addf %126, %130 : vector<8x16x8xf32>
    %132 = vector.extract_strided_slice %1 {offsets = [1, 1, 0], sizes = [8, 16, 4], strides = [1, 1, 1]} : vector<10x18x4xf32> to vector<8x16x4xf32>
    %c9 = arith.constant 9 : index
    %c0_102 = arith.constant 0 : index
    %c0_103 = arith.constant 0 : index
    %133 = vector.load %arg3[%c9, %c0_102, %c0_103] : memref<16x4x8xf32, #tpu.memory_space<vmem>>, vector<1x4x8xf32>
    %134 = vector.shape_cast %133 : vector<1x4x8xf32> to vector<4x8xf32>
    %cst_104 = arith.constant dense<0.000000e+00> : vector<8x16x8xf32>
    %135 = tpu.matmul %132, %134, %cst_104 {dimension_numbers = #tpu.dot_dimension_numbers<[2], [0], [0, 1], [1], [0, 0, 0, 1, 1, 1], [], []>} : vector<8x16x4xf32>, vector<4x8xf32>, vector<8x16x8xf32> -> vector<8x16x8xf32>
    %136 = arith.addf %131, %135 : vector<8x16x8xf32>
    %137 = vector.extract_strided_slice %1 {offsets = [2, 0, 0], sizes = [8, 16, 4], strides = [1, 1, 1]} : vector<10x18x4xf32> to vector<8x16x4xf32>
    %c10 = arith.constant 10 : index
    %c0_105 = arith.constant 0 : index
    %c0_106 = arith.constant 0 : index
    %138 = vector.load %arg3[%c10, %c0_105, %c0_106] : memref<16x4x8xf32, #tpu.memory_space<vmem>>, vector<1x4x8xf32>
    %139 = vector.shape_cast %138 : vector<1x4x8xf32> to vector<4x8xf32>
    %cst_107 = arith.constant dense<0.000000e+00> : vector<8x16x8xf32>
    %140 = tpu.matmul %137, %139, %cst_107 {dimension_numbers = #tpu.dot_dimension_numbers<[2], [0], [0, 1], [1], [0, 0, 0, 1, 1, 1], [], []>} : vector<8x16x4xf32>, vector<4x8xf32>, vector<8x16x8xf32> -> vector<8x16x8xf32>
    %141 = arith.addf %136, %140 : vector<8x16x8xf32>
    %142 = vector.extract_strided_slice %1 {offsets = [2, 1, 0], sizes = [8, 16, 4], strides = [1, 1, 1]} : vector<10x18x4xf32> to vector<8x16x4xf32>
    %c11 = arith.constant 11 : index
    %c0_108 = arith.constant 0 : index
    %c0_109 = arith.constant 0 : index
    %143 = vector.load %arg3[%c11, %c0_108, %c0_109] : memref<16x4x8xf32, #tpu.memory_space<vmem>>, vector<1x4x8xf32>
    %144 = vector.shape_cast %143 : vector<1x4x8xf32> to vector<4x8xf32>
    %cst_110 = arith.constant dense<0.000000e+00> : vector<8x16x8xf32>
    %145 = tpu.matmul %142, %144, %cst_110 {dimension_numbers = #tpu.dot_dimension_numbers<[2], [0], [0, 1], [1], [0, 0, 0, 1, 1, 1], [], []>} : vector<8x16x4xf32>, vector<4x8xf32>, vector<8x16x8xf32> -> vector<8x16x8xf32>
    %146 = arith.addf %141, %145 : vector<8x16x8xf32>
    %147 = vector.shape_cast %3 : vector<8xf32> to vector<1x1x8xf32>
    %148 = vector.broadcast %147 : vector<1x1x8xf32> to vector<8x16x8xf32>
    %149 = arith.addf %146, %148 : vector<8x16x8xf32>
    %cst_111 = arith.constant 0.000000e+00 : f32
    %150 = vector.broadcast %cst_111 : f32 to vector<8x16x8xf32>
    %151 = arith.maximumf %149, %150 : vector<8x16x8xf32>
    %c0_112 = arith.constant 0 : index
    %c1_113 = arith.constant 1 : index
    %c0_114 = arith.constant 0 : index
    %c0_115 = arith.constant 0 : index
    %c0_116 = arith.constant 0 : index
    %c0_117 = arith.constant 0 : index
    %152 = vector.load %arg7[%c0_112, %c1_113, %c0_114, %c0_115, %c0_116, %c0_117] : memref<1x2x2x8x16x8xf32, #tpu.memory_space<vmem>>, vector<1x1x1x8x16x8xf32>
    %153 = vector.shape_cast %152 : vector<1x1x1x8x16x8xf32> to vector<8x16x8xf32>
    %154 = vector.shape_cast %151 : vector<8x16x8xf32> to vector<1x1x1x8x16x8xf32>
    tpu.vector_store %arg7[%c0_112, %c1_113, %c0_114, %c0_115, %c0_116, %c0_117], %154 {strides = array<i32>} : memref<1x2x2x8x16x8xf32, #tpu.memory_space<vmem>>, vector<1x1x1x8x16x8xf32>,
    %c0_118 = arith.constant 0 : index
    %c0_119 = arith.constant 0 : index
    %155 = vector.load %arg5[%c0_118, %c0_119] : memref<2x8xf32, #tpu.memory_space<vmem>>, vector<1x8xf32>
    %156 = vector.shape_cast %155 : vector<1x8xf32> to vector<8xf32>
    %157 = vector.shape_cast %156 : vector<8xf32> to vector<1x1x8xf32>
    %158 = vector.broadcast %157 : vector<1x1x8xf32> to vector<8x16x8xf32>
    %159 = arith.mulf %151, %158 : vector<8x16x8xf32>
    %cst_120 = arith.constant dense<0.000000e+00> : vector<8x16xf32>
    %160 = vector.multi_reduction <add>, %159, %cst_120 [2] : vector<8x16x8xf32> to vector<8x16xf32>
    %c0_121 = arith.constant 0 : index
    %c0_122 = arith.constant 0 : index
    %c0_123 = arith.constant 0 : index
    %161 = vector.load %arg6[%c0_121, %c0_122, %c0_123] : memref<2x1x1xf32, #tpu.memory_space<vmem>>, vector<1x1x1xf32>
    %162 = vector.shape_cast %161 : vector<1x1x1xf32> to vector<1x1xf32>
    %163 = vector.broadcast %162 : vector<1x1xf32> to vector<8x16xf32>
    %164 = arith.addf %160, %163 : vector<8x16xf32>
    %165 = math.tanh %164 : vector<8x16xf32>
    %cst_124 = arith.constant 2.560000e+02 : f32
    %166 = vector.broadcast %cst_124 : f32 to vector<8x16xf32>
    %167 = arith.mulf %165, %166 : vector<8x16xf32>
    %c0_125 = arith.constant 0 : index
    %c0_126 = arith.constant 0 : index
    %c1_127 = arith.constant 1 : index
    %c0_128 = arith.constant 0 : index
    %c0_129 = arith.constant 0 : index
    %c0_130 = arith.constant 0 : index
    %168 = vector.load %arg8[%c0_125, %c0_126, %c1_127, %c0_128, %c0_129, %c0_130] : memref<1x2x2x2x8x16xf32, #tpu.memory_space<vmem>>, vector<1x1x1x1x8x16xf32>
    %169 = vector.shape_cast %168 : vector<1x1x1x1x8x16xf32> to vector<8x16xf32>
    %170 = vector.shape_cast %167 : vector<8x16xf32> to vector<1x1x1x1x8x16xf32>
    tpu.vector_store %arg8[%c0_125, %c0_126, %c1_127, %c0_128, %c0_129, %c0_130], %170 {strides = array<i32>} : memref<1x2x2x2x8x16xf32, #tpu.memory_space<vmem>>, vector<1x1x1x1x8x16xf32>,
    %c1_131 = arith.constant 1 : index
    %c0_132 = arith.constant 0 : index
    %171 = vector.load %arg5[%c1_131, %c0_132] : memref<2x8xf32, #tpu.memory_space<vmem>>, vector<1x8xf32>
    %172 = vector.shape_cast %171 : vector<1x8xf32> to vector<8xf32>
    %173 = vector.shape_cast %172 : vector<8xf32> to vector<1x1x8xf32>
    %174 = vector.broadcast %173 : vector<1x1x8xf32> to vector<8x16x8xf32>
    %175 = arith.mulf %151, %174 : vector<8x16x8xf32>
    %cst_133 = arith.constant dense<0.000000e+00> : vector<8x16xf32>
    %176 = vector.multi_reduction <add>, %175, %cst_133 [2] : vector<8x16x8xf32> to vector<8x16xf32>
    %c1_134 = arith.constant 1 : index
    %c0_135 = arith.constant 0 : index
    %c0_136 = arith.constant 0 : index
    %177 = vector.load %arg6[%c1_134, %c0_135, %c0_136] : memref<2x1x1xf32, #tpu.memory_space<vmem>>, vector<1x1x1xf32>
    %178 = vector.shape_cast %177 : vector<1x1x1xf32> to vector<1x1xf32>
    %179 = vector.broadcast %178 : vector<1x1xf32> to vector<8x16xf32>
    %180 = arith.addf %176, %179 : vector<8x16xf32>
    %181 = math.tanh %180 : vector<8x16xf32>
    %cst_137 = arith.constant 2.560000e+02 : f32
    %182 = vector.broadcast %cst_137 : f32 to vector<8x16xf32>
    %183 = arith.mulf %181, %182 : vector<8x16xf32>
    %c0_138 = arith.constant 0 : index
    %c1_139 = arith.constant 1 : index
    %c1_140 = arith.constant 1 : index
    %c0_141 = arith.constant 0 : index
    %c0_142 = arith.constant 0 : index
    %c0_143 = arith.constant 0 : index
    %184 = vector.load %arg8[%c0_138, %c1_139, %c1_140, %c0_141, %c0_142, %c0_143] : memref<1x2x2x2x8x16xf32, #tpu.memory_space<vmem>>, vector<1x1x1x1x8x16xf32>
    %185 = vector.shape_cast %184 : vector<1x1x1x1x8x16xf32> to vector<8x16xf32>
    %186 = vector.shape_cast %183 : vector<8x16xf32> to vector<1x1x1x1x8x16xf32>
    tpu.vector_store %arg8[%c0_138, %c1_139, %c1_140, %c0_141, %c0_142, %c0_143], %186 {strides = array<i32>} : memref<1x2x2x2x8x16xf32, #tpu.memory_space<vmem>>, vector<1x1x1x1x8x16xf32>,
    %cst_144 = arith.constant 0.000000e+00 : f32
    %187 = vector.broadcast %cst_144 : f32 to vector<8x16x8xf32>
    %188 = vector.extract_strided_slice %1 {offsets = [1, 1, 0], sizes = [8, 16, 4], strides = [1, 1, 1]} : vector<10x18x4xf32> to vector<8x16x4xf32>
    %c12 = arith.constant 12 : index
    %c0_145 = arith.constant 0 : index
    %c0_146 = arith.constant 0 : index
    %189 = vector.load %arg3[%c12, %c0_145, %c0_146] : memref<16x4x8xf32, #tpu.memory_space<vmem>>, vector<1x4x8xf32>
    %190 = vector.shape_cast %189 : vector<1x4x8xf32> to vector<4x8xf32>
    %cst_147 = arith.constant dense<0.000000e+00> : vector<8x16x8xf32>
    %191 = tpu.matmul %188, %190, %cst_147 {dimension_numbers = #tpu.dot_dimension_numbers<[2], [0], [0, 1], [1], [0, 0, 0, 1, 1, 1], [], []>} : vector<8x16x4xf32>, vector<4x8xf32>, vector<8x16x8xf32> -> vector<8x16x8xf32>
    %192 = arith.addf %187, %191 : vector<8x16x8xf32>
    %193 = vector.extract_strided_slice %1 {offsets = [1, 2, 0], sizes = [8, 16, 4], strides = [1, 1, 1]} : vector<10x18x4xf32> to vector<8x16x4xf32>
    %c13 = arith.constant 13 : index
    %c0_148 = arith.constant 0 : index
    %c0_149 = arith.constant 0 : index
    %194 = vector.load %arg3[%c13, %c0_148, %c0_149] : memref<16x4x8xf32, #tpu.memory_space<vmem>>, vector<1x4x8xf32>
    %195 = vector.shape_cast %194 : vector<1x4x8xf32> to vector<4x8xf32>
    %cst_150 = arith.constant dense<0.000000e+00> : vector<8x16x8xf32>
    %196 = tpu.matmul %193, %195, %cst_150 {dimension_numbers = #tpu.dot_dimension_numbers<[2], [0], [0, 1], [1], [0, 0, 0, 1, 1, 1], [], []>} : vector<8x16x4xf32>, vector<4x8xf32>, vector<8x16x8xf32> -> vector<8x16x8xf32>
    %197 = arith.addf %192, %196 : vector<8x16x8xf32>
    %198 = vector.extract_strided_slice %1 {offsets = [2, 1, 0], sizes = [8, 16, 4], strides = [1, 1, 1]} : vector<10x18x4xf32> to vector<8x16x4xf32>
    %c14 = arith.constant 14 : index
    %c0_151 = arith.constant 0 : index
    %c0_152 = arith.constant 0 : index
    %199 = vector.load %arg3[%c14, %c0_151, %c0_152] : memref<16x4x8xf32, #tpu.memory_space<vmem>>, vector<1x4x8xf32>
    %200 = vector.shape_cast %199 : vector<1x4x8xf32> to vector<4x8xf32>
    %cst_153 = arith.constant dense<0.000000e+00> : vector<8x16x8xf32>
    %201 = tpu.matmul %198, %200, %cst_153 {dimension_numbers = #tpu.dot_dimension_numbers<[2], [0], [0, 1], [1], [0, 0, 0, 1, 1, 1], [], []>} : vector<8x16x4xf32>, vector<4x8xf32>, vector<8x16x8xf32> -> vector<8x16x8xf32>
    %202 = arith.addf %197, %201 : vector<8x16x8xf32>
    %203 = vector.extract_strided_slice %1 {offsets = [2, 2, 0], sizes = [8, 16, 4], strides = [1, 1, 1]} : vector<10x18x4xf32> to vector<8x16x4xf32>
    %c15 = arith.constant 15 : index
    %c0_154 = arith.constant 0 : index
    %c0_155 = arith.constant 0 : index
    %204 = vector.load %arg3[%c15, %c0_154, %c0_155] : memref<16x4x8xf32, #tpu.memory_space<vmem>>, vector<1x4x8xf32>
    %205 = vector.shape_cast %204 : vector<1x4x8xf32> to vector<4x8xf32>
    %cst_156 = arith.constant dense<0.000000e+00> : vector<8x16x8xf32>
    %206 = tpu.matmul %203, %205, %cst_156 {dimension_numbers = #tpu.dot_dimension_numbers<[2], [0], [0, 1], [1], [0, 0, 0, 1, 1, 1], [], []>} : vector<8x16x4xf32>, vector<4x8xf32>, vector<8x16x8xf32> -> vector<8x16x8xf32>
    %207 = arith.addf %202, %206 : vector<8x16x8xf32>
    %208 = vector.shape_cast %3 : vector<8xf32> to vector<1x1x8xf32>
    %209 = vector.broadcast %208 : vector<1x1x8xf32> to vector<8x16x8xf32>
    %210 = arith.addf %207, %209 : vector<8x16x8xf32>
    %cst_157 = arith.constant 0.000000e+00 : f32
    %211 = vector.broadcast %cst_157 : f32 to vector<8x16x8xf32>
    %212 = arith.maximumf %210, %211 : vector<8x16x8xf32>
    %c0_158 = arith.constant 0 : index
    %c1_159 = arith.constant 1 : index
    %c1_160 = arith.constant 1 : index
    %c0_161 = arith.constant 0 : index
    %c0_162 = arith.constant 0 : index
    %c0_163 = arith.constant 0 : index
    %213 = vector.load %arg7[%c0_158, %c1_159, %c1_160, %c0_161, %c0_162, %c0_163] : memref<1x2x2x8x16x8xf32, #tpu.memory_space<vmem>>, vector<1x1x1x8x16x8xf32>
    %214 = vector.shape_cast %213 : vector<1x1x1x8x16x8xf32> to vector<8x16x8xf32>
    %215 = vector.shape_cast %212 : vector<8x16x8xf32> to vector<1x1x1x8x16x8xf32>
    tpu.vector_store %arg7[%c0_158, %c1_159, %c1_160, %c0_161, %c0_162, %c0_163], %215 {strides = array<i32>} : memref<1x2x2x8x16x8xf32, #tpu.memory_space<vmem>>, vector<1x1x1x8x16x8xf32>,
    %c0_164 = arith.constant 0 : index
    %c0_165 = arith.constant 0 : index
    %216 = vector.load %arg5[%c0_164, %c0_165] : memref<2x8xf32, #tpu.memory_space<vmem>>, vector<1x8xf32>
    %217 = vector.shape_cast %216 : vector<1x8xf32> to vector<8xf32>
    %218 = vector.shape_cast %217 : vector<8xf32> to vector<1x1x8xf32>
    %219 = vector.broadcast %218 : vector<1x1x8xf32> to vector<8x16x8xf32>
    %220 = arith.mulf %212, %219 : vector<8x16x8xf32>
    %cst_166 = arith.constant dense<0.000000e+00> : vector<8x16xf32>
    %221 = vector.multi_reduction <add>, %220, %cst_166 [2] : vector<8x16x8xf32> to vector<8x16xf32>
    %c0_167 = arith.constant 0 : index
    %c0_168 = arith.constant 0 : index
    %c0_169 = arith.constant 0 : index
    %222 = vector.load %arg6[%c0_167, %c0_168, %c0_169] : memref<2x1x1xf32, #tpu.memory_space<vmem>>, vector<1x1x1xf32>
    %223 = vector.shape_cast %222 : vector<1x1x1xf32> to vector<1x1xf32>
    %224 = vector.broadcast %223 : vector<1x1xf32> to vector<8x16xf32>
    %225 = arith.addf %221, %224 : vector<8x16xf32>
    %226 = math.tanh %225 : vector<8x16xf32>
    %cst_170 = arith.constant 2.560000e+02 : f32
    %227 = vector.broadcast %cst_170 : f32 to vector<8x16xf32>
    %228 = arith.mulf %226, %227 : vector<8x16xf32>
    %c0_171 = arith.constant 0 : index
    %c0_172 = arith.constant 0 : index
    %c1_173 = arith.constant 1 : index
    %c1_174 = arith.constant 1 : index
    %c0_175 = arith.constant 0 : index
    %c0_176 = arith.constant 0 : index
    %229 = vector.load %arg8[%c0_171, %c0_172, %c1_173, %c1_174, %c0_175, %c0_176] : memref<1x2x2x2x8x16xf32, #tpu.memory_space<vmem>>, vector<1x1x1x1x8x16xf32>
    %230 = vector.shape_cast %229 : vector<1x1x1x1x8x16xf32> to vector<8x16xf32>
    %231 = vector.shape_cast %228 : vector<8x16xf32> to vector<1x1x1x1x8x16xf32>
    tpu.vector_store %arg8[%c0_171, %c0_172, %c1_173, %c1_174, %c0_175, %c0_176], %231 {strides = array<i32>} : memref<1x2x2x2x8x16xf32, #tpu.memory_space<vmem>>, vector<1x1x1x1x8x16xf32>,
    %c1_177 = arith.constant 1 : index
    %c0_178 = arith.constant 0 : index
    %232 = vector.load %arg5[%c1_177, %c0_178] : memref<2x8xf32, #tpu.memory_space<vmem>>, vector<1x8xf32>
    %233 = vector.shape_cast %232 : vector<1x8xf32> to vector<8xf32>
    %234 = vector.shape_cast %233 : vector<8xf32> to vector<1x1x8xf32>
    %235 = vector.broadcast %234 : vector<1x1x8xf32> to vector<8x16x8xf32>
    %236 = arith.mulf %212, %235 : vector<8x16x8xf32>
    %cst_179 = arith.constant dense<0.000000e+00> : vector<8x16xf32>
    %237 = vector.multi_reduction <add>, %236, %cst_179 [2] : vector<8x16x8xf32> to vector<8x16xf32>
    %c1_180 = arith.constant 1 : index
    %c0_181 = arith.constant 0 : index
    %c0_182 = arith.constant 0 : index
    %238 = vector.load %arg6[%c1_180, %c0_181, %c0_182] : memref<2x1x1xf32, #tpu.memory_space<vmem>>, vector<1x1x1xf32>
    %239 = vector.shape_cast %238 : vector<1x1x1xf32> to vector<1x1xf32>
    %240 = vector.broadcast %239 : vector<1x1xf32> to vector<8x16xf32>
    %241 = arith.addf %237, %240 : vector<8x16xf32>
    %242 = math.tanh %241 : vector<8x16xf32>
    %cst_183 = arith.constant 2.560000e+02 : f32
    %243 = vector.broadcast %cst_183 : f32 to vector<8x16xf32>
    %244 = arith.mulf %242, %243 : vector<8x16xf32>
    %c0_184 = arith.constant 0 : index
    %c1_185 = arith.constant 1 : index
    %c1_186 = arith.constant 1 : index
    %c1_187 = arith.constant 1 : index
    %c0_188 = arith.constant 0 : index
    %c0_189 = arith.constant 0 : index
    %245 = vector.load %arg8[%c0_184, %c1_185, %c1_186, %c1_187, %c0_188, %c0_189] : memref<1x2x2x2x8x16xf32, #tpu.memory_space<vmem>>, vector<1x1x1x1x8x16xf32>
    %246 = vector.shape_cast %245 : vector<1x1x1x1x8x16xf32> to vector<8x16xf32>
    %247 = vector.shape_cast %244 : vector<8x16xf32> to vector<1x1x1x1x8x16xf32>
    tpu.vector_store %arg8[%c0_184, %c1_185, %c1_186, %c1_187, %c0_188, %c0_189], %247 {strides = array<i32>} : memref<1x2x2x2x8x16xf32, #tpu.memory_space<vmem>>, vector<1x1x1x1x8x16xf32>,
    return
  }
  func.func @transform_0(%arg0: i32, %arg1: i32) -> (i32, i32, i32, i32, i32) {
    %c0_i32 = arith.constant 0 : i32
    %c0_i32_0 = arith.constant 0 : i32
    %c0_i32_1 = arith.constant 0 : i32
    %c0_i32_2 = arith.constant 0 : i32
    return %arg0, %arg1, %c0_i32, %c0_i32_0, %c0_i32_1 : i32, i32, i32, i32, i32
  }
  func.func @transform_1(%arg0: i32, %arg1: i32) -> (i32, i32, i32) {
    %c0_i32 = arith.constant 0 : i32
    %c0_i32_0 = arith.constant 0 : i32
    %c0_i32_1 = arith.constant 0 : i32
    %c0_i32_2 = arith.constant 0 : i32
    return %c0_i32, %c0_i32_0, %c0_i32_1 : i32, i32, i32
  }
  func.func @transform_2(%arg0: i32, %arg1: i32) -> (i32, i32) {
    %c0_i32 = arith.constant 0 : i32
    %c0_i32_0 = arith.constant 0 : i32
    %c0_i32_1 = arith.constant 0 : i32
    return %c0_i32, %c0_i32_0 : i32, i32
  }
  func.func @transform_3(%arg0: i32, %arg1: i32) -> (i32, i32) {
    %c0_i32 = arith.constant 0 : i32
    %c0_i32_0 = arith.constant 0 : i32
    %c0_i32_1 = arith.constant 0 : i32
    return %c0_i32, %c0_i32_0 : i32, i32
  }
  func.func @transform_4(%arg0: i32, %arg1: i32) -> (i32, i32, i32) {
    %c0_i32 = arith.constant 0 : i32
    %c0_i32_0 = arith.constant 0 : i32
    %c0_i32_1 = arith.constant 0 : i32
    %c0_i32_2 = arith.constant 0 : i32
    return %c0_i32, %c0_i32_0, %c0_i32_1 : i32, i32, i32
  }
  func.func @transform_5(%arg0: i32, %arg1: i32) -> (i32, i32, i32, i32, i32, i32) {
    %c0_i32 = arith.constant 0 : i32
    %c0_i32_0 = arith.constant 0 : i32
    %c0_i32_1 = arith.constant 0 : i32
    %c0_i32_2 = arith.constant 0 : i32
    %c0_i32_3 = arith.constant 0 : i32
    return %arg0, %c0_i32, %c0_i32_0, %arg1, %c0_i32_1, %c0_i32_2 : i32, i32, i32, i32, i32, i32
  }
  func.func @transform_6(%arg0: i32, %arg1: i32) -> (i32, i32, i32, i32, i32, i32) {
    %c0_i32 = arith.constant 0 : i32
    %c0_i32_0 = arith.constant 0 : i32
    %c0_i32_1 = arith.constant 0 : i32
    %c0_i32_2 = arith.constant 0 : i32
    %c0_i32_3 = arith.constant 0 : i32
    return %arg0, %c0_i32, %c0_i32_0, %c0_i32_1, %arg1, %c0_i32_2 : i32, i32, i32, i32, i32, i32
  }
}

</mosaic_0001>

<llo_original>
// kernel: upsample_conv2d_and_predict_flow.1
$region0: #{upsample_conv2d_and_predict_flow.1}
  #allocation0 [shape = 'u32[]', space=smem, size = 0x4, offset = 0x4, fixed_abs, tag = 'smem constant byte address 0x4 - core index']
  #allocation1 [shape = 'u32[72,128]{1,0:T(1,128)}', space=vmem, size = 0x9000, scoped, tag = 'internal scratch']
  %s0 = inlined_call_operand.vmem [shape: f32[2,2,10,18,4], index: 0, kind: input, shape index: {}]
  %s1 = inlined_call_operand.vmem [shape: f32[16,4,8], index: 1, kind: input, shape index: {}]
  %s2 = inlined_call_operand.vmem [shape: f32[1,8], index: 2, kind: input, shape index: {}]
  %s3 = inlined_call_operand.vmem [shape: f32[2,8], index: 3, kind: input, shape index: {}]
  %s4 = inlined_call_operand.vmem [shape: f32[2,1,1], index: 4, kind: input, shape index: {}]
  %s5 = inlined_call_operand.vmem [shape: f32[2,2,2,16,16,8], index: 5, kind: output, shape index: {0}]
  %s6 = inlined_call_operand.vmem [shape: f32[2,2,2,2,16,16], index: 6, kind: output, shape index: {1}]
  %7 = xla_tuple %s5, %s6
  %s8 = sld [smem:[#allocation0]]
  $region129: #{upsample_conv2d_and_predict_flow.1} parent=0
    _
  %s10 = ssub.s32 1, %s8
  %s11 = scalar_select 0, %s10, %s8
  $region1: #{upsample_conv2d_and_predict_flow.1} parent=0
    #allocation2 [shape = 'u8[524288]{0}', space=vmem, size = 0x80000, scoped, tag = 'output window, operand 0']
    #allocation3 [shape = 'u8[65536]{0}', space=vmem, size = 0x10000, scoped, tag = 'output window, operand 1']
    loop: start=0, step=1, limit=6
    $region2: #{upsample_conv2d_and_predict_flow.1} parent=1 // loop_pre_header
      _
    $region3: #{upsample_conv2d_and_predict_flow.1} parent=1 // loop_header
      %s13 = sphi 0, %s17
      %p14 = scmp.ge.s32.totalorder %s13, 6
      %s20 = sphi 0, %s32
      %s21 = sphi 0, %s28
      %s22 = sphi 0, %s20
      %s23 = sphi 0, %s21
      %s24 = sphi 0, %s22
      %s25 = sphi 0, %s23
      %s37 = sphi 0, %s39
      %s40 = sphi 0, %s37
      %s41 = sphi 0, %s40
      %s57 = sphi 0, %s41
      %s61 = sphi 0, %s61
      %s63 = sphi 0, %s61
      %s64 = sphi 0, %s63
      %s78 = sphi 0, %s64
      %s82 = sphi 0, %s82
      %s84 = sphi 0, %s82
      %s85 = sphi 0, %s84
      %s99 = sphi 0, %s85
      %s103 = sphi 0, %s103
      %s105 = sphi 0, %s103
      %s106 = sphi 0, %s105
      %s120 = sphi 0, %s106
      %s124 = sphi 0, %s124
      %s126 = sphi 0, %s124
      %s127 = sphi 0, %s126
      %s141 = sphi 0, %s127
      %s149 = sphi 0, %s151
      %s152 = sphi 0, %s149
      %s153 = sphi 0, %s152
      %s169 = sphi 0, %s153
      %s177 = sphi 0, %s179
      %s180 = sphi 0, %s177
      %s181 = sphi 0, %s180
      %s197 = sphi 0, %s181
    $region4: #{upsample_conv2d_and_predict_flow.1} parent=1 // loop_header_branch
      %16 = sbr.rel (%p14) target = $region8
    $region5: #{upsample_conv2d_and_predict_flow.1} parent=1 // loop_body
      %s18 = ssub.s32 %s13, 1
      %s19 = ssub.s32 %s13, 2
      %s26 = sadd.s32 1, %s21
      %p27 = scmp.ge.s32.totalorder %s26, 2
      %s28 = scalar_select %p27, 0, %s26
      %s29 = sadd.s32 1, %s20
      %s30 = scalar_select %p27, %s29, %s20
      %p31 = scmp.ge.s32.totalorder %s30, 2
      %s32 = scalar_select %p31, 0, %s30
      %s33 = ssub.s32 %s20, %s32
      %s34 = ssub.s32 %s21, %s28
      %s35 = sor.u32 %s33, %s34
      %p36 = scmp.eq.s32.totalorder %s35, 0
      %s38 = sadd.s32 %s37, 1
      %s39 = scalar_select %p36, %s37, %s38
      %p42 = pneg %p36
      %p43 = scmp.eq.s32.totalorder %s13, 3
      %p44 = por %p42, %p43
      %p45 = scmp.ne.s32.totalorder %s37, %s40
      %p46 = scmp.eq.s32.totalorder %s13, 0
      %p47 = por %p45, %p46
      %p48 = scmp.ne.s32.totalorder %s37, %s40
      %p49 = scmp.eq.s32.totalorder %s18, 3
      %p50 = por %p48, %p49
      %p51 = scmp.ne.s32.totalorder %s40, %s41
      %p52 = scmp.eq.s32.totalorder %s18, 0
      %p53 = por %p51, %p52
      %p54 = scmp.ne.s32.totalorder %s40, %s41
      %p55 = scmp.eq.s32.totalorder %s19, 3
      %p56 = por %p54, %p55
      %p58 = scmp.ne.s32.totalorder %s41, %s57
      %p59 = scmp.eq.s32.totalorder %s19, 0
      %p60 = por %p58, %p59
      %s62 = sadd.s32 %s61, 1
      %p65 = scmp.eq.s32.totalorder %s13, 3
      %p66 = scmp.ne.s32.totalorder %s61, %s63
      %p67 = scmp.eq.s32.totalorder %s13, 0
      %p68 = por %p66, %p67
      %p69 = scmp.ne.s32.totalorder %s61, %s63
      %p70 = scmp.eq.s32.totalorder %s18, 3
      %p71 = por %p69, %p70
      %p72 = scmp.ne.s32.totalorder %s63, %s64
      %p73 = scmp.eq.s32.totalorder %s18, 0
      %p74 = por %p72, %p73
      %p75 = scmp.ne.s32.totalorder %s63, %s64
      %p76 = scmp.eq.s32.totalorder %s19, 3
      %p77 = por %p75, %p76
      %p79 = scmp.ne.s32.totalorder %s64, %s78
      %p80 = scmp.eq.s32.totalorder %s19, 0
      %p81 = por %p79, %p80
      %s83 = sadd.s32 %s82, 1
      %p86 = scmp.eq.s32.totalorder %s13, 3
      %p87 = scmp.ne.s32.totalorder %s82, %s84
      %p88 = scmp.eq.s32.totalorder %s13, 0
      %p89 = por %p87, %p88
      %p90 = scmp.ne.s32.totalorder %s82, %s84
      %p91 = scmp.eq.s32.totalorder %s18, 3
      %p92 = por %p90, %p91
      %p93 = scmp.ne.s32.totalorder %s84, %s85
      %p94 = scmp.eq.s32.totalorder %s18, 0
      %p95 = por %p93, %p94
      %p96 = scmp.ne.s32.totalorder %s84, %s85
      %p97 = scmp.eq.s32.totalorder %s19, 3
      %p98 = por %p96, %p97
      %p100 = scmp.ne.s32.totalorder %s85, %s99
      %p101 = scmp.eq.s32.totalorder %s19, 0
      %p102 = por %p100, %p101
      %s104 = sadd.s32 %s103, 1
      %p107 = scmp.eq.s32.totalorder %s13, 3
      %p108 = scmp.ne.s32.totalorder %s103, %s105
      %p109 = scmp.eq.s32.totalorder %s13, 0
      %p110 = por %p108, %p109
      %p111 = scmp.ne.s32.totalorder %s103, %s105
      %p112 = scmp.eq.s32.totalorder %s18, 3
      %p113 = por %p111, %p112
      %p114 = scmp.ne.s32.totalorder %s105, %s106
      %p115 = scmp.eq.s32.totalorder %s18, 0
      %p116 = por %p114, %p115
      %p117 = scmp.ne.s32.totalorder %s105, %s106
      %p118 = scmp.eq.s32.totalorder %s19, 3
      %p119 = por %p117, %p118
      %p121 = scmp.ne.s32.totalorder %s106, %s120
      %p122 = scmp.eq.s32.totalorder %s19, 0
      %p123 = por %p121, %p122
      %s125 = sadd.s32 %s124, 1
      %p128 = scmp.eq.s32.totalorder %s13, 3
      %p129 = scmp.ne.s32.totalorder %s124, %s126
      %p130 = scmp.eq.s32.totalorder %s13, 0
      %p131 = por %p129, %p130
      %p132 = scmp.ne.s32.totalorder %s124, %s126
      %p133 = scmp.eq.s32.totalorder %s18, 3
      %p134 = por %p132, %p133
      %p135 = scmp.ne.s32.totalorder %s126, %s127
      %p136 = scmp.eq.s32.totalorder %s18, 0
      %p137 = por %p135, %p136
      %p138 = scmp.ne.s32.totalorder %s126, %s127
      %p139 = scmp.eq.s32.totalorder %s19, 3
      %p140 = por %p138, %p139
      %p142 = scmp.ne.s32.totalorder %s127, %s141
      %p143 = scmp.eq.s32.totalorder %s19, 0
      %p144 = por %p142, %p143
      %s145 = ssub.s32 %s20, %s32
      %s146 = ssub.s32 %s21, %s28
      %s147 = sor.u32 %s145, %s146
      %p148 = scmp.eq.s32.totalorder %s147, 0
      %s150 = sadd.s32 %s149, 1
      %s151 = scalar_select %p148, %s149, %s150
      %p154 = pneg %p148
      %p155 = scmp.eq.s32.totalorder %s13, 3
      %p156 = por %p154, %p155
      %p157 = scmp.ne.s32.totalorder %s149, %s152
      %p158 = scmp.eq.s32.totalorder %s13, 0
      %p159 = por %p157, %p158
      %p160 = scmp.ne.s32.totalorder %s149, %s152
      %p161 = scmp.eq.s32.totalorder %s18, 3
      %p162 = por %p160, %p161
      %p163 = scmp.ne.s32.totalorder %s152, %s153
      %p164 = scmp.eq.s32.totalorder %s18, 0
      %p165 = por %p163, %p164
      %p166 = scmp.ne.s32.totalorder %s152, %s153
      %p167 = scmp.eq.s32.totalorder %s19, 3
      %p168 = por %p166, %p167
      %p170 = scmp.ne.s32.totalorder %s153, %s169
      %p171 = scmp.eq.s32.totalorder %s19, 0
      %p172 = por %p170, %p171
      %s173 = ssub.s32 %s20, %s32
      %s174 = ssub.s32 %s21, %s28
      %s175 = sor.u32 %s173, %s174
      %p176 = scmp.eq.s32.totalorder %s175, 0
      %s178 = sadd.s32 %s177, 1
      %s179 = scalar_select %p176, %s177, %s178
      %p182 = pneg %p176
      %p183 = scmp.eq.s32.totalorder %s13, 3
      %p184 = por %p182, %p183
      %p185 = scmp.ne.s32.totalorder %s177, %s180
      %p186 = scmp.eq.s32.totalorder %s13, 0
      %p187 = por %p185, %p186
      %p188 = scmp.ne.s32.totalorder %s177, %s180
      %p189 = scmp.eq.s32.totalorder %s18, 3
      %p190 = por %p188, %p189
      %p191 = scmp.ne.s32.totalorder %s180, %s181
      %p192 = scmp.eq.s32.totalorder %s18, 0
      %p193 = por %p191, %p192
      %p194 = scmp.ne.s32.totalorder %s180, %s181
      %p195 = scmp.eq.s32.totalorder %s19, 3
      %p196 = por %p194, %p195
      %p198 = scmp.ne.s32.totalorder %s181, %s197
      %p199 = scmp.eq.s32.totalorder %s19, 0
      %p200 = por %p198, %p199
      %p201 = scmp.le.s32.totalorder 1, %s13
      %p202 = scmp.lt.s32.totalorder %s13, 5
      %p203 = pnand %p201, %p202
      %p204 = pneg %p203
      // Predicated region
      $region9: #{upsample_conv2d_and_predict_flow.1} parent=5 // pred_check
        _
      $region10: #{upsample_conv2d_and_predict_flow.1} parent=5 // pred_check_branch
        %206 = sbr.rel (%p203) target = $region12
      $region11: #{upsample_conv2d_and_predict_flow.1} parent=5 // pred_region
        %s207 = ssub.s32 %s13, 1
        // Predicated region
        $region13: #{upsample_conv2d_and_predict_flow.1} parent=11 // pred_check
          %p208 = pneg %p74
        $region14: #{upsample_conv2d_and_predict_flow.1} parent=11 // pred_check_branch
          %210 = sbr.rel (%p208) target = $region16
        $region15: #{upsample_conv2d_and_predict_flow.1} parent=11 // pred_region
          _
        $region16: #{upsample_conv2d_and_predict_flow.1} parent=11 // pred_fallthru
          _
        // Predicated region
        $region17: #{upsample_conv2d_and_predict_flow.1} parent=11 // pred_check
          %p211 = pneg %p95
        $region18: #{upsample_conv2d_and_predict_flow.1} parent=11 // pred_check_branch
          %213 = sbr.rel (%p211) target = $region20
        $region19: #{upsample_conv2d_and_predict_flow.1} parent=11 // pred_region
          _
        $region20: #{upsample_conv2d_and_predict_flow.1} parent=11 // pred_fallthru
          _
        // Predicated region
        $region21: #{upsample_conv2d_and_predict_flow.1} parent=11 // pred_check
          %p214 = pneg %p116
        $region22: #{upsample_conv2d_and_predict_flow.1} parent=11 // pred_check_branch
          %216 = sbr.rel (%p214) target = $region24
        $region23: #{upsample_conv2d_and_predict_flow.1} parent=11 // pred_region
          _
        $region24: #{upsample_conv2d_and_predict_flow.1} parent=11 // pred_fallthru
          _
        // Predicated region
        $region25: #{upsample_conv2d_and_predict_flow.1} parent=11 // pred_check
          %p217 = pneg %p137
        $region26: #{upsample_conv2d_and_predict_flow.1} parent=11 // pred_check_branch
          %219 = sbr.rel (%p217) target = $region28
        $region27: #{upsample_conv2d_and_predict_flow.1} parent=11 // pred_region
          _
        $region28: #{upsample_conv2d_and_predict_flow.1} parent=11 // pred_fallthru
          _
      $region12: #{upsample_conv2d_and_predict_flow.1} parent=5 // pred_fallthru
        _
      %p220 = scmp.lt.s32.totalorder %s13, 4
      // Predicated region
      $region29: #{upsample_conv2d_and_predict_flow.1} parent=5 // pred_check
        %p221 = pneg %p220
      $region30: #{upsample_conv2d_and_predict_flow.1} parent=5 // pred_check_branch
        %223 = sbr.rel (%p221) target = $region32
      $region31: #{upsample_conv2d_and_predict_flow.1} parent=5 // pred_region
        // Predicated region
        $region33: #{upsample_conv2d_and_predict_flow.1} parent=31 // pred_check
          %p224 = pneg %p47
        $region34: #{upsample_conv2d_and_predict_flow.1} parent=31 // pred_check_branch
          %226 = sbr.rel (%p224) target = $region36
        $region35: #{upsample_conv2d_and_predict_flow.1} parent=31 // pred_region
          %p227 = scmp.lt.s32.totalorder %s20, 1
          %s228 = scalar_select %p227, %s20, 1
          %p229 = scmp.lt.s32.totalorder %s21, 1
          %s230 = scalar_select %p229, %s21, 1
          %s231 = smul.addr %s230, 30
          %s232 = smul.addr %s228, 60
          %s233 = sadd.s32 %s231, %s232
          %s234 = smul.addr %s233, 8
          %s235 = scalar_lea.vmem %s0, %s234
        $region36: #{upsample_conv2d_and_predict_flow.1} parent=31 // pred_fallthru
          _
      $region32: #{upsample_conv2d_and_predict_flow.1} parent=5 // pred_fallthru
        _
      %p236 = scmp.le.s32.totalorder 1, %s13
      %p237 = scmp.lt.s32.totalorder %s13, 5
      %p238 = pnand %p236, %p237
      %p239 = pneg %p238
      // Predicated region
      $region37: #{upsample_conv2d_and_predict_flow.1} parent=5 // pred_check
        _
      $region38: #{upsample_conv2d_and_predict_flow.1} parent=5 // pred_check_branch
        %241 = sbr.rel (%p238) target = $region40
      $region39: #{upsample_conv2d_and_predict_flow.1} parent=5 // pred_region
        %s242 = ssub.s32 %s13, 1
        %p243 = scmp.lt.s32.totalorder %s22, 1
        %s244 = scalar_select %p243, %s22, 1
        %p245 = scmp.lt.s32.totalorder %s23, 1
        %s246 = scalar_select %p245, %s23, 1
        %s247 = smul.addr %s246, 30
        %s248 = smul.addr %s244, 60
        %s249 = sadd.s32 %s247, %s248
        %s250 = smul.addr %s249, 8
        %s251 = scalar_lea.vmem %s0, %s250
        %p252 = pneg %p53
        %p253 = pneg %p50
        %p254 = pneg %p74
        %p255 = pneg %p71
        %p256 = pneg %p95
        %p257 = pneg %p92
        %p258 = pneg %p116
        %p259 = pneg %p113
        %p260 = pneg %p137
        %p261 = pneg %p134
        %p262 = pneg %p165
        %p263 = pneg %p162
        %s264 = sand.u32 %s152, 1
        %s265 = sand.u32 %s152, 1
        %s266 = smul.addr %s265, 512
        %s267 = scalar_lea.vmem [#allocation2], %s266
        %p268 = pneg %p193
        %p269 = pneg %p190
        %s270 = sand.u32 %s180, 1
        %s271 = sand.u32 %s180, 1
        %s272 = smul.addr %s271, 64
        %s273 = scalar_lea.vmem [#allocation3], %s272
        %p274 = scmp.lt.s32.totalorder %s22, 1
        %s275 = scalar_select %p274, %s22, 1
        %p276 = scmp.lt.s32.totalorder %s23, 1
        %s277 = scalar_select %p276, %s23, 1
        %s278 = smul.addr %s277, 30
        %s279 = smul.addr %s275, 60
        %s280 = sadd.s32 %s278, %s279
        %s281 = smul.addr %s280, 8
        %s282 = scalar_lea.vmem %s0, %s281
        %s283 = smul.u32 8, %s23
        %v284 = vld [vmem:[%s282] sm:$0xff]
        %v285 = vld [vmem:[%s282 + $0x8] sm:$0xff]
        %v286 = vld [vmem:[%s282 + $0x10] sm:$0x3]
        %v287 = vld [vmem:[%s282 + $0x18] sm:$0xff]
        %v288 = vld [vmem:[%s282 + $0x20] sm:$0xff]
        %v289 = vld [vmem:[%s282 + $0x28] sm:$0x3]
        %v290 = vld [vmem:[%s282 + $0x30] sm:$0xff]
        %v291 = vld [vmem:[%s282 + $0x38] sm:$0xff]
        %v292 = vld [vmem:[%s282 + $0x40] sm:$0x3]
        %v293 = vld [vmem:[%s282 + $0x48] sm:$0xff]
        %v294 = vld [vmem:[%s282 + $0x50] sm:$0xff]
        %v295 = vld [vmem:[%s282 + $0x58] sm:$0x3]
        %v296 = vld [vmem:[%s282 + $0x60] sm:$0xff]
        %v297 = vld [vmem:[%s282 + $0x68] sm:$0xff]
        %v298 = vld [vmem:[%s282 + $0x70] sm:$0x3]
        %v299 = vld [vmem:[%s282 + $0x78] sm:$0xff]
        %v300 = vld [vmem:[%s282 + $0x80] sm:$0xff]
        %v301 = vld [vmem:[%s282 + $0x88] sm:$0x3]
        %v302 = vld [vmem:[%s282 + $0x90] sm:$0xff]
        %v303 = vld [vmem:[%s282 + $0x98] sm:$0xff]
        %v304 = vld [vmem:[%s282 + $0xa0] sm:$0x3]
        %v305 = vld [vmem:[%s282 + $0xa8] sm:$0xff]
        %v306 = vld [vmem:[%s282 + $0xb0] sm:$0xff]
        %v307 = vld [vmem:[%s282 + $0xb8] sm:$0x3]
        %v308 = vld [vmem:[%s282 + $0xc0] sm:$0xff]
        %v309 = vld [vmem:[%s282 + $0xc8] sm:$0xff]
        %v310 = vld [vmem:[%s282 + $0xd0] sm:$0x3]
        %v311 = vld [vmem:[%s282 + $0xd8] sm:$0xff]
        %v312 = vld [vmem:[%s282 + $0xe0] sm:$0xff]
        %v313 = vld [vmem:[%s282 + $0xe8] sm:$0x3]
        %v314 = vld [vmem:[%s2] sm:$0x1]
        %v315 = vld [vmem:[%s1] sm:$0xf]
        %s316 = scalar_lea.vmem %s1, 4
        %v317 = vld [vmem:[%s316] sm:$0xf]
        %vm342 = vcmask 1046528
        %v343 = vrot.slane %v284, 1
        %v344 = vrot.slane %v285, 1
        %v345 = vsel %vm342, %v343, %v344
        %v346 = vrot.slane %v286, 1
        %v347 = vsel %vm342, %v344, %v346
        %v348 = vrot.slane %v287, 1
        %v349 = vrot.slane %v288, 1
        %v350 = vsel %vm342, %v348, %v349
        %v351 = vrot.slane %v289, 1
        %v352 = vsel %vm342, %v349, %v351
        %v353 = vrot.slane %v290, 1
        %v354 = vrot.slane %v291, 1
        %v355 = vsel %vm342, %v353, %v354
        %v356 = vrot.slane %v292, 1
        %v357 = vsel %vm342, %v354, %v356
        %v358 = vrot.slane %v293, 1
        %v359 = vrot.slane %v294, 1
        %v360 = vsel %vm342, %v358, %v359
        %v361 = vrot.slane %v295, 1
        %v362 = vsel %vm342, %v359, %v361
        %v363 = vrot.slane %v296, 1
        %v364 = vrot.slane %v297, 1
        %v365 = vsel %vm342, %v363, %v364
        %v366 = vrot.slane %v298, 1
        %v367 = vsel %vm342, %v364, %v366
        %v368 = vrot.slane %v299, 1
        %v369 = vrot.slane %v300, 1
        %v370 = vsel %vm342, %v368, %v369
        %v371 = vrot.slane %v301, 1
        %v372 = vsel %vm342, %v369, %v371
        %v373 = vrot.slane %v302, 1
        %v374 = vrot.slane %v303, 1
        %v375 = vsel %vm342, %v373, %v374
        %v376 = vrot.slane %v304, 1
        %v377 = vsel %vm342, %v374, %v376
        %v378 = vrot.slane %v305, 1
        %v379 = vrot.slane %v306, 1
        %v380 = vsel %vm342, %v378, %v379
        %v381 = vrot.slane %v307, 1
        %v382 = vsel %vm342, %v379, %v381
        %vm383 = vcmask 31744
        %v384 = vsel %vm383, %v345, 0
        %v386 = vsel %vm383, %v347, 0
        %v388 = vsel %vm383, %v350, 0
        %v390 = vsel %vm383, %v352, 0
        %v392 = vsel %vm383, %v355, 0
        %v394 = vsel %vm383, %v357, 0
        %v396 = vsel %vm383, %v360, 0
        %v398 = vsel %vm383, %v362, 0
        %v400 = vsel %vm383, %v365, 0
        %v402 = vsel %vm383, %v367, 0
        %v404 = vsel %vm383, %v370, 0
        %v406 = vsel %vm383, %v372, 0
        %v408 = vsel %vm383, %v375, 0
        %v410 = vsel %vm383, %v377, 0
        %v412 = vsel %vm383, %v380, 0
        %v414 = vsel %vm383, %v382, 0
        %vm416 = vcmask 1043456
        %v418 = vsel %vm416, %v317, 0
        %420 = vmatpush.msra.mxu0 0.0
        %421 = vmatpush.msra.mxu0 0.0
        %422 = vmatpush.msra.mxu0 0.0
        %423 = vmatpush.msra.mxu0 0.0
        %424 = vmatpush.msra.mxu0 0.0
        %425 = vmatpush.msra.mxu0 0.0
        %426 = vmatpush.msra.mxu0 0.0
        %427 = vmatpush.msra.mxu0 0.0
        %428 = vmatpush.msra.mxu0 0.0
        %429 = vmatpush.msra.mxu0 0.0
        %430 = vmatpush.msra.mxu0 0.0
        %431 = vmatpush.msra.mxu0 0.0
        %432 = vmatpush.msra.mxu0 0.0
        %433 = vmatpush.msra.mxu0 0.0
        %434 = vmatpush.msra.mxu0 0.0
        %435 = vmatpush.msra.mxu0 %v418
        %436 = vmatmul.f32.gmra.mxu0 %v384
        %v437 = vpop.f32.mrf.mxu0
        %v438 = vadd.f32 0.0, %v437
        %439 = vmatmul.f32.gmra.mxu0 %v386
        %v440 = vpop.f32.mrf.mxu0
        %v441 = vadd.f32 0.0, %v440
        %442 = vmatmul.f32.gmra.mxu0 %v388
        %v443 = vpop.f32.mrf.mxu0
        %v444 = vadd.f32 0.0, %v443
        %445 = vmatmul.f32.gmra.mxu0 %v390
        %v446 = vpop.f32.mrf.mxu0
        %v447 = vadd.f32 0.0, %v446
        %448 = vmatmul.f32.gmra.mxu0 %v392
        %v449 = vpop.f32.mrf.mxu0
        %v450 = vadd.f32 0.0, %v449
        %451 = vmatmul.f32.gmra.mxu0 %v394
        %v452 = vpop.f32.mrf.mxu0
        %v453 = vadd.f32 0.0, %v452
        %454 = vmatmul.f32.gmra.mxu0 %v396
        %v455 = vpop.f32.mrf.mxu0
        %v456 = vadd.f32 0.0, %v455
        %457 = vmatmul.f32.gmra.mxu0 %v398
        %v458 = vpop.f32.mrf.mxu0
        %v459 = vadd.f32 0.0, %v458
        %460 = vmatmul.f32.gmra.mxu0 %v400
        %v461 = vpop.f32.mrf.mxu0
        %v462 = vadd.f32 0.0, %v461
        %463 = vmatmul.f32.gmra.mxu0 %v402
        %v464 = vpop.f32.mrf.mxu0
        %v465 = vadd.f32 0.0, %v464
        %466 = vmatmul.f32.gmra.mxu0 %v404
        %v467 = vpop.f32.mrf.mxu0
        %v468 = vadd.f32 0.0, %v467
        %469 = vmatmul.f32.gmra.mxu0 %v406
        %v470 = vpop.f32.mrf.mxu0
        %v471 = vadd.f32 0.0, %v470
        %472 = vmatmul.f32.gmra.mxu0 %v408
        %v473 = vpop.f32.mrf.mxu0
        %v474 = vadd.f32 0.0, %v473
        %475 = vmatmul.f32.gmra.mxu0 %v410
        %v476 = vpop.f32.mrf.mxu0
        %v477 = vadd.f32 0.0, %v476
        %478 = vmatmul.f32.gmra.mxu0 %v412
        %v479 = vpop.f32.mrf.mxu0
        %v480 = vadd.f32 0.0, %v479
        %481 = vmatmul.f32.gmra.mxu0 %v414
        %v482 = vpop.f32.mrf.mxu0
        %v483 = vadd.f32 0.0, %v482
        %484 = vdwg.mxu0
        %v485 = vsel %vm383, %v284, 0
        %v487 = vsel %vm383, %v285, 0
        %v489 = vsel %vm383, %v287, 0
        %v491 = vsel %vm383, %v288, 0
        %v493 = vsel %vm383, %v290, 0
        %v495 = vsel %vm383, %v291, 0
        %v497 = vsel %vm383, %v293, 0
        %v499 = vsel %vm383, %v294, 0
        %v501 = vsel %vm383, %v296, 0
        %v503 = vsel %vm383, %v297, 0
        %v505 = vsel %vm383, %v299, 0
        %v507 = vsel %vm383, %v300, 0
        %v509 = vsel %vm383, %v302, 0
        %v511 = vsel %vm383, %v303, 0
        %v513 = vsel %vm383, %v305, 0
        %v515 = vsel %vm383, %v306, 0
        %v518 = vsel %vm416, %v315, 0
        %520 = vmatpush.msra.mxu0 0.0
        %521 = vmatpush.msra.mxu0 0.0
        %522 = vmatpush.msra.mxu0 0.0
        %523 = vmatpush.msra.mxu0 0.0
        %524 = vmatpush.msra.mxu0 0.0
        %525 = vmatpush.msra.mxu0 0.0
        %526 = vmatpush.msra.mxu0 0.0
        %527 = vmatpush.msra.mxu0 0.0
        %528 = vmatpush.msra.mxu0 0.0
        %529 = vmatpush.msra.mxu0 0.0
        %530 = vmatpush.msra.mxu0 0.0
        %531 = vmatpush.msra.mxu0 0.0
        %532 = vmatpush.msra.mxu0 0.0
        %533 = vmatpush.msra.mxu0 0.0
        %534 = vmatpush.msra.mxu0 0.0
        %535 = vmatpush.msra.mxu0 %v518
        %536 = vmatmul.f32.gmra.mxu0 %v485
        %v537 = vpop.f32.mrf.mxu0
        %v538 = vadd.f32 %v438, %v537
        %539 = vmatmul.f32.gmra.mxu0 %v487
        %v540 = vpop.f32.mrf.mxu0
        %v541 = vadd.f32 %v441, %v540
        %542 = vmatmul.f32.gmra.mxu0 %v489
        %v543 = vpop.f32.mrf.mxu0
        %v544 = vadd.f32 %v444, %v543
        %545 = vmatmul.f32.gmra.mxu0 %v491
        %v546 = vpop.f32.mrf.mxu0
        %v547 = vadd.f32 %v447, %v546
        %548 = vmatmul.f32.gmra.mxu0 %v493
        %v549 = vpop.f32.mrf.mxu0
        %v550 = vadd.f32 %v450, %v549
        %551 = vmatmul.f32.gmra.mxu0 %v495
        %v552 = vpop.f32.mrf.mxu0
        %v553 = vadd.f32 %v453, %v552
        %554 = vmatmul.f32.gmra.mxu0 %v497
        %v555 = vpop.f32.mrf.mxu0
        %v556 = vadd.f32 %v456, %v555
        %557 = vmatmul.f32.gmra.mxu0 %v499
        %v558 = vpop.f32.mrf.mxu0
        %v559 = vadd.f32 %v459, %v558
        %560 = vmatmul.f32.gmra.mxu0 %v501
        %v561 = vpop.f32.mrf.mxu0
        %v562 = vadd.f32 %v462, %v561
        %563 = vmatmul.f32.gmra.mxu0 %v503
        %v564 = vpop.f32.mrf.mxu0
        %v565 = vadd.f32 %v465, %v564
        %566 = vmatmul.f32.gmra.mxu0 %v505
        %v567 = vpop.f32.mrf.mxu0
        %v568 = vadd.f32 %v468, %v567
        %569 = vmatmul.f32.gmra.mxu0 %v507
        %v570 = vpop.f32.mrf.mxu0
        %v571 = vadd.f32 %v471, %v570
        %572 = vmatmul.f32.gmra.mxu0 %v509
        %v573 = vpop.f32.mrf.mxu0
        %v574 = vadd.f32 %v474, %v573
        %575 = vmatmul.f32.gmra.mxu0 %v511
        %v576 = vpop.f32.mrf.mxu0
        %v577 = vadd.f32 %v477, %v576
        %578 = vmatmul.f32.gmra.mxu0 %v513
        %v579 = vpop.f32.mrf.mxu0
        %v580 = vadd.f32 %v480, %v579
        %581 = vmatmul.f32.gmra.mxu0 %v515
        %v582 = vpop.f32.mrf.mxu0
        %v583 = vadd.f32 %v483, %v582
        %584 = vdwg.mxu0
        %s585 = scalar_lea.vmem %s1, 8
        %v586 = vld [vmem:[%s585] sm:$0xf]
        %v588 = vsel %vm383, %v308, 0
        %v591 = vsel %vm383, %v309, 0
        %v594 = vsel %vm416, %v586, 0
        %596 = vmatpush.msra.mxu0 0.0
        %597 = vmatpush.msra.mxu0 0.0
        %598 = vmatpush.msra.mxu0 0.0
        %599 = vmatpush.msra.mxu0 0.0
        %600 = vmatpush.msra.mxu0 0.0
        %601 = vmatpush.msra.mxu0 0.0
        %602 = vmatpush.msra.mxu0 0.0
        %603 = vmatpush.msra.mxu0 0.0
        %604 = vmatpush.msra.mxu0 0.0
        %605 = vmatpush.msra.mxu0 0.0
        %606 = vmatpush.msra.mxu0 0.0
        %607 = vmatpush.msra.mxu0 0.0
        %608 = vmatpush.msra.mxu0 0.0
        %609 = vmatpush.msra.mxu0 0.0
        %610 = vmatpush.msra.mxu0 0.0
        %611 = vmatpush.msra.mxu0 %v594
        %612 = vmatmul.f32.gmra.mxu0 %v489
        %v613 = vpop.f32.mrf.mxu0
        %v614 = vadd.f32 0.0, %v613
        %615 = vmatmul.f32.gmra.mxu0 %v491
        %v616 = vpop.f32.mrf.mxu0
        %v617 = vadd.f32 0.0, %v616
        %618 = vmatmul.f32.gmra.mxu0 %v493
        %v619 = vpop.f32.mrf.mxu0
        %v620 = vadd.f32 0.0, %v619
        %621 = vmatmul.f32.gmra.mxu0 %v495
        %v622 = vpop.f32.mrf.mxu0
        %v623 = vadd.f32 0.0, %v622
        %624 = vmatmul.f32.gmra.mxu0 %v497
        %v625 = vpop.f32.mrf.mxu0
        %v626 = vadd.f32 0.0, %v625
        %627 = vmatmul.f32.gmra.mxu0 %v499
        %v628 = vpop.f32.mrf.mxu0
        %v629 = vadd.f32 0.0, %v628
        %630 = vmatmul.f32.gmra.mxu0 %v501
        %v631 = vpop.f32.mrf.mxu0
        %v632 = vadd.f32 0.0, %v631
        %633 = vmatmul.f32.gmra.mxu0 %v503
        %v634 = vpop.f32.mrf.mxu0
        %v635 = vadd.f32 0.0, %v634
        %636 = vmatmul.f32.gmra.mxu0 %v505
        %v637 = vpop.f32.mrf.mxu0
        %v638 = vadd.f32 0.0, %v637
        %639 = vmatmul.f32.gmra.mxu0 %v507
        %v640 = vpop.f32.mrf.mxu0
        %v641 = vadd.f32 0.0, %v640
        %642 = vmatmul.f32.gmra.mxu0 %v509
        %v643 = vpop.f32.mrf.mxu0
        %v644 = vadd.f32 0.0, %v643
        %645 = vmatmul.f32.gmra.mxu0 %v511
        %v646 = vpop.f32.mrf.mxu0
        %v647 = vadd.f32 0.0, %v646
        %648 = vmatmul.f32.gmra.mxu0 %v513
        %v649 = vpop.f32.mrf.mxu0
        %v650 = vadd.f32 0.0, %v649
        %651 = vmatmul.f32.gmra.mxu0 %v515
        %v652 = vpop.f32.mrf.mxu0
        %v653 = vadd.f32 0.0, %v652
        %654 = vmatmul.f32.gmra.mxu0 %v588
        %v655 = vpop.f32.mrf.mxu0
        %v656 = vadd.f32 0.0, %v655
        %657 = vmatmul.f32.gmra.mxu0 %v591
        %v658 = vpop.f32.mrf.mxu0
        %v659 = vadd.f32 0.0, %v658
        %660 = vdwg.mxu0
        %v661 = vadd.f32 %v538, %v614
        %v662 = vadd.f32 %v541, %v617
        %v663 = vadd.f32 %v544, %v620
        %v664 = vadd.f32 %v547, %v623
        %v665 = vadd.f32 %v550, %v626
        %v666 = vadd.f32 %v553, %v629
        %v667 = vadd.f32 %v556, %v632
        %v668 = vadd.f32 %v559, %v635
        %v669 = vadd.f32 %v562, %v638
        %v670 = vadd.f32 %v565, %v641
        %v671 = vadd.f32 %v568, %v644
        %v672 = vadd.f32 %v571, %v647
        %v673 = vadd.f32 %v574, %v650
        %v674 = vadd.f32 %v577, %v653
        %v675 = vadd.f32 %v580, %v656
        %v676 = vadd.f32 %v583, %v659
        %s677 = scalar_lea.vmem %s1, 12
        %v678 = vld [vmem:[%s677] sm:$0xf]
        %v680 = vrot.slane %v308, 1
        %v681 = vrot.slane %v309, 1
        %v682 = vsel %vm342, %v680, %v681
        %v683 = vrot.slane %v310, 1
        %v684 = vsel %vm342, %v681, %v683
        %v685 = vsel %vm383, %v682, 0
        %v687 = vsel %vm383, %v684, 0
        %v690 = vsel %vm416, %v678, 0
        %692 = vmatpush.msra.mxu0 0.0
        %693 = vmatpush.msra.mxu0 0.0
        %694 = vmatpush.msra.mxu0 0.0
        %695 = vmatpush.msra.mxu0 0.0
        %696 = vmatpush.msra.mxu0 0.0
        %697 = vmatpush.msra.mxu0 0.0
        %698 = vmatpush.msra.mxu0 0.0
        %699 = vmatpush.msra.mxu0 0.0
        %700 = vmatpush.msra.mxu0 0.0
        %701 = vmatpush.msra.mxu0 0.0
        %702 = vmatpush.msra.mxu0 0.0
        %703 = vmatpush.msra.mxu0 0.0
        %704 = vmatpush.msra.mxu0 0.0
        %705 = vmatpush.msra.mxu0 0.0
        %706 = vmatpush.msra.mxu0 0.0
        %707 = vmatpush.msra.mxu0 %v690
        %708 = vmatmul.f32.gmra.mxu0 %v388
        %v709 = vpop.f32.mrf.mxu0
        %v710 = vadd.f32 0.0, %v709
        %711 = vmatmul.f32.gmra.mxu0 %v390
        %v712 = vpop.f32.mrf.mxu0
        %v713 = vadd.f32 0.0, %v712
        %714 = vmatmul.f32.gmra.mxu0 %v392
        %v715 = vpop.f32.mrf.mxu0
        %v716 = vadd.f32 0.0, %v715
        %717 = vmatmul.f32.gmra.mxu0 %v394
        %v718 = vpop.f32.mrf.mxu0
        %v719 = vadd.f32 0.0, %v718
        %720 = vmatmul.f32.gmra.mxu0 %v396
        %v721 = vpop.f32.mrf.mxu0
        %v722 = vadd.f32 0.0, %v721
        %723 = vmatmul.f32.gmra.mxu0 %v398
        %v724 = vpop.f32.mrf.mxu0
        %v725 = vadd.f32 0.0, %v724
        %726 = vmatmul.f32.gmra.mxu0 %v400
        %v727 = vpop.f32.mrf.mxu0
        %v728 = vadd.f32 0.0, %v727
        %729 = vmatmul.f32.gmra.mxu0 %v402
        %v730 = vpop.f32.mrf.mxu0
        %v731 = vadd.f32 0.0, %v730
        %732 = vmatmul.f32.gmra.mxu0 %v404
        %v733 = vpop.f32.mrf.mxu0
        %v734 = vadd.f32 0.0, %v733
        %735 = vmatmul.f32.gmra.mxu0 %v406
        %v736 = vpop.f32.mrf.mxu0
        %v737 = vadd.f32 0.0, %v736
        %738 = vmatmul.f32.gmra.mxu0 %v408
        %v739 = vpop.f32.mrf.mxu0
        %v740 = vadd.f32 0.0, %v739
        %741 = vmatmul.f32.gmra.mxu0 %v410
        %v742 = vpop.f32.mrf.mxu0
        %v743 = vadd.f32 0.0, %v742
        %744 = vmatmul.f32.gmra.mxu0 %v412
        %v745 = vpop.f32.mrf.mxu0
        %v746 = vadd.f32 0.0, %v745
        %747 = vmatmul.f32.gmra.mxu0 %v414
        %v748 = vpop.f32.mrf.mxu0
        %v749 = vadd.f32 0.0, %v748
        %750 = vmatmul.f32.gmra.mxu0 %v685
        %v751 = vpop.f32.mrf.mxu0
        %v752 = vadd.f32 0.0, %v751
        %753 = vmatmul.f32.gmra.mxu0 %v687
        %v754 = vpop.f32.mrf.mxu0
        %v755 = vadd.f32 0.0, %v754
        %756 = vdwg.mxu0
        %v757 = vadd.f32 %v661, %v710
        %v758 = vadd.f32 %v662, %v713
        %v759 = vadd.f32 %v663, %v716
        %v760 = vadd.f32 %v664, %v719
        %v761 = vadd.f32 %v665, %v722
        %v762 = vadd.f32 %v666, %v725
        %v763 = vadd.f32 %v667, %v728
        %v764 = vadd.f32 %v668, %v731
        %v765 = vadd.f32 %v669, %v734
        %v766 = vadd.f32 %v670, %v737
        %v767 = vadd.f32 %v671, %v740
        %v768 = vadd.f32 %v672, %v743
        %v769 = vadd.f32 %v673, %v746
        %v770 = vadd.f32 %v674, %v749
        %v771 = vadd.f32 %v675, %v752
        %v772 = vadd.f32 %v676, %v755
        %v774 = vperm.slane %v314, 0
        %v776 = vadd.f32 %v757, %v774
        %v777 = vadd.f32 %v758, %v774
        %v778 = vadd.f32 %v759, %v774
        %v779 = vadd.f32 %v760, %v774
        %v780 = vadd.f32 %v761, %v774
        %v781 = vadd.f32 %v762, %v774
        %v782 = vadd.f32 %v763, %v774
        %v783 = vadd.f32 %v764, %v774
        %v784 = vadd.f32 %v765, %v774
        %v785 = vadd.f32 %v766, %v774
        %v786 = vadd.f32 %v767, %v774
        %v787 = vadd.f32 %v768, %v774
        %v788 = vadd.f32 %v769, %v774
        %v789 = vadd.f32 %v770, %v774
        %v790 = vadd.f32 %v771, %v774
        %v791 = vadd.f32 %v772, %v774
        %v792 = vmax.f32 %v776, 0.0
        %v793 = vmax.f32 %v777, 0.0
        %v794 = vmax.f32 %v778, 0.0
        %v795 = vmax.f32 %v779, 0.0
        %v796 = vmax.f32 %v780, 0.0
        %v797 = vmax.f32 %v781, 0.0
        %v798 = vmax.f32 %v782, 0.0
        %v799 = vmax.f32 %v783, 0.0
        %v800 = vmax.f32 %v784, 0.0
        %v801 = vmax.f32 %v785, 0.0
        %v802 = vmax.f32 %v786, 0.0
        %v803 = vmax.f32 %v787, 0.0
        %v804 = vmax.f32 %v788, 0.0
        %v805 = vmax.f32 %v789, 0.0
        %v806 = vmax.f32 %v790, 0.0
        %v807 = vmax.f32 %v791, 0.0
        %vm808 = vcmask 64512
        %809 = vst.msk [vmem:[%s267] sm:$0xff] %vm808, %v792
        %810 = vst.msk [vmem:[%s267 + $0x8] sm:$0xff] %vm808, %v793
        %811 = vst.msk [vmem:[%s267 + $0x10] sm:$0xff] %vm808, %v794
        %812 = vst.msk [vmem:[%s267 + $0x18] sm:$0xff] %vm808, %v795
        %813 = vst.msk [vmem:[%s267 + $0x20] sm:$0xff] %vm808, %v796
        %814 = vst.msk [vmem:[%s267 + $0x28] sm:$0xff] %vm808, %v797
        %815 = vst.msk [vmem:[%s267 + $0x30] sm:$0xff] %vm808, %v798
        %816 = vst.msk [vmem:[%s267 + $0x38] sm:$0xff] %vm808, %v799
        %817 = vst.msk [vmem:[%s267 + $0x40] sm:$0xff] %vm808, %v800
        %818 = vst.msk [vmem:[%s267 + $0x48] sm:$0xff] %vm808, %v801
        %819 = vst.msk [vmem:[%s267 + $0x50] sm:$0xff] %vm808, %v802
        %820 = vst.msk [vmem:[%s267 + $0x58] sm:$0xff] %vm808, %v803
        %821 = vst.msk [vmem:[%s267 + $0x60] sm:$0xff] %vm808, %v804
        %822 = vst.msk [vmem:[%s267 + $0x68] sm:$0xff] %vm808, %v805
        %823 = vst.msk [vmem:[%s267 + $0x70] sm:$0xff] %vm808, %v806
        %824 = vst.msk [vmem:[%s267 + $0x78] sm:$0xff] %vm808, %v807
        %v825 = vld [vmem:[%s3] sm:$0x1]
        %v826 = vperm.slane %v825, 0
        %v827 = vmul.f32 %v792, %v826
        %v828 = vmul.f32 %v793, %v826
        %v829 = vmul.f32 %v794, %v826
        %v830 = vmul.f32 %v795, %v826
        %v831 = vmul.f32 %v796, %v826
        %v832 = vmul.f32 %v797, %v826
        %v833 = vmul.f32 %v798, %v826
        %v834 = vmul.f32 %v799, %v826
        %v835 = vmul.f32 %v800, %v826
        %v836 = vmul.f32 %v801, %v826
        %v837 = vmul.f32 %v802, %v826
        %v838 = vmul.f32 %v803, %v826
        %v839 = vmul.f32 %v804, %v826
        %v840 = vmul.f32 %v805, %v826
        %v841 = vmul.f32 %v806, %v826
        %v842 = vmul.f32 %v807, %v826
        %v843 = vsel %vm808, %v827, 0.0
        %844 = vadd.xlane.f32.xlu0 %v843
        %v845 = vpop.xlane.xlu0 %844
        %v846 = vsel %vm808, %v828, 0.0
        %847 = vadd.xlane.f32.xlu0 %v846
        %v848 = vpop.xlane.xlu0 %847
        %v849 = vsel %vm808, %v829, 0.0
        %850 = vadd.xlane.f32.xlu0 %v849
        %v851 = vpop.xlane.xlu0 %850
        %v852 = vsel %vm808, %v830, 0.0
        %853 = vadd.xlane.f32.xlu0 %v852
        %v854 = vpop.xlane.xlu0 %853
        %v855 = vsel %vm808, %v831, 0.0
        %856 = vadd.xlane.f32.xlu0 %v855
        %v857 = vpop.xlane.xlu0 %856
        %v858 = vsel %vm808, %v832, 0.0
        %859 = vadd.xlane.f32.xlu0 %v858
        %v860 = vpop.xlane.xlu0 %859
        %v861 = vsel %vm808, %v833, 0.0
        %862 = vadd.xlane.f32.xlu0 %v861
        %v863 = vpop.xlane.xlu0 %862
        %v864 = vsel %vm808, %v834, 0.0
        %865 = vadd.xlane.f32.xlu0 %v864
        %v866 = vpop.xlane.xlu0 %865
        %v867 = vsel %vm808, %v835, 0.0
        %868 = vadd.xlane.f32.xlu0 %v867
        %v869 = vpop.xlane.xlu0 %868
        %v870 = vsel %vm808, %v836, 0.0
        %871 = vadd.xlane.f32.xlu0 %v870
        %v872 = vpop.xlane.xlu0 %871
        %v873 = vsel %vm808, %v837, 0.0
        %874 = vadd.xlane.f32.xlu0 %v873
        %v875 = vpop.xlane.xlu0 %874
        %v876 = vsel %vm808, %v838, 0.0
        %877 = vadd.xlane.f32.xlu0 %v876
        %v878 = vpop.xlane.xlu0 %877
        %v879 = vsel %vm808, %v839, 0.0
        %880 = vadd.xlane.f32.xlu0 %v879
        %v881 = vpop.xlane.xlu0 %880
        %v882 = vsel %vm808, %v840, 0.0
        %883 = vadd.xlane.f32.xlu0 %v882
        %v884 = vpop.xlane.xlu0 %883
        %v885 = vsel %vm808, %v841, 0.0
        %886 = vadd.xlane.f32.xlu0 %v885
        %v887 = vpop.xlane.xlu0 %886
        %v888 = vsel %vm808, %v842, 0.0
        %889 = vadd.xlane.f32.xlu0 %v888
        %v890 = vpop.xlane.xlu0 %889
        %v891 = vld [vmem:[%s4] sm:$0x1]
        %v893 = vperm.slane %v891, 0
        %894 = vset.pattern.permute.xlu0 0
        %895 = vperm.xlu0 %894, %v893
        %v896 = vpop.permute.xlu0 %895
        %v898 = vadd.f32 %v845, %v896
        %v899 = vadd.f32 %v848, %v896
        %v900 = vadd.f32 %v851, %v896
        %v901 = vadd.f32 %v854, %v896
        %v902 = vadd.f32 %v857, %v896
        %v903 = vadd.f32 %v860, %v896
        %v904 = vadd.f32 %v863, %v896
        %v905 = vadd.f32 %v866, %v896
        %v906 = vadd.f32 %v869, %v896
        %v907 = vadd.f32 %v872, %v896
        %v908 = vadd.f32 %v875, %v896
        %v909 = vadd.f32 %v878, %v896
        %v910 = vadd.f32 %v881, %v896
        %v911 = vadd.f32 %v884, %v896
        %v912 = vadd.f32 %v887, %v896
        %v913 = vadd.f32 %v890, %v896
        %v914 = vtanh.pop %v898
        %v915 = vtanh.pop %v899
        %v916 = vtanh.pop %v900
        %v917 = vtanh.pop %v901
        %v918 = vtanh.pop %v902
        %v919 = vtanh.pop %v903
        %v920 = vtanh.pop %v904
        %v921 = vtanh.pop %v905
        %v922 = vtanh.pop %v906
        %v923 = vtanh.pop %v907
        %v924 = vtanh.pop %v908
        %v925 = vtanh.pop %v909
        %v926 = vtanh.pop %v910
        %v927 = vtanh.pop %v911
        %v928 = vtanh.pop %v912
        %v929 = vtanh.pop %v913
        %v930 = vmul.f32 %v914, 256.0
        %v931 = vmul.f32 %v915, 256.0
        %v932 = vmul.f32 %v916, 256.0
        %v933 = vmul.f32 %v917, 256.0
        %v934 = vmul.f32 %v918, 256.0
        %v935 = vmul.f32 %v919, 256.0
        %v936 = vmul.f32 %v920, 256.0
        %v937 = vmul.f32 %v921, 256.0
        %v938 = vmul.f32 %v922, 256.0
        %v939 = vmul.f32 %v923, 256.0
        %v940 = vmul.f32 %v924, 256.0
        %v941 = vmul.f32 %v925, 256.0
        %v942 = vmul.f32 %v926, 256.0
        %v943 = vmul.f32 %v927, 256.0
        %v944 = vmul.f32 %v928, 256.0
        %v945 = vmul.f32 %v929, 256.0
        %v962 = vlaneseq
        %v963 = vand.u32 %v962, 127
        %v964 = vperm.slane %v930, %v963
        %v965 = vadd.s32 %v963, 4294967288
        %v966 = vperm.slane %v931, %v965
        %vm967 = vcmask 130112
        %v968 = vsel %vm967, %v966, %v964
        %v969 = vperm.slane %v932, %v963
        %v970 = vperm.slane %v933, %v965
        %v971 = vsel %vm967, %v970, %v969
        %v972 = vperm.slane %v934, %v963
        %v973 = vperm.slane %v935, %v965
        %v974 = vsel %vm967, %v973, %v972
        %v975 = vperm.slane %v936, %v963
        %v976 = vperm.slane %v937, %v965
        %v977 = vsel %vm967, %v976, %v975
        %v978 = vperm.slane %v938, %v963
        %v979 = vperm.slane %v939, %v965
        %v980 = vsel %vm967, %v979, %v978
        %v981 = vperm.slane %v940, %v963
        %v982 = vperm.slane %v941, %v965
        %v983 = vsel %vm967, %v982, %v981
        %v984 = vperm.slane %v942, %v963
        %v985 = vperm.slane %v943, %v965
        %v986 = vsel %vm967, %v985, %v984
        %v987 = vperm.slane %v944, %v963
        %v988 = vperm.slane %v945, %v965
        %v989 = vsel %vm967, %v988, %v987
        %vm990 = vcmask 1041409
        %v991 = vsel %vm990, %v971, %v968
        %vm992 = vcmask 1042434
        %v993 = vsel %vm992, %v974, %v991
        %vm994 = vcmask 1043459
        %v995 = vsel %vm994, %v977, %v993
        %vm996 = vcmask 1044484
        %v997 = vsel %vm996, %v980, %v995
        %vm998 = vcmask 1045509
        %v999 = vsel %vm998, %v983, %v997
        %vm1000 = vcmask 1046534
        %v1001 = vsel %vm1000, %v986, %v999
        %vm1002 = vcmask 1047559
        %v1003 = vsel %vm1002, %v989, %v1001
        %vm1005 = vcmask 130048
        %1006 = vst.msk [vmem:[%s273] sm:$0xff] %vm1005, %v1003
        %v1007 = vld [vmem:[%s3 + $0x1] sm:$0x1]
        %v1008 = vperm.slane %v1007, 0
        %v1009 = vmul.f32 %v792, %v1008
        %v1010 = vmul.f32 %v793, %v1008
        %v1011 = vmul.f32 %v794, %v1008
        %v1012 = vmul.f32 %v795, %v1008
        %v1013 = vmul.f32 %v796, %v1008
        %v1014 = vmul.f32 %v797, %v1008
        %v1015 = vmul.f32 %v798, %v1008
        %v1016 = vmul.f32 %v799, %v1008
        %v1017 = vmul.f32 %v800, %v1008
        %v1018 = vmul.f32 %v801, %v1008
        %v1019 = vmul.f32 %v802, %v1008
        %v1020 = vmul.f32 %v803, %v1008
        %v1021 = vmul.f32 %v804, %v1008
        %v1022 = vmul.f32 %v805, %v1008
        %v1023 = vmul.f32 %v806, %v1008
        %v1024 = vmul.f32 %v807, %v1008
        %v1025 = vsel %vm808, %v1009, 0.0
        %1026 = vadd.xlane.f32.xlu0 %v1025
        %v1027 = vpop.xlane.xlu0 %1026
        %v1028 = vsel %vm808, %v1010, 0.0
        %1029 = vadd.xlane.f32.xlu0 %v1028
        %v1030 = vpop.xlane.xlu0 %1029
        %v1031 = vsel %vm808, %v1011, 0.0
        %1032 = vadd.xlane.f32.xlu0 %v1031
        %v1033 = vpop.xlane.xlu0 %1032
        %v1034 = vsel %vm808, %v1012, 0.0
        %1035 = vadd.xlane.f32.xlu0 %v1034
        %v1036 = vpop.xlane.xlu0 %1035
        %v1037 = vsel %vm808, %v1013, 0.0
        %1038 = vadd.xlane.f32.xlu0 %v1037
        %v1039 = vpop.xlane.xlu0 %1038
        %v1040 = vsel %vm808, %v1014, 0.0
        %1041 = vadd.xlane.f32.xlu0 %v1040
        %v1042 = vpop.xlane.xlu0 %1041
        %v1043 = vsel %vm808, %v1015, 0.0
        %1044 = vadd.xlane.f32.xlu0 %v1043
        %v1045 = vpop.xlane.xlu0 %1044
        %v1046 = vsel %vm808, %v1016, 0.0
        %1047 = vadd.xlane.f32.xlu0 %v1046
        %v1048 = vpop.xlane.xlu0 %1047
        %v1049 = vsel %vm808, %v1017, 0.0
        %1050 = vadd.xlane.f32.xlu0 %v1049
        %v1051 = vpop.xlane.xlu0 %1050
        %v1052 = vsel %vm808, %v1018, 0.0
        %1053 = vadd.xlane.f32.xlu0 %v1052
        %v1054 = vpop.xlane.xlu0 %1053
        %v1055 = vsel %vm808, %v1019, 0.0
        %1056 = vadd.xlane.f32.xlu0 %v1055
        %v1057 = vpop.xlane.xlu0 %1056
        %v1058 = vsel %vm808, %v1020, 0.0
        %1059 = vadd.xlane.f32.xlu0 %v1058
        %v1060 = vpop.xlane.xlu0 %1059
        %v1061 = vsel %vm808, %v1021, 0.0
        %1062 = vadd.xlane.f32.xlu0 %v1061
        %v1063 = vpop.xlane.xlu0 %1062
        %v1064 = vsel %vm808, %v1022, 0.0
        %1065 = vadd.xlane.f32.xlu0 %v1064
        %v1066 = vpop.xlane.xlu0 %1065
        %v1067 = vsel %vm808, %v1023, 0.0
        %1068 = vadd.xlane.f32.xlu0 %v1067
        %v1069 = vpop.xlane.xlu0 %1068
        %v1070 = vsel %vm808, %v1024, 0.0
        %1071 = vadd.xlane.f32.xlu0 %v1070
        %v1072 = vpop.xlane.xlu0 %1071
        %s1073 = scalar_lea.vmem %s4, 1
        %v1074 = vld [vmem:[%s1073] sm:$0x1]
        %v1076 = vperm.slane %v1074, 0
        %1077 = vset.pattern.permute.xlu0 0
        %1078 = vperm.xlu0 %1077, %v1076
        %v1079 = vpop.permute.xlu0 %1078
        %v1081 = vadd.f32 %v1027, %v1079
        %v1082 = vadd.f32 %v1030, %v1079
        %v1083 = vadd.f32 %v1033, %v1079
        %v1084 = vadd.f32 %v1036, %v1079
        %v1085 = vadd.f32 %v1039, %v1079
        %v1086 = vadd.f32 %v1042, %v1079
        %v1087 = vadd.f32 %v1045, %v1079
        %v1088 = vadd.f32 %v1048, %v1079
        %v1089 = vadd.f32 %v1051, %v1079
        %v1090 = vadd.f32 %v1054, %v1079
        %v1091 = vadd.f32 %v1057, %v1079
        %v1092 = vadd.f32 %v1060, %v1079
        %v1093 = vadd.f32 %v1063, %v1079
        %v1094 = vadd.f32 %v1066, %v1079
        %v1095 = vadd.f32 %v1069, %v1079
        %v1096 = vadd.f32 %v1072, %v1079
        %v1097 = vtanh.pop %v1081
        %v1098 = vtanh.pop %v1082
        %v1099 = vtanh.pop %v1083
        %v1100 = vtanh.pop %v1084
        %v1101 = vtanh.pop %v1085
        %v1102 = vtanh.pop %v1086
        %v1103 = vtanh.pop %v1087
        %v1104 = vtanh.pop %v1088
        %v1105 = vtanh.pop %v1089
        %v1106 = vtanh.pop %v1090
        %v1107 = vtanh.pop %v1091
        %v1108 = vtanh.pop %v1092
        %v1109 = vtanh.pop %v1093
        %v1110 = vtanh.pop %v1094
        %v1111 = vtanh.pop %v1095
        %v1112 = vtanh.pop %v1096
        %v1113 = vmul.f32 %v1097, 256.0
        %v1114 = vmul.f32 %v1098, 256.0
        %v1115 = vmul.f32 %v1099, 256.0
        %v1116 = vmul.f32 %v1100, 256.0
        %v1117 = vmul.f32 %v1101, 256.0
        %v1118 = vmul.f32 %v1102, 256.0
        %v1119 = vmul.f32 %v1103, 256.0
        %v1120 = vmul.f32 %v1104, 256.0
        %v1121 = vmul.f32 %v1105, 256.0
        %v1122 = vmul.f32 %v1106, 256.0
        %v1123 = vmul.f32 %v1107, 256.0
        %v1124 = vmul.f32 %v1108, 256.0
        %v1125 = vmul.f32 %v1109, 256.0
        %v1126 = vmul.f32 %v1110, 256.0
        %v1127 = vmul.f32 %v1111, 256.0
        %v1128 = vmul.f32 %v1112, 256.0
        %v1145 = vperm.slane %v1113, %v963
        %v1146 = vperm.slane %v1114, %v965
        %v1147 = vsel %vm967, %v1146, %v1145
        %v1148 = vperm.slane %v1115, %v963
        %v1149 = vperm.slane %v1116, %v965
        %v1150 = vsel %vm967, %v1149, %v1148
        %v1151 = vperm.slane %v1117, %v963
        %v1152 = vperm.slane %v1118, %v965
        %v1153 = vsel %vm967, %v1152, %v1151
        %v1154 = vperm.slane %v1119, %v963
        %v1155 = vperm.slane %v1120, %v965
        %v1156 = vsel %vm967, %v1155, %v1154
        %v1157 = vperm.slane %v1121, %v963
        %v1158 = vperm.slane %v1122, %v965
        %v1159 = vsel %vm967, %v1158, %v1157
        %v1160 = vperm.slane %v1123, %v963
        %v1161 = vperm.slane %v1124, %v965
        %v1162 = vsel %vm967, %v1161, %v1160
        %v1163 = vperm.slane %v1125, %v963
        %v1164 = vperm.slane %v1126, %v965
        %v1165 = vsel %vm967, %v1164, %v1163
        %v1166 = vperm.slane %v1127, %v963
        %v1167 = vperm.slane %v1128, %v965
        %v1168 = vsel %vm967, %v1167, %v1166
        %v1169 = vsel %vm990, %v1150, %v1147
        %v1170 = vsel %vm992, %v1153, %v1169
        %v1171 = vsel %vm994, %v1156, %v1170
        %v1172 = vsel %vm996, %v1159, %v1171
        %v1173 = vsel %vm998, %v1162, %v1172
        %v1174 = vsel %vm1000, %v1165, %v1173
        %v1175 = vsel %vm1002, %v1168, %v1174
        %s1177 = scalar_lea.vmem %s273, 32 [#allocation3]
        %1178 = vst.msk [vmem:[%s1177] sm:$0xff] %vm1005, %v1175
        %s1179 = scalar_lea.vmem %s1, 16
        %v1180 = vld [vmem:[%s1179] sm:$0xf]
        %s1181 = scalar_lea.vmem %s1, 20
        %v1182 = vld [vmem:[%s1181] sm:$0xf]
        %vm1183 = vcmask 1045504
        %v1184 = vrot.slane %v284, 2
        %v1185 = vrot.slane %v285, 2
        %v1186 = vsel %vm1183, %v1184, %v1185
        %v1187 = vrot.slane %v286, 2
        %v1188 = vsel %vm1183, %v1185, %v1187
        %v1189 = vrot.slane %v287, 2
        %v1190 = vrot.slane %v288, 2
        %v1191 = vsel %vm1183, %v1189, %v1190
        %v1192 = vrot.slane %v289, 2
        %v1193 = vsel %vm1183, %v1190, %v1192
        %v1194 = vrot.slane %v290, 2
        %v1195 = vrot.slane %v291, 2
        %v1196 = vsel %vm1183, %v1194, %v1195
        %v1197 = vrot.slane %v292, 2
        %v1198 = vsel %vm1183, %v1195, %v1197
        %v1199 = vrot.slane %v293, 2
        %v1200 = vrot.slane %v294, 2
        %v1201 = vsel %vm1183, %v1199, %v1200
        %v1202 = vrot.slane %v295, 2
        %v1203 = vsel %vm1183, %v1200, %v1202
        %v1204 = vrot.slane %v296, 2
        %v1205 = vrot.slane %v297, 2
        %v1206 = vsel %vm1183, %v1204, %v1205
        %v1207 = vrot.slane %v298, 2
        %v1208 = vsel %vm1183, %v1205, %v1207
        %v1209 = vrot.slane %v299, 2
        %v1210 = vrot.slane %v300, 2
        %v1211 = vsel %vm1183, %v1209, %v1210
        %v1212 = vrot.slane %v301, 2
        %v1213 = vsel %vm1183, %v1210, %v1212
        %v1214 = vrot.slane %v302, 2
        %v1215 = vrot.slane %v303, 2
        %v1216 = vsel %vm1183, %v1214, %v1215
        %v1217 = vrot.slane %v304, 2
        %v1218 = vsel %vm1183, %v1215, %v1217
        %v1219 = vrot.slane %v305, 2
        %v1220 = vrot.slane %v306, 2
        %v1221 = vsel %vm1183, %v1219, %v1220
        %v1222 = vrot.slane %v307, 2
        %v1223 = vsel %vm1183, %v1220, %v1222
        %v1224 = vsel %vm383, %v1186, 0
        %v1226 = vsel %vm383, %v1188, 0
        %v1228 = vsel %vm383, %v1191, 0
        %v1230 = vsel %vm383, %v1193, 0
        %v1232 = vsel %vm383, %v1196, 0
        %v1234 = vsel %vm383, %v1198, 0
        %v1236 = vsel %vm383, %v1201, 0
        %v1238 = vsel %vm383, %v1203, 0
        %v1240 = vsel %vm383, %v1206, 0
        %v1242 = vsel %vm383, %v1208, 0
        %v1244 = vsel %vm383, %v1211, 0
        %v1246 = vsel %vm383, %v1213, 0
        %v1248 = vsel %vm383, %v1216, 0
        %v1250 = vsel %vm383, %v1218, 0
        %v1252 = vsel %vm383, %v1221, 0
        %v1254 = vsel %vm383, %v1223, 0
        %v1257 = vsel %vm416, %v1182, 0
        %1259 = vmatpush.msra.mxu0 0.0
        %1260 = vmatpush.msra.mxu0 0.0
        %1261 = vmatpush.msra.mxu0 0.0
        %1262 = vmatpush.msra.mxu0 0.0
        %1263 = vmatpush.msra.mxu0 0.0
        %1264 = vmatpush.msra.mxu0 0.0
        %1265 = vmatpush.msra.mxu0 0.0
        %1266 = vmatpush.msra.mxu0 0.0
        %1267 = vmatpush.msra.mxu0 0.0
        %1268 = vmatpush.msra.mxu0 0.0
        %1269 = vmatpush.msra.mxu0 0.0
        %1270 = vmatpush.msra.mxu0 0.0
        %1271 = vmatpush.msra.mxu0 0.0
        %1272 = vmatpush.msra.mxu0 0.0
        %1273 = vmatpush.msra.mxu0 0.0
        %1274 = vmatpush.msra.mxu0 %v1257
        %1275 = vmatmul.f32.gmra.mxu0 %v1224
        %v1276 = vpop.f32.mrf.mxu0
        %v1277 = vadd.f32 0.0, %v1276
        %1278 = vmatmul.f32.gmra.mxu0 %v1226
        %v1279 = vpop.f32.mrf.mxu0
        %v1280 = vadd.f32 0.0, %v1279
        %1281 = vmatmul.f32.gmra.mxu0 %v1228
        %v1282 = vpop.f32.mrf.mxu0
        %v1283 = vadd.f32 0.0, %v1282
        %1284 = vmatmul.f32.gmra.mxu0 %v1230
        %v1285 = vpop.f32.mrf.mxu0
        %v1286 = vadd.f32 0.0, %v1285
        %1287 = vmatmul.f32.gmra.mxu0 %v1232
        %v1288 = vpop.f32.mrf.mxu0
        %v1289 = vadd.f32 0.0, %v1288
        %1290 = vmatmul.f32.gmra.mxu0 %v1234
        %v1291 = vpop.f32.mrf.mxu0
        %v1292 = vadd.f32 0.0, %v1291
        %1293 = vmatmul.f32.gmra.mxu0 %v1236
        %v1294 = vpop.f32.mrf.mxu0
        %v1295 = vadd.f32 0.0, %v1294
        %1296 = vmatmul.f32.gmra.mxu0 %v1238
        %v1297 = vpop.f32.mrf.mxu0
        %v1298 = vadd.f32 0.0, %v1297
        %1299 = vmatmul.f32.gmra.mxu0 %v1240
        %v1300 = vpop.f32.mrf.mxu0
        %v1301 = vadd.f32 0.0, %v1300
        %1302 = vmatmul.f32.gmra.mxu0 %v1242
        %v1303 = vpop.f32.mrf.mxu0
        %v1304 = vadd.f32 0.0, %v1303
        %1305 = vmatmul.f32.gmra.mxu0 %v1244
        %v1306 = vpop.f32.mrf.mxu0
        %v1307 = vadd.f32 0.0, %v1306
        %1308 = vmatmul.f32.gmra.mxu0 %v1246
        %v1309 = vpop.f32.mrf.mxu0
        %v1310 = vadd.f32 0.0, %v1309
        %1311 = vmatmul.f32.gmra.mxu0 %v1248
        %v1312 = vpop.f32.mrf.mxu0
        %v1313 = vadd.f32 0.0, %v1312
        %1314 = vmatmul.f32.gmra.mxu0 %v1250
        %v1315 = vpop.f32.mrf.mxu0
        %v1316 = vadd.f32 0.0, %v1315
        %1317 = vmatmul.f32.gmra.mxu0 %v1252
        %v1318 = vpop.f32.mrf.mxu0
        %v1319 = vadd.f32 0.0, %v1318
        %1320 = vmatmul.f32.gmra.mxu0 %v1254
        %v1321 = vpop.f32.mrf.mxu0
        %v1322 = vadd.f32 0.0, %v1321
        %1323 = vdwg.mxu0
        %v1325 = vsel %vm416, %v1180, 0
        %1327 = vmatpush.msra.mxu0 0.0
        %1328 = vmatpush.msra.mxu0 0.0
        %1329 = vmatpush.msra.mxu0 0.0
        %1330 = vmatpush.msra.mxu0 0.0
        %1331 = vmatpush.msra.mxu0 0.0
        %1332 = vmatpush.msra.mxu0 0.0
        %1333 = vmatpush.msra.mxu0 0.0
        %1334 = vmatpush.msra.mxu0 0.0
        %1335 = vmatpush.msra.mxu0 0.0
        %1336 = vmatpush.msra.mxu0 0.0
        %1337 = vmatpush.msra.mxu0 0.0
        %1338 = vmatpush.msra.mxu0 0.0
        %1339 = vmatpush.msra.mxu0 0.0
        %1340 = vmatpush.msra.mxu0 0.0
        %1341 = vmatpush.msra.mxu0 0.0
        %1342 = vmatpush.msra.mxu0 %v1325
        %1343 = vmatmul.f32.gmra.mxu0 %v384
        %v1344 = vpop.f32.mrf.mxu0
        %v1345 = vadd.f32 %v1277, %v1344
        %1346 = vmatmul.f32.gmra.mxu0 %v386
        %v1347 = vpop.f32.mrf.mxu0
        %v1348 = vadd.f32 %v1280, %v1347
        %1349 = vmatmul.f32.gmra.mxu0 %v388
        %v1350 = vpop.f32.mrf.mxu0
        %v1351 = vadd.f32 %v1283, %v1350
        %1352 = vmatmul.f32.gmra.mxu0 %v390
        %v1353 = vpop.f32.mrf.mxu0
        %v1354 = vadd.f32 %v1286, %v1353
        %1355 = vmatmul.f32.gmra.mxu0 %v392
        %v1356 = vpop.f32.mrf.mxu0
        %v1357 = vadd.f32 %v1289, %v1356
        %1358 = vmatmul.f32.gmra.mxu0 %v394
        %v1359 = vpop.f32.mrf.mxu0
        %v1360 = vadd.f32 %v1292, %v1359
        %1361 = vmatmul.f32.gmra.mxu0 %v396
        %v1362 = vpop.f32.mrf.mxu0
        %v1363 = vadd.f32 %v1295, %v1362
        %1364 = vmatmul.f32.gmra.mxu0 %v398
        %v1365 = vpop.f32.mrf.mxu0
        %v1366 = vadd.f32 %v1298, %v1365
        %1367 = vmatmul.f32.gmra.mxu0 %v400
        %v1368 = vpop.f32.mrf.mxu0
        %v1369 = vadd.f32 %v1301, %v1368
        %1370 = vmatmul.f32.gmra.mxu0 %v402
        %v1371 = vpop.f32.mrf.mxu0
        %v1372 = vadd.f32 %v1304, %v1371
        %1373 = vmatmul.f32.gmra.mxu0 %v404
        %v1374 = vpop.f32.mrf.mxu0
        %v1375 = vadd.f32 %v1307, %v1374
        %1376 = vmatmul.f32.gmra.mxu0 %v406
        %v1377 = vpop.f32.mrf.mxu0
        %v1378 = vadd.f32 %v1310, %v1377
        %1379 = vmatmul.f32.gmra.mxu0 %v408
        %v1380 = vpop.f32.mrf.mxu0
        %v1381 = vadd.f32 %v1313, %v1380
        %1382 = vmatmul.f32.gmra.mxu0 %v410
        %v1383 = vpop.f32.mrf.mxu0
        %v1384 = vadd.f32 %v1316, %v1383
        %1385 = vmatmul.f32.gmra.mxu0 %v412
        %v1386 = vpop.f32.mrf.mxu0
        %v1387 = vadd.f32 %v1319, %v1386
        %1388 = vmatmul.f32.gmra.mxu0 %v414
        %v1389 = vpop.f32.mrf.mxu0
        %v1390 = vadd.f32 %v1322, %v1389
        %1391 = vdwg.mxu0
        %s1392 = scalar_lea.vmem %s1, 24
        %v1393 = vld [vmem:[%s1392] sm:$0xf]
        %v1395 = vsel %vm416, %v1393, 0
        %1397 = vmatpush.msra.mxu0 0.0
        %1398 = vmatpush.msra.mxu0 0.0
        %1399 = vmatpush.msra.mxu0 0.0
        %1400 = vmatpush.msra.mxu0 0.0
        %1401 = vmatpush.msra.mxu0 0.0
        %1402 = vmatpush.msra.mxu0 0.0
        %1403 = vmatpush.msra.mxu0 0.0
        %1404 = vmatpush.msra.mxu0 0.0
        %1405 = vmatpush.msra.mxu0 0.0
        %1406 = vmatpush.msra.mxu0 0.0
        %1407 = vmatpush.msra.mxu0 0.0
        %1408 = vmatpush.msra.mxu0 0.0
        %1409 = vmatpush.msra.mxu0 0.0
        %1410 = vmatpush.msra.mxu0 0.0
        %1411 = vmatpush.msra.mxu0 0.0
        %1412 = vmatpush.msra.mxu0 %v1395
        %1413 = vmatmul.f32.gmra.mxu0 %v388
        %v1414 = vpop.f32.mrf.mxu0
        %v1415 = vadd.f32 0.0, %v1414
        %1416 = vmatmul.f32.gmra.mxu0 %v390
        %v1417 = vpop.f32.mrf.mxu0
        %v1418 = vadd.f32 0.0, %v1417
        %1419 = vmatmul.f32.gmra.mxu0 %v392
        %v1420 = vpop.f32.mrf.mxu0
        %v1421 = vadd.f32 0.0, %v1420
        %1422 = vmatmul.f32.gmra.mxu0 %v394
        %v1423 = vpop.f32.mrf.mxu0
        %v1424 = vadd.f32 0.0, %v1423
        %1425 = vmatmul.f32.gmra.mxu0 %v396
        %v1426 = vpop.f32.mrf.mxu0
        %v1427 = vadd.f32 0.0, %v1426
        %1428 = vmatmul.f32.gmra.mxu0 %v398
        %v1429 = vpop.f32.mrf.mxu0
        %v1430 = vadd.f32 0.0, %v1429
        %1431 = vmatmul.f32.gmra.mxu0 %v400
        %v1432 = vpop.f32.mrf.mxu0
        %v1433 = vadd.f32 0.0, %v1432
        %1434 = vmatmul.f32.gmra.mxu0 %v402
        %v1435 = vpop.f32.mrf.mxu0
        %v1436 = vadd.f32 0.0, %v1435
        %1437 = vmatmul.f32.gmra.mxu0 %v404
        %v1438 = vpop.f32.mrf.mxu0
        %v1439 = vadd.f32 0.0, %v1438
        %1440 = vmatmul.f32.gmra.mxu0 %v406
        %v1441 = vpop.f32.mrf.mxu0
        %v1442 = vadd.f32 0.0, %v1441
        %1443 = vmatmul.f32.gmra.mxu0 %v408
        %v1444 = vpop.f32.mrf.mxu0
        %v1445 = vadd.f32 0.0, %v1444
        %1446 = vmatmul.f32.gmra.mxu0 %v410
        %v1447 = vpop.f32.mrf.mxu0
        %v1448 = vadd.f32 0.0, %v1447
        %1449 = vmatmul.f32.gmra.mxu0 %v412
        %v1450 = vpop.f32.mrf.mxu0
        %v1451 = vadd.f32 0.0, %v1450
        %1452 = vmatmul.f32.gmra.mxu0 %v414
        %v1453 = vpop.f32.mrf.mxu0
        %v1454 = vadd.f32 0.0, %v1453
        %1455 = vmatmul.f32.gmra.mxu0 %v685
        %v1456 = vpop.f32.mrf.mxu0
        %v1457 = vadd.f32 0.0, %v1456
        %1458 = vmatmul.f32.gmra.mxu0 %v687
        %v1459 = vpop.f32.mrf.mxu0
        %v1460 = vadd.f32 0.0, %v1459
        %1461 = vdwg.mxu0
        %v1462 = vadd.f32 %v1345, %v1415
        %v1463 = vadd.f32 %v1348, %v1418
        %v1464 = vadd.f32 %v1351, %v1421
        %v1465 = vadd.f32 %v1354, %v1424
        %v1466 = vadd.f32 %v1357, %v1427
        %v1467 = vadd.f32 %v1360, %v1430
        %v1468 = vadd.f32 %v1363, %v1433
        %v1469 = vadd.f32 %v1366, %v1436
        %v1470 = vadd.f32 %v1369, %v1439
        %v1471 = vadd.f32 %v1372, %v1442
        %v1472 = vadd.f32 %v1375, %v1445
        %v1473 = vadd.f32 %v1378, %v1448
        %v1474 = vadd.f32 %v1381, %v1451
        %v1475 = vadd.f32 %v1384, %v1454
        %v1476 = vadd.f32 %v1387, %v1457
        %v1477 = vadd.f32 %v1390, %v1460
        %s1478 = scalar_lea.vmem %s1, 28
        %v1479 = vld [vmem:[%s1478] sm:$0xf]
        %v1480 = vrot.slane %v308, 2
        %v1481 = vrot.slane %v309, 2
        %v1482 = vsel %vm1183, %v1480, %v1481
        %v1483 = vrot.slane %v310, 2
        %v1484 = vsel %vm1183, %v1481, %v1483
        %v1485 = vsel %vm383, %v1482, 0
        %v1487 = vsel %vm383, %v1484, 0
        %v1490 = vsel %vm416, %v1479, 0
        %1492 = vmatpush.msra.mxu0 0.0
        %1493 = vmatpush.msra.mxu0 0.0
        %1494 = vmatpush.msra.mxu0 0.0
        %1495 = vmatpush.msra.mxu0 0.0
        %1496 = vmatpush.msra.mxu0 0.0
        %1497 = vmatpush.msra.mxu0 0.0
        %1498 = vmatpush.msra.mxu0 0.0
        %1499 = vmatpush.msra.mxu0 0.0
        %1500 = vmatpush.msra.mxu0 0.0
        %1501 = vmatpush.msra.mxu0 0.0
        %1502 = vmatpush.msra.mxu0 0.0
        %1503 = vmatpush.msra.mxu0 0.0
        %1504 = vmatpush.msra.mxu0 0.0
        %1505 = vmatpush.msra.mxu0 0.0
        %1506 = vmatpush.msra.mxu0 0.0
        %1507 = vmatpush.msra.mxu0 %v1490
        %1508 = vmatmul.f32.gmra.mxu0 %v1228
        %v1509 = vpop.f32.mrf.mxu0
        %v1510 = vadd.f32 0.0, %v1509
        %1511 = vmatmul.f32.gmra.mxu0 %v1230
        %v1512 = vpop.f32.mrf.mxu0
        %v1513 = vadd.f32 0.0, %v1512
        %1514 = vmatmul.f32.gmra.mxu0 %v1232
        %v1515 = vpop.f32.mrf.mxu0
        %v1516 = vadd.f32 0.0, %v1515
        %1517 = vmatmul.f32.gmra.mxu0 %v1234
        %v1518 = vpop.f32.mrf.mxu0
        %v1519 = vadd.f32 0.0, %v1518
        %1520 = vmatmul.f32.gmra.mxu0 %v1236
        %v1521 = vpop.f32.mrf.mxu0
        %v1522 = vadd.f32 0.0, %v1521
        %1523 = vmatmul.f32.gmra.mxu0 %v1238
        %v1524 = vpop.f32.mrf.mxu0
        %v1525 = vadd.f32 0.0, %v1524
        %1526 = vmatmul.f32.gmra.mxu0 %v1240
        %v1527 = vpop.f32.mrf.mxu0
        %v1528 = vadd.f32 0.0, %v1527
        %1529 = vmatmul.f32.gmra.mxu0 %v1242
        %v1530 = vpop.f32.mrf.mxu0
        %v1531 = vadd.f32 0.0, %v1530
        %1532 = vmatmul.f32.gmra.mxu0 %v1244
        %v1533 = vpop.f32.mrf.mxu0
        %v1534 = vadd.f32 0.0, %v1533
        %1535 = vmatmul.f32.gmra.mxu0 %v1246
        %v1536 = vpop.f32.mrf.mxu0
        %v1537 = vadd.f32 0.0, %v1536
        %1538 = vmatmul.f32.gmra.mxu0 %v1248
        %v1539 = vpop.f32.mrf.mxu0
        %v1540 = vadd.f32 0.0, %v1539
        %1541 = vmatmul.f32.gmra.mxu0 %v1250
        %v1542 = vpop.f32.mrf.mxu0
        %v1543 = vadd.f32 0.0, %v1542
        %1544 = vmatmul.f32.gmra.mxu0 %v1252
        %v1545 = vpop.f32.mrf.mxu0
        %v1546 = vadd.f32 0.0, %v1545
        %1547 = vmatmul.f32.gmra.mxu0 %v1254
        %v1548 = vpop.f32.mrf.mxu0
        %v1549 = vadd.f32 0.0, %v1548
        %1550 = vmatmul.f32.gmra.mxu0 %v1485
        %v1551 = vpop.f32.mrf.mxu0
        %v1552 = vadd.f32 0.0, %v1551
        %1553 = vmatmul.f32.gmra.mxu0 %v1487
        %v1554 = vpop.f32.mrf.mxu0
        %v1555 = vadd.f32 0.0, %v1554
        %1556 = vdwg.mxu0
        %v1557 = vadd.f32 %v1462, %v1510
        %v1558 = vadd.f32 %v1463, %v1513
        %v1559 = vadd.f32 %v1464, %v1516
        %v1560 = vadd.f32 %v1465, %v1519
        %v1561 = vadd.f32 %v1466, %v1522
        %v1562 = vadd.f32 %v1467, %v1525
        %v1563 = vadd.f32 %v1468, %v1528
        %v1564 = vadd.f32 %v1469, %v1531
        %v1565 = vadd.f32 %v1470, %v1534
        %v1566 = vadd.f32 %v1471, %v1537
        %v1567 = vadd.f32 %v1472, %v1540
        %v1568 = vadd.f32 %v1473, %v1543
        %v1569 = vadd.f32 %v1474, %v1546
        %v1570 = vadd.f32 %v1475, %v1549
        %v1571 = vadd.f32 %v1476, %v1552
        %v1572 = vadd.f32 %v1477, %v1555
        %v1573 = vadd.f32 %v1557, %v774
        %v1574 = vadd.f32 %v1558, %v774
        %v1575 = vadd.f32 %v1559, %v774
        %v1576 = vadd.f32 %v1560, %v774
        %v1577 = vadd.f32 %v1561, %v774
        %v1578 = vadd.f32 %v1562, %v774
        %v1579 = vadd.f32 %v1563, %v774
        %v1580 = vadd.f32 %v1564, %v774
        %v1581 = vadd.f32 %v1565, %v774
        %v1582 = vadd.f32 %v1566, %v774
        %v1583 = vadd.f32 %v1567, %v774
        %v1584 = vadd.f32 %v1568, %v774
        %v1585 = vadd.f32 %v1569, %v774
        %v1586 = vadd.f32 %v1570, %v774
        %v1587 = vadd.f32 %v1571, %v774
        %v1588 = vadd.f32 %v1572, %v774
        %v1589 = vmax.f32 %v1573, 0.0
        %v1590 = vmax.f32 %v1574, 0.0
        %v1591 = vmax.f32 %v1575, 0.0
        %v1592 = vmax.f32 %v1576, 0.0
        %v1593 = vmax.f32 %v1577, 0.0
        %v1594 = vmax.f32 %v1578, 0.0
        %v1595 = vmax.f32 %v1579, 0.0
        %v1596 = vmax.f32 %v1580, 0.0
        %v1597 = vmax.f32 %v1581, 0.0
        %v1598 = vmax.f32 %v1582, 0.0
        %v1599 = vmax.f32 %v1583, 0.0
        %v1600 = vmax.f32 %v1584, 0.0
        %v1601 = vmax.f32 %v1585, 0.0
        %v1602 = vmax.f32 %v1586, 0.0
        %v1603 = vmax.f32 %v1587, 0.0
        %v1604 = vmax.f32 %v1588, 0.0
        %s1605 = scalar_lea.vmem %s267, 128 [#allocation2]
        %1606 = vst.msk [vmem:[%s1605] sm:$0xff] %vm808, %v1589
        %1607 = vst.msk [vmem:[%s1605 + $0x8] sm:$0xff] %vm808, %v1590
        %1608 = vst.msk [vmem:[%s1605 + $0x10] sm:$0xff] %vm808, %v1591
        %1609 = vst.msk [vmem:[%s1605 + $0x18] sm:$0xff] %vm808, %v1592
        %1610 = vst.msk [vmem:[%s1605 + $0x20] sm:$0xff] %vm808, %v1593
        %1611 = vst.msk [vmem:[%s1605 + $0x28] sm:$0xff] %vm808, %v1594
        %1612 = vst.msk [vmem:[%s1605 + $0x30] sm:$0xff] %vm808, %v1595
        %1613 = vst.msk [vmem:[%s1605 + $0x38] sm:$0xff] %vm808, %v1596
        %1614 = vst.msk [vmem:[%s1605 + $0x40] sm:$0xff] %vm808, %v1597
        %1615 = vst.msk [vmem:[%s1605 + $0x48] sm:$0xff] %vm808, %v1598
        %1616 = vst.msk [vmem:[%s1605 + $0x50] sm:$0xff] %vm808, %v1599
        %1617 = vst.msk [vmem:[%s1605 + $0x58] sm:$0xff] %vm808, %v1600
        %1618 = vst.msk [vmem:[%s1605 + $0x60] sm:$0xff] %vm808, %v1601
        %1619 = vst.msk [vmem:[%s1605 + $0x68] sm:$0xff] %vm808, %v1602
        %1620 = vst.msk [vmem:[%s1605 + $0x70] sm:$0xff] %vm808, %v1603
        %1621 = vst.msk [vmem:[%s1605 + $0x78] sm:$0xff] %vm808, %v1604
        %v1622 = vld [vmem:[%s3] sm:$0x1]
        %v1623 = vperm.slane %v1622, 0
        %v1624 = vmul.f32 %v1589, %v1623
        %v1625 = vmul.f32 %v1590, %v1623
        %v1626 = vmul.f32 %v1591, %v1623
        %v1627 = vmul.f32 %v1592, %v1623
        %v1628 = vmul.f32 %v1593, %v1623
        %v1629 = vmul.f32 %v1594, %v1623
        %v1630 = vmul.f32 %v1595, %v1623
        %v1631 = vmul.f32 %v1596, %v1623
        %v1632 = vmul.f32 %v1597, %v1623
        %v1633 = vmul.f32 %v1598, %v1623
        %v1634 = vmul.f32 %v1599, %v1623
        %v1635 = vmul.f32 %v1600, %v1623
        %v1636 = vmul.f32 %v1601, %v1623
        %v1637 = vmul.f32 %v1602, %v1623
        %v1638 = vmul.f32 %v1603, %v1623
        %v1639 = vmul.f32 %v1604, %v1623
        %v1640 = vsel %vm808, %v1624, 0.0
        %1641 = vadd.xlane.f32.xlu0 %v1640
        %v1642 = vpop.xlane.xlu0 %1641
        %v1643 = vsel %vm808, %v1625, 0.0
        %1644 = vadd.xlane.f32.xlu0 %v1643
        %v1645 = vpop.xlane.xlu0 %1644
        %v1646 = vsel %vm808, %v1626, 0.0
        %1647 = vadd.xlane.f32.xlu0 %v1646
        %v1648 = vpop.xlane.xlu0 %1647
        %v1649 = vsel %vm808, %v1627, 0.0
        %1650 = vadd.xlane.f32.xlu0 %v1649
        %v1651 = vpop.xlane.xlu0 %1650
        %v1652 = vsel %vm808, %v1628, 0.0
        %1653 = vadd.xlane.f32.xlu0 %v1652
        %v1654 = vpop.xlane.xlu0 %1653
        %v1655 = vsel %vm808, %v1629, 0.0
        %1656 = vadd.xlane.f32.xlu0 %v1655
        %v1657 = vpop.xlane.xlu0 %1656
        %v1658 = vsel %vm808, %v1630, 0.0
        %1659 = vadd.xlane.f32.xlu0 %v1658
        %v1660 = vpop.xlane.xlu0 %1659
        %v1661 = vsel %vm808, %v1631, 0.0
        %1662 = vadd.xlane.f32.xlu0 %v1661
        %v1663 = vpop.xlane.xlu0 %1662
        %v1664 = vsel %vm808, %v1632, 0.0
        %1665 = vadd.xlane.f32.xlu0 %v1664
        %v1666 = vpop.xlane.xlu0 %1665
        %v1667 = vsel %vm808, %v1633, 0.0
        %1668 = vadd.xlane.f32.xlu0 %v1667
        %v1669 = vpop.xlane.xlu0 %1668
        %v1670 = vsel %vm808, %v1634, 0.0
        %1671 = vadd.xlane.f32.xlu0 %v1670
        %v1672 = vpop.xlane.xlu0 %1671
        %v1673 = vsel %vm808, %v1635, 0.0
        %1674 = vadd.xlane.f32.xlu0 %v1673
        %v1675 = vpop.xlane.xlu0 %1674
        %v1676 = vsel %vm808, %v1636, 0.0
        %1677 = vadd.xlane.f32.xlu0 %v1676
        %v1678 = vpop.xlane.xlu0 %1677
        %v1679 = vsel %vm808, %v1637, 0.0
        %1680 = vadd.xlane.f32.xlu0 %v1679
        %v1681 = vpop.xlane.xlu0 %1680
        %v1682 = vsel %vm808, %v1638, 0.0
        %1683 = vadd.xlane.f32.xlu0 %v1682
        %v1684 = vpop.xlane.xlu0 %1683
        %v1685 = vsel %vm808, %v1639, 0.0
        %1686 = vadd.xlane.f32.xlu0 %v1685
        %v1687 = vpop.xlane.xlu0 %1686
        %v1688 = vld [vmem:[%s4] sm:$0x1]
        %v1690 = vperm.slane %v1688, 0
        %1691 = vset.pattern.permute.xlu0 0
        %1692 = vperm.xlu0 %1691, %v1690
        %v1693 = vpop.permute.xlu0 %1692
        %v1695 = vadd.f32 %v1642, %v1693
        %v1696 = vadd.f32 %v1645, %v1693
        %v1697 = vadd.f32 %v1648, %v1693
        %v1698 = vadd.f32 %v1651, %v1693
        %v1699 = vadd.f32 %v1654, %v1693
        %v1700 = vadd.f32 %v1657, %v1693
        %v1701 = vadd.f32 %v1660, %v1693
        %v1702 = vadd.f32 %v1663, %v1693
        %v1703 = vadd.f32 %v1666, %v1693
        %v1704 = vadd.f32 %v1669, %v1693
        %v1705 = vadd.f32 %v1672, %v1693
        %v1706 = vadd.f32 %v1675, %v1693
        %v1707 = vadd.f32 %v1678, %v1693
        %v1708 = vadd.f32 %v1681, %v1693
        %v1709 = vadd.f32 %v1684, %v1693
        %v1710 = vadd.f32 %v1687, %v1693
        %v1711 = vtanh.pop %v1695
        %v1712 = vtanh.pop %v1696
        %v1713 = vtanh.pop %v1697
        %v1714 = vtanh.pop %v1698
        %v1715 = vtanh.pop %v1699
        %v1716 = vtanh.pop %v1700
        %v1717 = vtanh.pop %v1701
        %v1718 = vtanh.pop %v1702
        %v1719 = vtanh.pop %v1703
        %v1720 = vtanh.pop %v1704
        %v1721 = vtanh.pop %v1705
        %v1722 = vtanh.pop %v1706
        %v1723 = vtanh.pop %v1707
        %v1724 = vtanh.pop %v1708
        %v1725 = vtanh.pop %v1709
        %v1726 = vtanh.pop %v1710
        %v1727 = vmul.f32 %v1711, 256.0
        %v1728 = vmul.f32 %v1712, 256.0
        %v1729 = vmul.f32 %v1713, 256.0
        %v1730 = vmul.f32 %v1714, 256.0
        %v1731 = vmul.f32 %v1715, 256.0
        %v1732 = vmul.f32 %v1716, 256.0
        %v1733 = vmul.f32 %v1717, 256.0
        %v1734 = vmul.f32 %v1718, 256.0
        %v1735 = vmul.f32 %v1719, 256.0
        %v1736 = vmul.f32 %v1720, 256.0
        %v1737 = vmul.f32 %v1721, 256.0
        %v1738 = vmul.f32 %v1722, 256.0
        %v1739 = vmul.f32 %v1723, 256.0
        %v1740 = vmul.f32 %v1724, 256.0
        %v1741 = vmul.f32 %v1725, 256.0
        %v1742 = vmul.f32 %v1726, 256.0
        %v1759 = vperm.slane %v1727, %v963
        %v1760 = vperm.slane %v1728, %v965
        %v1761 = vsel %vm967, %v1760, %v1759
        %v1762 = vperm.slane %v1729, %v963
        %v1763 = vperm.slane %v1730, %v965
        %v1764 = vsel %vm967, %v1763, %v1762
        %v1765 = vperm.slane %v1731, %v963
        %v1766 = vperm.slane %v1732, %v965
        %v1767 = vsel %vm967, %v1766, %v1765
        %v1768 = vperm.slane %v1733, %v963
        %v1769 = vperm.slane %v1734, %v965
        %v1770 = vsel %vm967, %v1769, %v1768
        %v1771 = vperm.slane %v1735, %v963
        %v1772 = vperm.slane %v1736, %v965
        %v1773 = vsel %vm967, %v1772, %v1771
        %v1774 = vperm.slane %v1737, %v963
        %v1775 = vperm.slane %v1738, %v965
        %v1776 = vsel %vm967, %v1775, %v1774
        %v1777 = vperm.slane %v1739, %v963
        %v1778 = vperm.slane %v1740, %v965
        %v1779 = vsel %vm967, %v1778, %v1777
        %v1780 = vperm.slane %v1741, %v963
        %v1781 = vperm.slane %v1742, %v965
        %v1782 = vsel %vm967, %v1781, %v1780
        %v1783 = vsel %vm990, %v1764, %v1761
        %v1784 = vsel %vm992, %v1767, %v1783
        %v1785 = vsel %vm994, %v1770, %v1784
        %v1786 = vsel %vm996, %v1773, %v1785
        %v1787 = vsel %vm998, %v1776, %v1786
        %v1788 = vsel %vm1000, %v1779, %v1787
        %v1789 = vsel %vm1002, %v1782, %v1788
        %s1791 = scalar_lea.vmem %s273, 8 [#allocation3]
        %1792 = vst.msk [vmem:[%s1791] sm:$0xff] %vm1005, %v1789
        %v1793 = vld [vmem:[%s3 + $0x1] sm:$0x1]
        %v1794 = vperm.slane %v1793, 0
        %v1795 = vmul.f32 %v1589, %v1794
        %v1796 = vmul.f32 %v1590, %v1794
        %v1797 = vmul.f32 %v1591, %v1794
        %v1798 = vmul.f32 %v1592, %v1794
        %v1799 = vmul.f32 %v1593, %v1794
        %v1800 = vmul.f32 %v1594, %v1794
        %v1801 = vmul.f32 %v1595, %v1794
        %v1802 = vmul.f32 %v1596, %v1794
        %v1803 = vmul.f32 %v1597, %v1794
        %v1804 = vmul.f32 %v1598, %v1794
        %v1805 = vmul.f32 %v1599, %v1794
        %v1806 = vmul.f32 %v1600, %v1794
        %v1807 = vmul.f32 %v1601, %v1794
        %v1808 = vmul.f32 %v1602, %v1794
        %v1809 = vmul.f32 %v1603, %v1794
        %v1810 = vmul.f32 %v1604, %v1794
        %v1811 = vsel %vm808, %v1795, 0.0
        %1812 = vadd.xlane.f32.xlu0 %v1811
        %v1813 = vpop.xlane.xlu0 %1812
        %v1814 = vsel %vm808, %v1796, 0.0
        %1815 = vadd.xlane.f32.xlu0 %v1814
        %v1816 = vpop.xlane.xlu0 %1815
        %v1817 = vsel %vm808, %v1797, 0.0
        %1818 = vadd.xlane.f32.xlu0 %v1817
        %v1819 = vpop.xlane.xlu0 %1818
        %v1820 = vsel %vm808, %v1798, 0.0
        %1821 = vadd.xlane.f32.xlu0 %v1820
        %v1822 = vpop.xlane.xlu0 %1821
        %v1823 = vsel %vm808, %v1799, 0.0
        %1824 = vadd.xlane.f32.xlu0 %v1823
        %v1825 = vpop.xlane.xlu0 %1824
        %v1826 = vsel %vm808, %v1800, 0.0
        %1827 = vadd.xlane.f32.xlu0 %v1826
        %v1828 = vpop.xlane.xlu0 %1827
        %v1829 = vsel %vm808, %v1801, 0.0
        %1830 = vadd.xlane.f32.xlu0 %v1829
        %v1831 = vpop.xlane.xlu0 %1830
        %v1832 = vsel %vm808, %v1802, 0.0
        %1833 = vadd.xlane.f32.xlu0 %v1832
        %v1834 = vpop.xlane.xlu0 %1833
        %v1835 = vsel %vm808, %v1803, 0.0
        %1836 = vadd.xlane.f32.xlu0 %v1835
        %v1837 = vpop.xlane.xlu0 %1836
        %v1838 = vsel %vm808, %v1804, 0.0
        %1839 = vadd.xlane.f32.xlu0 %v1838
        %v1840 = vpop.xlane.xlu0 %1839
        %v1841 = vsel %vm808, %v1805, 0.0
        %1842 = vadd.xlane.f32.xlu0 %v1841
        %v1843 = vpop.xlane.xlu0 %1842
        %v1844 = vsel %vm808, %v1806, 0.0
        %1845 = vadd.xlane.f32.xlu0 %v1844
        %v1846 = vpop.xlane.xlu0 %1845
        %v1847 = vsel %vm808, %v1807, 0.0
        %1848 = vadd.xlane.f32.xlu0 %v1847
        %v1849 = vpop.xlane.xlu0 %1848
        %v1850 = vsel %vm808, %v1808, 0.0
        %1851 = vadd.xlane.f32.xlu0 %v1850
        %v1852 = vpop.xlane.xlu0 %1851
        %v1853 = vsel %vm808, %v1809, 0.0
        %1854 = vadd.xlane.f32.xlu0 %v1853
        %v1855 = vpop.xlane.xlu0 %1854
        %v1856 = vsel %vm808, %v1810, 0.0
        %1857 = vadd.xlane.f32.xlu0 %v1856
        %v1858 = vpop.xlane.xlu0 %1857
        %v1859 = vld [vmem:[%s1073] sm:$0x1]
        %v1861 = vperm.slane %v1859, 0
        %1862 = vset.pattern.permute.xlu0 0
        %1863 = vperm.xlu0 %1862, %v1861
        %v1864 = vpop.permute.xlu0 %1863
        %v1866 = vadd.f32 %v1813, %v1864
        %v1867 = vadd.f32 %v1816, %v1864
        %v1868 = vadd.f32 %v1819, %v1864
        %v1869 = vadd.f32 %v1822, %v1864
        %v1870 = vadd.f32 %v1825, %v1864
        %v1871 = vadd.f32 %v1828, %v1864
        %v1872 = vadd.f32 %v1831, %v1864
        %v1873 = vadd.f32 %v1834, %v1864
        %v1874 = vadd.f32 %v1837, %v1864
        %v1875 = vadd.f32 %v1840, %v1864
        %v1876 = vadd.f32 %v1843, %v1864
        %v1877 = vadd.f32 %v1846, %v1864
        %v1878 = vadd.f32 %v1849, %v1864
        %v1879 = vadd.f32 %v1852, %v1864
        %v1880 = vadd.f32 %v1855, %v1864
        %v1881 = vadd.f32 %v1858, %v1864
        %v1882 = vtanh.pop %v1866
        %v1883 = vtanh.pop %v1867
        %v1884 = vtanh.pop %v1868
        %v1885 = vtanh.pop %v1869
        %v1886 = vtanh.pop %v1870
        %v1887 = vtanh.pop %v1871
        %v1888 = vtanh.pop %v1872
        %v1889 = vtanh.pop %v1873
        %v1890 = vtanh.pop %v1874
        %v1891 = vtanh.pop %v1875
        %v1892 = vtanh.pop %v1876
        %v1893 = vtanh.pop %v1877
        %v1894 = vtanh.pop %v1878
        %v1895 = vtanh.pop %v1879
        %v1896 = vtanh.pop %v1880
        %v1897 = vtanh.pop %v1881
        %v1898 = vmul.f32 %v1882, 256.0
        %v1899 = vmul.f32 %v1883, 256.0
        %v1900 = vmul.f32 %v1884, 256.0
        %v1901 = vmul.f32 %v1885, 256.0
        %v1902 = vmul.f32 %v1886, 256.0
        %v1903 = vmul.f32 %v1887, 256.0
        %v1904 = vmul.f32 %v1888, 256.0
        %v1905 = vmul.f32 %v1889, 256.0
        %v1906 = vmul.f32 %v1890, 256.0
        %v1907 = vmul.f32 %v1891, 256.0
        %v1908 = vmul.f32 %v1892, 256.0
        %v1909 = vmul.f32 %v1893, 256.0
        %v1910 = vmul.f32 %v1894, 256.0
        %v1911 = vmul.f32 %v1895, 256.0
        %v1912 = vmul.f32 %v1896, 256.0
        %v1913 = vmul.f32 %v1897, 256.0
        %v1930 = vperm.slane %v1898, %v963
        %v1931 = vperm.slane %v1899, %v965
        %v1932 = vsel %vm967, %v1931, %v1930
        %v1933 = vperm.slane %v1900, %v963
        %v1934 = vperm.slane %v1901, %v965
        %v1935 = vsel %vm967, %v1934, %v1933
        %v1936 = vperm.slane %v1902, %v963
        %v1937 = vperm.slane %v1903, %v965
        %v1938 = vsel %vm967, %v1937, %v1936
        %v1939 = vperm.slane %v1904, %v963
        %v1940 = vperm.slane %v1905, %v965
        %v1941 = vsel %vm967, %v1940, %v1939
        %v1942 = vperm.slane %v1906, %v963
        %v1943 = vperm.slane %v1907, %v965
        %v1944 = vsel %vm967, %v1943, %v1942
        %v1945 = vperm.slane %v1908, %v963
        %v1946 = vperm.slane %v1909, %v965
        %v1947 = vsel %vm967, %v1946, %v1945
        %v1948 = vperm.slane %v1910, %v963
        %v1949 = vperm.slane %v1911, %v965
        %v1950 = vsel %vm967, %v1949, %v1948
        %v1951 = vperm.slane %v1912, %v963
        %v1952 = vperm.slane %v1913, %v965
        %v1953 = vsel %vm967, %v1952, %v1951
        %v1954 = vsel %vm990, %v1935, %v1932
        %v1955 = vsel %vm992, %v1938, %v1954
        %v1956 = vsel %vm994, %v1941, %v1955
        %v1957 = vsel %vm996, %v1944, %v1956
        %v1958 = vsel %vm998, %v1947, %v1957
        %v1959 = vsel %vm1000, %v1950, %v1958
        %v1960 = vsel %vm1002, %v1953, %v1959
        %s1962 = scalar_lea.vmem %s273, 40 [#allocation3]
        %1963 = vst.msk [vmem:[%s1962] sm:$0xff] %vm1005, %v1960
        %s1964 = scalar_lea.vmem %s1, 32
        %v1965 = vld [vmem:[%s1964] sm:$0xf]
        %s1966 = scalar_lea.vmem %s1, 36
        %v1967 = vld [vmem:[%s1966] sm:$0xf]
        %v1969 = vsel %vm416, %v1967, 0
        %1971 = vmatpush.msra.mxu0 0.0
        %1972 = vmatpush.msra.mxu0 0.0
        %1973 = vmatpush.msra.mxu0 0.0
        %1974 = vmatpush.msra.mxu0 0.0
        %1975 = vmatpush.msra.mxu0 0.0
        %1976 = vmatpush.msra.mxu0 0.0
        %1977 = vmatpush.msra.mxu0 0.0
        %1978 = vmatpush.msra.mxu0 0.0
        %1979 = vmatpush.msra.mxu0 0.0
        %1980 = vmatpush.msra.mxu0 0.0
        %1981 = vmatpush.msra.mxu0 0.0
        %1982 = vmatpush.msra.mxu0 0.0
        %1983 = vmatpush.msra.mxu0 0.0
        %1984 = vmatpush.msra.mxu0 0.0
        %1985 = vmatpush.msra.mxu0 0.0
        %1986 = vmatpush.msra.mxu0 %v1969
        %1987 = vmatmul.f32.gmra.mxu0 %v388
        %v1988 = vpop.f32.mrf.mxu0
        %v1989 = vadd.f32 0.0, %v1988
        %1990 = vmatmul.f32.gmra.mxu0 %v390
        %v1991 = vpop.f32.mrf.mxu0
        %v1992 = vadd.f32 0.0, %v1991
        %1993 = vmatmul.f32.gmra.mxu0 %v392
        %v1994 = vpop.f32.mrf.mxu0
        %v1995 = vadd.f32 0.0, %v1994
        %1996 = vmatmul.f32.gmra.mxu0 %v394
        %v1997 = vpop.f32.mrf.mxu0
        %v1998 = vadd.f32 0.0, %v1997
        %1999 = vmatmul.f32.gmra.mxu0 %v396
        %v2000 = vpop.f32.mrf.mxu0
        %v2001 = vadd.f32 0.0, %v2000
        %2002 = vmatmul.f32.gmra.mxu0 %v398
        %v2003 = vpop.f32.mrf.mxu0
        %v2004 = vadd.f32 0.0, %v2003
        %2005 = vmatmul.f32.gmra.mxu0 %v400
        %v2006 = vpop.f32.mrf.mxu0
        %v2007 = vadd.f32 0.0, %v2006
        %2008 = vmatmul.f32.gmra.mxu0 %v402
        %v2009 = vpop.f32.mrf.mxu0
        %v2010 = vadd.f32 0.0, %v2009
        %2011 = vmatmul.f32.gmra.mxu0 %v404
        %v2012 = vpop.f32.mrf.mxu0
        %v2013 = vadd.f32 0.0, %v2012
        %2014 = vmatmul.f32.gmra.mxu0 %v406
        %v2015 = vpop.f32.mrf.mxu0
        %v2016 = vadd.f32 0.0, %v2015
        %2017 = vmatmul.f32.gmra.mxu0 %v408
        %v2018 = vpop.f32.mrf.mxu0
        %v2019 = vadd.f32 0.0, %v2018
        %2020 = vmatmul.f32.gmra.mxu0 %v410
        %v2021 = vpop.f32.mrf.mxu0
        %v2022 = vadd.f32 0.0, %v2021
        %2023 = vmatmul.f32.gmra.mxu0 %v412
        %v2024 = vpop.f32.mrf.mxu0
        %v2025 = vadd.f32 0.0, %v2024
        %2026 = vmatmul.f32.gmra.mxu0 %v414
        %v2027 = vpop.f32.mrf.mxu0
        %v2028 = vadd.f32 0.0, %v2027
        %2029 = vmatmul.f32.gmra.mxu0 %v685
        %v2030 = vpop.f32.mrf.mxu0
        %v2031 = vadd.f32 0.0, %v2030
        %2032 = vmatmul.f32.gmra.mxu0 %v687
        %v2033 = vpop.f32.mrf.mxu0
        %v2034 = vadd.f32 0.0, %v2033
        %2035 = vdwg.mxu0
        %v2037 = vsel %vm416, %v1965, 0
        %2039 = vmatpush.msra.mxu0 0.0
        %2040 = vmatpush.msra.mxu0 0.0
        %2041 = vmatpush.msra.mxu0 0.0
        %2042 = vmatpush.msra.mxu0 0.0
        %2043 = vmatpush.msra.mxu0 0.0
        %2044 = vmatpush.msra.mxu0 0.0
        %2045 = vmatpush.msra.mxu0 0.0
        %2046 = vmatpush.msra.mxu0 0.0
        %2047 = vmatpush.msra.mxu0 0.0
        %2048 = vmatpush.msra.mxu0 0.0
        %2049 = vmatpush.msra.mxu0 0.0
        %2050 = vmatpush.msra.mxu0 0.0
        %2051 = vmatpush.msra.mxu0 0.0
        %2052 = vmatpush.msra.mxu0 0.0
        %2053 = vmatpush.msra.mxu0 0.0
        %2054 = vmatpush.msra.mxu0 %v2037
        %2055 = vmatmul.f32.gmra.mxu0 %v489
        %v2056 = vpop.f32.mrf.mxu0
        %v2057 = vadd.f32 %v1989, %v2056
        %2058 = vmatmul.f32.gmra.mxu0 %v491
        %v2059 = vpop.f32.mrf.mxu0
        %v2060 = vadd.f32 %v1992, %v2059
        %2061 = vmatmul.f32.gmra.mxu0 %v493
        %v2062 = vpop.f32.mrf.mxu0
        %v2063 = vadd.f32 %v1995, %v2062
        %2064 = vmatmul.f32.gmra.mxu0 %v495
        %v2065 = vpop.f32.mrf.mxu0
        %v2066 = vadd.f32 %v1998, %v2065
        %2067 = vmatmul.f32.gmra.mxu0 %v497
        %v2068 = vpop.f32.mrf.mxu0
        %v2069 = vadd.f32 %v2001, %v2068
        %2070 = vmatmul.f32.gmra.mxu0 %v499
        %v2071 = vpop.f32.mrf.mxu0
        %v2072 = vadd.f32 %v2004, %v2071
        %2073 = vmatmul.f32.gmra.mxu0 %v501
        %v2074 = vpop.f32.mrf.mxu0
        %v2075 = vadd.f32 %v2007, %v2074
        %2076 = vmatmul.f32.gmra.mxu0 %v503
        %v2077 = vpop.f32.mrf.mxu0
        %v2078 = vadd.f32 %v2010, %v2077
        %2079 = vmatmul.f32.gmra.mxu0 %v505
        %v2080 = vpop.f32.mrf.mxu0
        %v2081 = vadd.f32 %v2013, %v2080
        %2082 = vmatmul.f32.gmra.mxu0 %v507
        %v2083 = vpop.f32.mrf.mxu0
        %v2084 = vadd.f32 %v2016, %v2083
        %2085 = vmatmul.f32.gmra.mxu0 %v509
        %v2086 = vpop.f32.mrf.mxu0
        %v2087 = vadd.f32 %v2019, %v2086
        %2088 = vmatmul.f32.gmra.mxu0 %v511
        %v2089 = vpop.f32.mrf.mxu0
        %v2090 = vadd.f32 %v2022, %v2089
        %2091 = vmatmul.f32.gmra.mxu0 %v513
        %v2092 = vpop.f32.mrf.mxu0
        %v2093 = vadd.f32 %v2025, %v2092
        %2094 = vmatmul.f32.gmra.mxu0 %v515
        %v2095 = vpop.f32.mrf.mxu0
        %v2096 = vadd.f32 %v2028, %v2095
        %2097 = vmatmul.f32.gmra.mxu0 %v588
        %v2098 = vpop.f32.mrf.mxu0
        %v2099 = vadd.f32 %v2031, %v2098
        %2100 = vmatmul.f32.gmra.mxu0 %v591
        %v2101 = vpop.f32.mrf.mxu0
        %v2102 = vadd.f32 %v2034, %v2101
        %2103 = vdwg.mxu0
        %s2104 = scalar_lea.vmem %s1, 40
        %v2105 = vld [vmem:[%s2104] sm:$0xf]
        %v2107 = vsel %vm383, %v311, 0
        %v2110 = vsel %vm383, %v312, 0
        %v2113 = vsel %vm416, %v2105, 0
        %2115 = vmatpush.msra.mxu0 0.0
        %2116 = vmatpush.msra.mxu0 0.0
        %2117 = vmatpush.msra.mxu0 0.0
        %2118 = vmatpush.msra.mxu0 0.0
        %2119 = vmatpush.msra.mxu0 0.0
        %2120 = vmatpush.msra.mxu0 0.0
        %2121 = vmatpush.msra.mxu0 0.0
        %2122 = vmatpush.msra.mxu0 0.0
        %2123 = vmatpush.msra.mxu0 0.0
        %2124 = vmatpush.msra.mxu0 0.0
        %2125 = vmatpush.msra.mxu0 0.0
        %2126 = vmatpush.msra.mxu0 0.0
        %2127 = vmatpush.msra.mxu0 0.0
        %2128 = vmatpush.msra.mxu0 0.0
        %2129 = vmatpush.msra.mxu0 0.0
        %2130 = vmatpush.msra.mxu0 %v2113
        %2131 = vmatmul.f32.gmra.mxu0 %v493
        %v2132 = vpop.f32.mrf.mxu0
        %v2133 = vadd.f32 0.0, %v2132
        %2134 = vmatmul.f32.gmra.mxu0 %v495
        %v2135 = vpop.f32.mrf.mxu0
        %v2136 = vadd.f32 0.0, %v2135
        %2137 = vmatmul.f32.gmra.mxu0 %v497
        %v2138 = vpop.f32.mrf.mxu0
        %v2139 = vadd.f32 0.0, %v2138
        %2140 = vmatmul.f32.gmra.mxu0 %v499
        %v2141 = vpop.f32.mrf.mxu0
        %v2142 = vadd.f32 0.0, %v2141
        %2143 = vmatmul.f32.gmra.mxu0 %v501
        %v2144 = vpop.f32.mrf.mxu0
        %v2145 = vadd.f32 0.0, %v2144
        %2146 = vmatmul.f32.gmra.mxu0 %v503
        %v2147 = vpop.f32.mrf.mxu0
        %v2148 = vadd.f32 0.0, %v2147
        %2149 = vmatmul.f32.gmra.mxu0 %v505
        %v2150 = vpop.f32.mrf.mxu0
        %v2151 = vadd.f32 0.0, %v2150
        %2152 = vmatmul.f32.gmra.mxu0 %v507
        %v2153 = vpop.f32.mrf.mxu0
        %v2154 = vadd.f32 0.0, %v2153
        %2155 = vmatmul.f32.gmra.mxu0 %v509
        %v2156 = vpop.f32.mrf.mxu0
        %v2157 = vadd.f32 0.0, %v2156
        %2158 = vmatmul.f32.gmra.mxu0 %v511
        %v2159 = vpop.f32.mrf.mxu0
        %v2160 = vadd.f32 0.0, %v2159
        %2161 = vmatmul.f32.gmra.mxu0 %v513
        %v2162 = vpop.f32.mrf.mxu0
        %v2163 = vadd.f32 0.0, %v2162
        %2164 = vmatmul.f32.gmra.mxu0 %v515
        %v2165 = vpop.f32.mrf.mxu0
        %v2166 = vadd.f32 0.0, %v2165
        %2167 = vmatmul.f32.gmra.mxu0 %v588
        %v2168 = vpop.f32.mrf.mxu0
        %v2169 = vadd.f32 0.0, %v2168
        %2170 = vmatmul.f32.gmra.mxu0 %v591
        %v2171 = vpop.f32.mrf.mxu0
        %v2172 = vadd.f32 0.0, %v2171
        %2173 = vmatmul.f32.gmra.mxu0 %v2107
        %v2174 = vpop.f32.mrf.mxu0
        %v2175 = vadd.f32 0.0, %v2174
        %2176 = vmatmul.f32.gmra.mxu0 %v2110
        %v2177 = vpop.f32.mrf.mxu0
        %v2178 = vadd.f32 0.0, %v2177
        %2179 = vdwg.mxu0
        %v2180 = vadd.f32 %v2057, %v2133
        %v2181 = vadd.f32 %v2060, %v2136
        %v2182 = vadd.f32 %v2063, %v2139
        %v2183 = vadd.f32 %v2066, %v2142
        %v2184 = vadd.f32 %v2069, %v2145
        %v2185 = vadd.f32 %v2072, %v2148
        %v2186 = vadd.f32 %v2075, %v2151
        %v2187 = vadd.f32 %v2078, %v2154
        %v2188 = vadd.f32 %v2081, %v2157
        %v2189 = vadd.f32 %v2084, %v2160
        %v2190 = vadd.f32 %v2087, %v2163
        %v2191 = vadd.f32 %v2090, %v2166
        %v2192 = vadd.f32 %v2093, %v2169
        %v2193 = vadd.f32 %v2096, %v2172
        %v2194 = vadd.f32 %v2099, %v2175
        %v2195 = vadd.f32 %v2102, %v2178
        %s2196 = scalar_lea.vmem %s1, 44
        %v2197 = vld [vmem:[%s2196] sm:$0xf]
        %v2199 = vrot.slane %v311, 1
        %v2200 = vrot.slane %v312, 1
        %v2201 = vsel %vm342, %v2199, %v2200
        %v2202 = vrot.slane %v313, 1
        %v2203 = vsel %vm342, %v2200, %v2202
        %v2204 = vsel %vm383, %v2201, 0
        %v2206 = vsel %vm383, %v2203, 0
        %v2209 = vsel %vm416, %v2197, 0
        %2211 = vmatpush.msra.mxu0 0.0
        %2212 = vmatpush.msra.mxu0 0.0
        %2213 = vmatpush.msra.mxu0 0.0
        %2214 = vmatpush.msra.mxu0 0.0
        %2215 = vmatpush.msra.mxu0 0.0
        %2216 = vmatpush.msra.mxu0 0.0
        %2217 = vmatpush.msra.mxu0 0.0
        %2218 = vmatpush.msra.mxu0 0.0
        %2219 = vmatpush.msra.mxu0 0.0
        %2220 = vmatpush.msra.mxu0 0.0
        %2221 = vmatpush.msra.mxu0 0.0
        %2222 = vmatpush.msra.mxu0 0.0
        %2223 = vmatpush.msra.mxu0 0.0
        %2224 = vmatpush.msra.mxu0 0.0
        %2225 = vmatpush.msra.mxu0 0.0
        %2226 = vmatpush.msra.mxu0 %v2209
        %2227 = vmatmul.f32.gmra.mxu0 %v392
        %v2228 = vpop.f32.mrf.mxu0
        %v2229 = vadd.f32 0.0, %v2228
        %2230 = vmatmul.f32.gmra.mxu0 %v394
        %v2231 = vpop.f32.mrf.mxu0
        %v2232 = vadd.f32 0.0, %v2231
        %2233 = vmatmul.f32.gmra.mxu0 %v396
        %v2234 = vpop.f32.mrf.mxu0
        %v2235 = vadd.f32 0.0, %v2234
        %2236 = vmatmul.f32.gmra.mxu0 %v398
        %v2237 = vpop.f32.mrf.mxu0
        %v2238 = vadd.f32 0.0, %v2237
        %2239 = vmatmul.f32.gmra.mxu0 %v400
        %v2240 = vpop.f32.mrf.mxu0
        %v2241 = vadd.f32 0.0, %v2240
        %2242 = vmatmul.f32.gmra.mxu0 %v402
        %v2243 = vpop.f32.mrf.mxu0
        %v2244 = vadd.f32 0.0, %v2243
        %2245 = vmatmul.f32.gmra.mxu0 %v404
        %v2246 = vpop.f32.mrf.mxu0
        %v2247 = vadd.f32 0.0, %v2246
        %2248 = vmatmul.f32.gmra.mxu0 %v406
        %v2249 = vpop.f32.mrf.mxu0
        %v2250 = vadd.f32 0.0, %v2249
        %2251 = vmatmul.f32.gmra.mxu0 %v408
        %v2252 = vpop.f32.mrf.mxu0
        %v2253 = vadd.f32 0.0, %v2252
        %2254 = vmatmul.f32.gmra.mxu0 %v410
        %v2255 = vpop.f32.mrf.mxu0
        %v2256 = vadd.f32 0.0, %v2255
        %2257 = vmatmul.f32.gmra.mxu0 %v412
        %v2258 = vpop.f32.mrf.mxu0
        %v2259 = vadd.f32 0.0, %v2258
        %2260 = vmatmul.f32.gmra.mxu0 %v414
        %v2261 = vpop.f32.mrf.mxu0
        %v2262 = vadd.f32 0.0, %v2261
        %2263 = vmatmul.f32.gmra.mxu0 %v685
        %v2264 = vpop.f32.mrf.mxu0
        %v2265 = vadd.f32 0.0, %v2264
        %2266 = vmatmul.f32.gmra.mxu0 %v687
        %v2267 = vpop.f32.mrf.mxu0
        %v2268 = vadd.f32 0.0, %v2267
        %2269 = vmatmul.f32.gmra.mxu0 %v2204
        %v2270 = vpop.f32.mrf.mxu0
        %v2271 = vadd.f32 0.0, %v2270
        %2272 = vmatmul.f32.gmra.mxu0 %v2206
        %v2273 = vpop.f32.mrf.mxu0
        %v2274 = vadd.f32 0.0, %v2273
        %2275 = vdwg.mxu0
        %v2276 = vadd.f32 %v2180, %v2229
        %v2277 = vadd.f32 %v2181, %v2232
        %v2278 = vadd.f32 %v2182, %v2235
        %v2279 = vadd.f32 %v2183, %v2238
        %v2280 = vadd.f32 %v2184, %v2241
        %v2281 = vadd.f32 %v2185, %v2244
        %v2282 = vadd.f32 %v2186, %v2247
        %v2283 = vadd.f32 %v2187, %v2250
        %v2284 = vadd.f32 %v2188, %v2253
        %v2285 = vadd.f32 %v2189, %v2256
        %v2286 = vadd.f32 %v2190, %v2259
        %v2287 = vadd.f32 %v2191, %v2262
        %v2288 = vadd.f32 %v2192, %v2265
        %v2289 = vadd.f32 %v2193, %v2268
        %v2290 = vadd.f32 %v2194, %v2271
        %v2291 = vadd.f32 %v2195, %v2274
        %v2292 = vadd.f32 %v2276, %v774
        %v2293 = vadd.f32 %v2277, %v774
        %v2294 = vadd.f32 %v2278, %v774
        %v2295 = vadd.f32 %v2279, %v774
        %v2296 = vadd.f32 %v2280, %v774
        %v2297 = vadd.f32 %v2281, %v774
        %v2298 = vadd.f32 %v2282, %v774
        %v2299 = vadd.f32 %v2283, %v774
        %v2300 = vadd.f32 %v2284, %v774
        %v2301 = vadd.f32 %v2285, %v774
        %v2302 = vadd.f32 %v2286, %v774
        %v2303 = vadd.f32 %v2287, %v774
        %v2304 = vadd.f32 %v2288, %v774
        %v2305 = vadd.f32 %v2289, %v774
        %v2306 = vadd.f32 %v2290, %v774
        %v2307 = vadd.f32 %v2291, %v774
        %v2308 = vmax.f32 %v2292, 0.0
        %v2309 = vmax.f32 %v2293, 0.0
        %v2310 = vmax.f32 %v2294, 0.0
        %v2311 = vmax.f32 %v2295, 0.0
        %v2312 = vmax.f32 %v2296, 0.0
        %v2313 = vmax.f32 %v2297, 0.0
        %v2314 = vmax.f32 %v2298, 0.0
        %v2315 = vmax.f32 %v2299, 0.0
        %v2316 = vmax.f32 %v2300, 0.0
        %v2317 = vmax.f32 %v2301, 0.0
        %v2318 = vmax.f32 %v2302, 0.0
        %v2319 = vmax.f32 %v2303, 0.0
        %v2320 = vmax.f32 %v2304, 0.0
        %v2321 = vmax.f32 %v2305, 0.0
        %v2322 = vmax.f32 %v2306, 0.0
        %v2323 = vmax.f32 %v2307, 0.0
        %s2324 = scalar_lea.vmem %s267, 256 [#allocation2]
        %2325 = vst.msk [vmem:[%s2324] sm:$0xff] %vm808, %v2308
        %2326 = vst.msk [vmem:[%s2324 + $0x8] sm:$0xff] %vm808, %v2309
        %2327 = vst.msk [vmem:[%s2324 + $0x10] sm:$0xff] %vm808, %v2310
        %2328 = vst.msk [vmem:[%s2324 + $0x18] sm:$0xff] %vm808, %v2311
        %2329 = vst.msk [vmem:[%s2324 + $0x20] sm:$0xff] %vm808, %v2312
        %2330 = vst.msk [vmem:[%s2324 + $0x28] sm:$0xff] %vm808, %v2313
        %2331 = vst.msk [vmem:[%s2324 + $0x30] sm:$0xff] %vm808, %v2314
        %2332 = vst.msk [vmem:[%s2324 + $0x38] sm:$0xff] %vm808, %v2315
        %2333 = vst.msk [vmem:[%s2324 + $0x40] sm:$0xff] %vm808, %v2316
        %2334 = vst.msk [vmem:[%s2324 + $0x48] sm:$0xff] %vm808, %v2317
        %2335 = vst.msk [vmem:[%s2324 + $0x50] sm:$0xff] %vm808, %v2318
        %2336 = vst.msk [vmem:[%s2324 + $0x58] sm:$0xff] %vm808, %v2319
        %2337 = vst.msk [vmem:[%s2324 + $0x60] sm:$0xff] %vm808, %v2320
        %2338 = vst.msk [vmem:[%s2324 + $0x68] sm:$0xff] %vm808, %v2321
        %2339 = vst.msk [vmem:[%s2324 + $0x70] sm:$0xff] %vm808, %v2322
        %2340 = vst.msk [vmem:[%s2324 + $0x78] sm:$0xff] %vm808, %v2323
        %v2341 = vld [vmem:[%s3] sm:$0x1]
        %v2342 = vperm.slane %v2341, 0
        %v2343 = vmul.f32 %v2308, %v2342
        %v2344 = vmul.f32 %v2309, %v2342
        %v2345 = vmul.f32 %v2310, %v2342
        %v2346 = vmul.f32 %v2311, %v2342
        %v2347 = vmul.f32 %v2312, %v2342
        %v2348 = vmul.f32 %v2313, %v2342
        %v2349 = vmul.f32 %v2314, %v2342
        %v2350 = vmul.f32 %v2315, %v2342
        %v2351 = vmul.f32 %v2316, %v2342
        %v2352 = vmul.f32 %v2317, %v2342
        %v2353 = vmul.f32 %v2318, %v2342
        %v2354 = vmul.f32 %v2319, %v2342
        %v2355 = vmul.f32 %v2320, %v2342
        %v2356 = vmul.f32 %v2321, %v2342
        %v2357 = vmul.f32 %v2322, %v2342
        %v2358 = vmul.f32 %v2323, %v2342
        %v2359 = vsel %vm808, %v2343, 0.0
        %2360 = vadd.xlane.f32.xlu0 %v2359
        %v2361 = vpop.xlane.xlu0 %2360
        %v2362 = vsel %vm808, %v2344, 0.0
        %2363 = vadd.xlane.f32.xlu0 %v2362
        %v2364 = vpop.xlane.xlu0 %2363
        %v2365 = vsel %vm808, %v2345, 0.0
        %2366 = vadd.xlane.f32.xlu0 %v2365
        %v2367 = vpop.xlane.xlu0 %2366
        %v2368 = vsel %vm808, %v2346, 0.0
        %2369 = vadd.xlane.f32.xlu0 %v2368
        %v2370 = vpop.xlane.xlu0 %2369
        %v2371 = vsel %vm808, %v2347, 0.0
        %2372 = vadd.xlane.f32.xlu0 %v2371
        %v2373 = vpop.xlane.xlu0 %2372
        %v2374 = vsel %vm808, %v2348, 0.0
        %2375 = vadd.xlane.f32.xlu0 %v2374
        %v2376 = vpop.xlane.xlu0 %2375
        %v2377 = vsel %vm808, %v2349, 0.0
        %2378 = vadd.xlane.f32.xlu0 %v2377
        %v2379 = vpop.xlane.xlu0 %2378
        %v2380 = vsel %vm808, %v2350, 0.0
        %2381 = vadd.xlane.f32.xlu0 %v2380
        %v2382 = vpop.xlane.xlu0 %2381
        %v2383 = vsel %vm808, %v2351, 0.0
        %2384 = vadd.xlane.f32.xlu0 %v2383
        %v2385 = vpop.xlane.xlu0 %2384
        %v2386 = vsel %vm808, %v2352, 0.0
        %2387 = vadd.xlane.f32.xlu0 %v2386
        %v2388 = vpop.xlane.xlu0 %2387
        %v2389 = vsel %vm808, %v2353, 0.0
        %2390 = vadd.xlane.f32.xlu0 %v2389
        %v2391 = vpop.xlane.xlu0 %2390
        %v2392 = vsel %vm808, %v2354, 0.0
        %2393 = vadd.xlane.f32.xlu0 %v2392
        %v2394 = vpop.xlane.xlu0 %2393
        %v2395 = vsel %vm808, %v2355, 0.0
        %2396 = vadd.xlane.f32.xlu0 %v2395
        %v2397 = vpop.xlane.xlu0 %2396
        %v2398 = vsel %vm808, %v2356, 0.0
        %2399 = vadd.xlane.f32.xlu0 %v2398
        %v2400 = vpop.xlane.xlu0 %2399
        %v2401 = vsel %vm808, %v2357, 0.0
        %2402 = vadd.xlane.f32.xlu0 %v2401
        %v2403 = vpop.xlane.xlu0 %2402
        %v2404 = vsel %vm808, %v2358, 0.0
        %2405 = vadd.xlane.f32.xlu0 %v2404
        %v2406 = vpop.xlane.xlu0 %2405
        %v2407 = vld [vmem:[%s4] sm:$0x1]
        %v2409 = vperm.slane %v2407, 0
        %2410 = vset.pattern.permute.xlu0 0
        %2411 = vperm.xlu0 %2410, %v2409
        %v2412 = vpop.permute.xlu0 %2411
        %v2414 = vadd.f32 %v2361, %v2412
        %v2415 = vadd.f32 %v2364, %v2412
        %v2416 = vadd.f32 %v2367, %v2412
        %v2417 = vadd.f32 %v2370, %v2412
        %v2418 = vadd.f32 %v2373, %v2412
        %v2419 = vadd.f32 %v2376, %v2412
        %v2420 = vadd.f32 %v2379, %v2412
        %v2421 = vadd.f32 %v2382, %v2412
        %v2422 = vadd.f32 %v2385, %v2412
        %v2423 = vadd.f32 %v2388, %v2412
        %v2424 = vadd.f32 %v2391, %v2412
        %v2425 = vadd.f32 %v2394, %v2412
        %v2426 = vadd.f32 %v2397, %v2412
        %v2427 = vadd.f32 %v2400, %v2412
        %v2428 = vadd.f32 %v2403, %v2412
        %v2429 = vadd.f32 %v2406, %v2412
        %v2430 = vtanh.pop %v2414
        %v2431 = vtanh.pop %v2415
        %v2432 = vtanh.pop %v2416
        %v2433 = vtanh.pop %v2417
        %v2434 = vtanh.pop %v2418
        %v2435 = vtanh.pop %v2419
        %v2436 = vtanh.pop %v2420
        %v2437 = vtanh.pop %v2421
        %v2438 = vtanh.pop %v2422
        %v2439 = vtanh.pop %v2423
        %v2440 = vtanh.pop %v2424
        %v2441 = vtanh.pop %v2425
        %v2442 = vtanh.pop %v2426
        %v2443 = vtanh.pop %v2427
        %v2444 = vtanh.pop %v2428
        %v2445 = vtanh.pop %v2429
        %v2446 = vmul.f32 %v2430, 256.0
        %v2447 = vmul.f32 %v2431, 256.0
        %v2448 = vmul.f32 %v2432, 256.0
        %v2449 = vmul.f32 %v2433, 256.0
        %v2450 = vmul.f32 %v2434, 256.0
        %v2451 = vmul.f32 %v2435, 256.0
        %v2452 = vmul.f32 %v2436, 256.0
        %v2453 = vmul.f32 %v2437, 256.0
        %v2454 = vmul.f32 %v2438, 256.0
        %v2455 = vmul.f32 %v2439, 256.0
        %v2456 = vmul.f32 %v2440, 256.0
        %v2457 = vmul.f32 %v2441, 256.0
        %v2458 = vmul.f32 %v2442, 256.0
        %v2459 = vmul.f32 %v2443, 256.0
        %v2460 = vmul.f32 %v2444, 256.0
        %v2461 = vmul.f32 %v2445, 256.0
        %v2478 = vperm.slane %v2446, %v963
        %v2479 = vperm.slane %v2447, %v965
        %v2480 = vsel %vm967, %v2479, %v2478
        %v2481 = vperm.slane %v2448, %v963
        %v2482 = vperm.slane %v2449, %v965
        %v2483 = vsel %vm967, %v2482, %v2481
        %v2484 = vperm.slane %v2450, %v963
        %v2485 = vperm.slane %v2451, %v965
        %v2486 = vsel %vm967, %v2485, %v2484
        %v2487 = vperm.slane %v2452, %v963
        %v2488 = vperm.slane %v2453, %v965
        %v2489 = vsel %vm967, %v2488, %v2487
        %v2490 = vperm.slane %v2454, %v963
        %v2491 = vperm.slane %v2455, %v965
        %v2492 = vsel %vm967, %v2491, %v2490
        %v2493 = vperm.slane %v2456, %v963
        %v2494 = vperm.slane %v2457, %v965
        %v2495 = vsel %vm967, %v2494, %v2493
        %v2496 = vperm.slane %v2458, %v963
        %v2497 = vperm.slane %v2459, %v965
        %v2498 = vsel %vm967, %v2497, %v2496
        %v2499 = vperm.slane %v2460, %v963
        %v2500 = vperm.slane %v2461, %v965
        %v2501 = vsel %vm967, %v2500, %v2499
        %v2502 = vsel %vm990, %v2483, %v2480
        %v2503 = vsel %vm992, %v2486, %v2502
        %v2504 = vsel %vm994, %v2489, %v2503
        %v2505 = vsel %vm996, %v2492, %v2504
        %v2506 = vsel %vm998, %v2495, %v2505
        %v2507 = vsel %vm1000, %v2498, %v2506
        %v2508 = vsel %vm1002, %v2501, %v2507
        %s2510 = scalar_lea.vmem %s273, 16 [#allocation3]
        %2511 = vst.msk [vmem:[%s2510] sm:$0xff] %vm1005, %v2508
        %v2512 = vld [vmem:[%s3 + $0x1] sm:$0x1]
        %v2513 = vperm.slane %v2512, 0
        %v2514 = vmul.f32 %v2308, %v2513
        %v2515 = vmul.f32 %v2309, %v2513
        %v2516 = vmul.f32 %v2310, %v2513
        %v2517 = vmul.f32 %v2311, %v2513
        %v2518 = vmul.f32 %v2312, %v2513
        %v2519 = vmul.f32 %v2313, %v2513
        %v2520 = vmul.f32 %v2314, %v2513
        %v2521 = vmul.f32 %v2315, %v2513
        %v2522 = vmul.f32 %v2316, %v2513
        %v2523 = vmul.f32 %v2317, %v2513
        %v2524 = vmul.f32 %v2318, %v2513
        %v2525 = vmul.f32 %v2319, %v2513
        %v2526 = vmul.f32 %v2320, %v2513
        %v2527 = vmul.f32 %v2321, %v2513
        %v2528 = vmul.f32 %v2322, %v2513
        %v2529 = vmul.f32 %v2323, %v2513
        %v2530 = vsel %vm808, %v2514, 0.0
        %2531 = vadd.xlane.f32.xlu0 %v2530
        %v2532 = vpop.xlane.xlu0 %2531
        %v2533 = vsel %vm808, %v2515, 0.0
        %2534 = vadd.xlane.f32.xlu0 %v2533
        %v2535 = vpop.xlane.xlu0 %2534
        %v2536 = vsel %vm808, %v2516, 0.0
        %2537 = vadd.xlane.f32.xlu0 %v2536
        %v2538 = vpop.xlane.xlu0 %2537
        %v2539 = vsel %vm808, %v2517, 0.0
        %2540 = vadd.xlane.f32.xlu0 %v2539
        %v2541 = vpop.xlane.xlu0 %2540
        %v2542 = vsel %vm808, %v2518, 0.0
        %2543 = vadd.xlane.f32.xlu0 %v2542
        %v2544 = vpop.xlane.xlu0 %2543
        %v2545 = vsel %vm808, %v2519, 0.0
        %2546 = vadd.xlane.f32.xlu0 %v2545
        %v2547 = vpop.xlane.xlu0 %2546
        %v2548 = vsel %vm808, %v2520, 0.0
        %2549 = vadd.xlane.f32.xlu0 %v2548
        %v2550 = vpop.xlane.xlu0 %2549
        %v2551 = vsel %vm808, %v2521, 0.0
        %2552 = vadd.xlane.f32.xlu0 %v2551
        %v2553 = vpop.xlane.xlu0 %2552
        %v2554 = vsel %vm808, %v2522, 0.0
        %2555 = vadd.xlane.f32.xlu0 %v2554
        %v2556 = vpop.xlane.xlu0 %2555
        %v2557 = vsel %vm808, %v2523, 0.0
        %2558 = vadd.xlane.f32.xlu0 %v2557
        %v2559 = vpop.xlane.xlu0 %2558
        %v2560 = vsel %vm808, %v2524, 0.0
        %2561 = vadd.xlane.f32.xlu0 %v2560
        %v2562 = vpop.xlane.xlu0 %2561
        %v2563 = vsel %vm808, %v2525, 0.0
        %2564 = vadd.xlane.f32.xlu0 %v2563
        %v2565 = vpop.xlane.xlu0 %2564
        %v2566 = vsel %vm808, %v2526, 0.0
        %2567 = vadd.xlane.f32.xlu0 %v2566
        %v2568 = vpop.xlane.xlu0 %2567
        %v2569 = vsel %vm808, %v2527, 0.0
        %2570 = vadd.xlane.f32.xlu0 %v2569
        %v2571 = vpop.xlane.xlu0 %2570
        %v2572 = vsel %vm808, %v2528, 0.0
        %2573 = vadd.xlane.f32.xlu0 %v2572
        %v2574 = vpop.xlane.xlu0 %2573
        %v2575 = vsel %vm808, %v2529, 0.0
        %2576 = vadd.xlane.f32.xlu0 %v2575
        %v2577 = vpop.xlane.xlu0 %2576
        %v2578 = vld [vmem:[%s1073] sm:$0x1]
        %v2580 = vperm.slane %v2578, 0
        %2581 = vset.pattern.permute.xlu0 0
        %2582 = vperm.xlu0 %2581, %v2580
        %v2583 = vpop.permute.xlu0 %2582
        %v2585 = vadd.f32 %v2532, %v2583
        %v2586 = vadd.f32 %v2535, %v2583
        %v2587 = vadd.f32 %v2538, %v2583
        %v2588 = vadd.f32 %v2541, %v2583
        %v2589 = vadd.f32 %v2544, %v2583
        %v2590 = vadd.f32 %v2547, %v2583
        %v2591 = vadd.f32 %v2550, %v2583
        %v2592 = vadd.f32 %v2553, %v2583
        %v2593 = vadd.f32 %v2556, %v2583
        %v2594 = vadd.f32 %v2559, %v2583
        %v2595 = vadd.f32 %v2562, %v2583
        %v2596 = vadd.f32 %v2565, %v2583
        %v2597 = vadd.f32 %v2568, %v2583
        %v2598 = vadd.f32 %v2571, %v2583
        %v2599 = vadd.f32 %v2574, %v2583
        %v2600 = vadd.f32 %v2577, %v2583
        %v2601 = vtanh.pop %v2585
        %v2602 = vtanh.pop %v2586
        %v2603 = vtanh.pop %v2587
        %v2604 = vtanh.pop %v2588
        %v2605 = vtanh.pop %v2589
        %v2606 = vtanh.pop %v2590
        %v2607 = vtanh.pop %v2591
        %v2608 = vtanh.pop %v2592
        %v2609 = vtanh.pop %v2593
        %v2610 = vtanh.pop %v2594
        %v2611 = vtanh.pop %v2595
        %v2612 = vtanh.pop %v2596
        %v2613 = vtanh.pop %v2597
        %v2614 = vtanh.pop %v2598
        %v2615 = vtanh.pop %v2599
        %v2616 = vtanh.pop %v2600
        %v2617 = vmul.f32 %v2601, 256.0
        %v2618 = vmul.f32 %v2602, 256.0
        %v2619 = vmul.f32 %v2603, 256.0
        %v2620 = vmul.f32 %v2604, 256.0
        %v2621 = vmul.f32 %v2605, 256.0
        %v2622 = vmul.f32 %v2606, 256.0
        %v2623 = vmul.f32 %v2607, 256.0
        %v2624 = vmul.f32 %v2608, 256.0
        %v2625 = vmul.f32 %v2609, 256.0
        %v2626 = vmul.f32 %v2610, 256.0
        %v2627 = vmul.f32 %v2611, 256.0
        %v2628 = vmul.f32 %v2612, 256.0
        %v2629 = vmul.f32 %v2613, 256.0
        %v2630 = vmul.f32 %v2614, 256.0
        %v2631 = vmul.f32 %v2615, 256.0
        %v2632 = vmul.f32 %v2616, 256.0
        %v2649 = vperm.slane %v2617, %v963
        %v2650 = vperm.slane %v2618, %v965
        %v2651 = vsel %vm967, %v2650, %v2649
        %v2652 = vperm.slane %v2619, %v963
        %v2653 = vperm.slane %v2620, %v965
        %v2654 = vsel %vm967, %v2653, %v2652
        %v2655 = vperm.slane %v2621, %v963
        %v2656 = vperm.slane %v2622, %v965
        %v2657 = vsel %vm967, %v2656, %v2655
        %v2658 = vperm.slane %v2623, %v963
        %v2659 = vperm.slane %v2624, %v965
        %v2660 = vsel %vm967, %v2659, %v2658
        %v2661 = vperm.slane %v2625, %v963
        %v2662 = vperm.slane %v2626, %v965
        %v2663 = vsel %vm967, %v2662, %v2661
        %v2664 = vperm.slane %v2627, %v963
        %v2665 = vperm.slane %v2628, %v965
        %v2666 = vsel %vm967, %v2665, %v2664
        %v2667 = vperm.slane %v2629, %v963
        %v2668 = vperm.slane %v2630, %v965
        %v2669 = vsel %vm967, %v2668, %v2667
        %v2670 = vperm.slane %v2631, %v963
        %v2671 = vperm.slane %v2632, %v965
        %v2672 = vsel %vm967, %v2671, %v2670
        %v2673 = vsel %vm990, %v2654, %v2651
        %v2674 = vsel %vm992, %v2657, %v2673
        %v2675 = vsel %vm994, %v2660, %v2674
        %v2676 = vsel %vm996, %v2663, %v2675
        %v2677 = vsel %vm998, %v2666, %v2676
        %v2678 = vsel %vm1000, %v2669, %v2677
        %v2679 = vsel %vm1002, %v2672, %v2678
        %s2681 = scalar_lea.vmem %s273, 48 [#allocation3]
        %2682 = vst.msk [vmem:[%s2681] sm:$0xff] %vm1005, %v2679
        %s2683 = scalar_lea.vmem %s1, 48
        %v2684 = vld [vmem:[%s2683] sm:$0xf]
        %s2685 = scalar_lea.vmem %s1, 52
        %v2686 = vld [vmem:[%s2685] sm:$0xf]
        %v2688 = vsel %vm416, %v2686, 0
        %2690 = vmatpush.msra.mxu0 0.0
        %2691 = vmatpush.msra.mxu0 0.0
        %2692 = vmatpush.msra.mxu0 0.0
        %2693 = vmatpush.msra.mxu0 0.0
        %2694 = vmatpush.msra.mxu0 0.0
        %2695 = vmatpush.msra.mxu0 0.0
        %2696 = vmatpush.msra.mxu0 0.0
        %2697 = vmatpush.msra.mxu0 0.0
        %2698 = vmatpush.msra.mxu0 0.0
        %2699 = vmatpush.msra.mxu0 0.0
        %2700 = vmatpush.msra.mxu0 0.0
        %2701 = vmatpush.msra.mxu0 0.0
        %2702 = vmatpush.msra.mxu0 0.0
        %2703 = vmatpush.msra.mxu0 0.0
        %2704 = vmatpush.msra.mxu0 0.0
        %2705 = vmatpush.msra.mxu0 %v2688
        %2706 = vmatmul.f32.gmra.mxu0 %v1228
        %v2707 = vpop.f32.mrf.mxu0
        %v2708 = vadd.f32 0.0, %v2707
        %2709 = vmatmul.f32.gmra.mxu0 %v1230
        %v2710 = vpop.f32.mrf.mxu0
        %v2711 = vadd.f32 0.0, %v2710
        %2712 = vmatmul.f32.gmra.mxu0 %v1232
        %v2713 = vpop.f32.mrf.mxu0
        %v2714 = vadd.f32 0.0, %v2713
        %2715 = vmatmul.f32.gmra.mxu0 %v1234
        %v2716 = vpop.f32.mrf.mxu0
        %v2717 = vadd.f32 0.0, %v2716
        %2718 = vmatmul.f32.gmra.mxu0 %v1236
        %v2719 = vpop.f32.mrf.mxu0
        %v2720 = vadd.f32 0.0, %v2719
        %2721 = vmatmul.f32.gmra.mxu0 %v1238
        %v2722 = vpop.f32.mrf.mxu0
        %v2723 = vadd.f32 0.0, %v2722
        %2724 = vmatmul.f32.gmra.mxu0 %v1240
        %v2725 = vpop.f32.mrf.mxu0
        %v2726 = vadd.f32 0.0, %v2725
        %2727 = vmatmul.f32.gmra.mxu0 %v1242
        %v2728 = vpop.f32.mrf.mxu0
        %v2729 = vadd.f32 0.0, %v2728
        %2730 = vmatmul.f32.gmra.mxu0 %v1244
        %v2731 = vpop.f32.mrf.mxu0
        %v2732 = vadd.f32 0.0, %v2731
        %2733 = vmatmul.f32.gmra.mxu0 %v1246
        %v2734 = vpop.f32.mrf.mxu0
        %v2735 = vadd.f32 0.0, %v2734
        %2736 = vmatmul.f32.gmra.mxu0 %v1248
        %v2737 = vpop.f32.mrf.mxu0
        %v2738 = vadd.f32 0.0, %v2737
        %2739 = vmatmul.f32.gmra.mxu0 %v1250
        %v2740 = vpop.f32.mrf.mxu0
        %v2741 = vadd.f32 0.0, %v2740
        %2742 = vmatmul.f32.gmra.mxu0 %v1252
        %v2743 = vpop.f32.mrf.mxu0
        %v2744 = vadd.f32 0.0, %v2743
        %2745 = vmatmul.f32.gmra.mxu0 %v1254
        %v2746 = vpop.f32.mrf.mxu0
        %v2747 = vadd.f32 0.0, %v2746
        %2748 = vmatmul.f32.gmra.mxu0 %v1485
        %v2749 = vpop.f32.mrf.mxu0
        %v2750 = vadd.f32 0.0, %v2749
        %2751 = vmatmul.f32.gmra.mxu0 %v1487
        %v2752 = vpop.f32.mrf.mxu0
        %v2753 = vadd.f32 0.0, %v2752
        %2754 = vdwg.mxu0
        %v2756 = vsel %vm416, %v2684, 0
        %2758 = vmatpush.msra.mxu0 0.0
        %2759 = vmatpush.msra.mxu0 0.0
        %2760 = vmatpush.msra.mxu0 0.0
        %2761 = vmatpush.msra.mxu0 0.0
        %2762 = vmatpush.msra.mxu0 0.0
        %2763 = vmatpush.msra.mxu0 0.0
        %2764 = vmatpush.msra.mxu0 0.0
        %2765 = vmatpush.msra.mxu0 0.0
        %2766 = vmatpush.msra.mxu0 0.0
        %2767 = vmatpush.msra.mxu0 0.0
        %2768 = vmatpush.msra.mxu0 0.0
        %2769 = vmatpush.msra.mxu0 0.0
        %2770 = vmatpush.msra.mxu0 0.0
        %2771 = vmatpush.msra.mxu0 0.0
        %2772 = vmatpush.msra.mxu0 0.0
        %2773 = vmatpush.msra.mxu0 %v2756
        %2774 = vmatmul.f32.gmra.mxu0 %v388
        %v2775 = vpop.f32.mrf.mxu0
        %v2776 = vadd.f32 %v2708, %v2775
        %2777 = vmatmul.f32.gmra.mxu0 %v390
        %v2778 = vpop.f32.mrf.mxu0
        %v2779 = vadd.f32 %v2711, %v2778
        %2780 = vmatmul.f32.gmra.mxu0 %v392
        %v2781 = vpop.f32.mrf.mxu0
        %v2782 = vadd.f32 %v2714, %v2781
        %2783 = vmatmul.f32.gmra.mxu0 %v394
        %v2784 = vpop.f32.mrf.mxu0
        %v2785 = vadd.f32 %v2717, %v2784
        %2786 = vmatmul.f32.gmra.mxu0 %v396
        %v2787 = vpop.f32.mrf.mxu0
        %v2788 = vadd.f32 %v2720, %v2787
        %2789 = vmatmul.f32.gmra.mxu0 %v398
        %v2790 = vpop.f32.mrf.mxu0
        %v2791 = vadd.f32 %v2723, %v2790
        %2792 = vmatmul.f32.gmra.mxu0 %v400
        %v2793 = vpop.f32.mrf.mxu0
        %v2794 = vadd.f32 %v2726, %v2793
        %2795 = vmatmul.f32.gmra.mxu0 %v402
        %v2796 = vpop.f32.mrf.mxu0
        %v2797 = vadd.f32 %v2729, %v2796
        %2798 = vmatmul.f32.gmra.mxu0 %v404
        %v2799 = vpop.f32.mrf.mxu0
        %v2800 = vadd.f32 %v2732, %v2799
        %2801 = vmatmul.f32.gmra.mxu0 %v406
        %v2802 = vpop.f32.mrf.mxu0
        %v2803 = vadd.f32 %v2735, %v2802
        %2804 = vmatmul.f32.gmra.mxu0 %v408
        %v2805 = vpop.f32.mrf.mxu0
        %v2806 = vadd.f32 %v2738, %v2805
        %2807 = vmatmul.f32.gmra.mxu0 %v410
        %v2808 = vpop.f32.mrf.mxu0
        %v2809 = vadd.f32 %v2741, %v2808
        %2810 = vmatmul.f32.gmra.mxu0 %v412
        %v2811 = vpop.f32.mrf.mxu0
        %v2812 = vadd.f32 %v2744, %v2811
        %2813 = vmatmul.f32.gmra.mxu0 %v414
        %v2814 = vpop.f32.mrf.mxu0
        %v2815 = vadd.f32 %v2747, %v2814
        %2816 = vmatmul.f32.gmra.mxu0 %v685
        %v2817 = vpop.f32.mrf.mxu0
        %v2818 = vadd.f32 %v2750, %v2817
        %2819 = vmatmul.f32.gmra.mxu0 %v687
        %v2820 = vpop.f32.mrf.mxu0
        %v2821 = vadd.f32 %v2753, %v2820
        %2822 = vdwg.mxu0
        %s2823 = scalar_lea.vmem %s1, 56
        %v2824 = vld [vmem:[%s2823] sm:$0xf]
        %v2826 = vsel %vm416, %v2824, 0
        %2828 = vmatpush.msra.mxu0 0.0
        %2829 = vmatpush.msra.mxu0 0.0
        %2830 = vmatpush.msra.mxu0 0.0
        %2831 = vmatpush.msra.mxu0 0.0
        %2832 = vmatpush.msra.mxu0 0.0
        %2833 = vmatpush.msra.mxu0 0.0
        %2834 = vmatpush.msra.mxu0 0.0
        %2835 = vmatpush.msra.mxu0 0.0
        %2836 = vmatpush.msra.mxu0 0.0
        %2837 = vmatpush.msra.mxu0 0.0
        %2838 = vmatpush.msra.mxu0 0.0
        %2839 = vmatpush.msra.mxu0 0.0
        %2840 = vmatpush.msra.mxu0 0.0
        %2841 = vmatpush.msra.mxu0 0.0
        %2842 = vmatpush.msra.mxu0 0.0
        %2843 = vmatpush.msra.mxu0 %v2826
        %2844 = vmatmul.f32.gmra.mxu0 %v392
        %v2845 = vpop.f32.mrf.mxu0
        %v2846 = vadd.f32 0.0, %v2845
        %2847 = vmatmul.f32.gmra.mxu0 %v394
        %v2848 = vpop.f32.mrf.mxu0
        %v2849 = vadd.f32 0.0, %v2848
        %2850 = vmatmul.f32.gmra.mxu0 %v396
        %v2851 = vpop.f32.mrf.mxu0
        %v2852 = vadd.f32 0.0, %v2851
        %2853 = vmatmul.f32.gmra.mxu0 %v398
        %v2854 = vpop.f32.mrf.mxu0
        %v2855 = vadd.f32 0.0, %v2854
        %2856 = vmatmul.f32.gmra.mxu0 %v400
        %v2857 = vpop.f32.mrf.mxu0
        %v2858 = vadd.f32 0.0, %v2857
        %2859 = vmatmul.f32.gmra.mxu0 %v402
        %v2860 = vpop.f32.mrf.mxu0
        %v2861 = vadd.f32 0.0, %v2860
        %2862 = vmatmul.f32.gmra.mxu0 %v404
        %v2863 = vpop.f32.mrf.mxu0
        %v2864 = vadd.f32 0.0, %v2863
        %2865 = vmatmul.f32.gmra.mxu0 %v406
        %v2866 = vpop.f32.mrf.mxu0
        %v2867 = vadd.f32 0.0, %v2866
        %2868 = vmatmul.f32.gmra.mxu0 %v408
        %v2869 = vpop.f32.mrf.mxu0
        %v2870 = vadd.f32 0.0, %v2869
        %2871 = vmatmul.f32.gmra.mxu0 %v410
        %v2872 = vpop.f32.mrf.mxu0
        %v2873 = vadd.f32 0.0, %v2872
        %2874 = vmatmul.f32.gmra.mxu0 %v412
        %v2875 = vpop.f32.mrf.mxu0
        %v2876 = vadd.f32 0.0, %v2875
        %2877 = vmatmul.f32.gmra.mxu0 %v414
        %v2878 = vpop.f32.mrf.mxu0
        %v2879 = vadd.f32 0.0, %v2878
        %2880 = vmatmul.f32.gmra.mxu0 %v685
        %v2881 = vpop.f32.mrf.mxu0
        %v2882 = vadd.f32 0.0, %v2881
        %2883 = vmatmul.f32.gmra.mxu0 %v687
        %v2884 = vpop.f32.mrf.mxu0
        %v2885 = vadd.f32 0.0, %v2884
        %2886 = vmatmul.f32.gmra.mxu0 %v2204
        %v2887 = vpop.f32.mrf.mxu0
        %v2888 = vadd.f32 0.0, %v2887
        %2889 = vmatmul.f32.gmra.mxu0 %v2206
        %v2890 = vpop.f32.mrf.mxu0
        %v2891 = vadd.f32 0.0, %v2890
        %2892 = vdwg.mxu0
        %v2893 = vadd.f32 %v2776, %v2846
        %v2894 = vadd.f32 %v2779, %v2849
        %v2895 = vadd.f32 %v2782, %v2852
        %v2896 = vadd.f32 %v2785, %v2855
        %v2897 = vadd.f32 %v2788, %v2858
        %v2898 = vadd.f32 %v2791, %v2861
        %v2899 = vadd.f32 %v2794, %v2864
        %v2900 = vadd.f32 %v2797, %v2867
        %v2901 = vadd.f32 %v2800, %v2870
        %v2902 = vadd.f32 %v2803, %v2873
        %v2903 = vadd.f32 %v2806, %v2876
        %v2904 = vadd.f32 %v2809, %v2879
        %v2905 = vadd.f32 %v2812, %v2882
        %v2906 = vadd.f32 %v2815, %v2885
        %v2907 = vadd.f32 %v2818, %v2888
        %v2908 = vadd.f32 %v2821, %v2891
        %s2909 = scalar_lea.vmem %s1, 60
        %v2910 = vld [vmem:[%s2909] sm:$0xf]
        %v2911 = vrot.slane %v311, 2
        %v2912 = vrot.slane %v312, 2
        %v2913 = vsel %vm1183, %v2911, %v2912
        %v2914 = vrot.slane %v313, 2
        %v2915 = vsel %vm1183, %v2912, %v2914
        %v2916 = vsel %vm383, %v2913, 0
        %v2918 = vsel %vm383, %v2915, 0
        %v2921 = vsel %vm416, %v2910, 0
        %2923 = vmatpush.msra.mxu0 0.0
        %2924 = vmatpush.msra.mxu0 0.0
        %2925 = vmatpush.msra.mxu0 0.0
        %2926 = vmatpush.msra.mxu0 0.0
        %2927 = vmatpush.msra.mxu0 0.0
        %2928 = vmatpush.msra.mxu0 0.0
        %2929 = vmatpush.msra.mxu0 0.0
        %2930 = vmatpush.msra.mxu0 0.0
        %2931 = vmatpush.msra.mxu0 0.0
        %2932 = vmatpush.msra.mxu0 0.0
        %2933 = vmatpush.msra.mxu0 0.0
        %2934 = vmatpush.msra.mxu0 0.0
        %2935 = vmatpush.msra.mxu0 0.0
        %2936 = vmatpush.msra.mxu0 0.0
        %2937 = vmatpush.msra.mxu0 0.0
        %2938 = vmatpush.msra.mxu0 %v2921
        %2939 = vmatmul.f32.gmra.mxu0 %v1232
        %v2940 = vpop.f32.mrf.mxu0
        %v2941 = vadd.f32 0.0, %v2940
        %2942 = vmatmul.f32.gmra.mxu0 %v1234
        %v2943 = vpop.f32.mrf.mxu0
        %v2944 = vadd.f32 0.0, %v2943
        %2945 = vmatmul.f32.gmra.mxu0 %v1236
        %v2946 = vpop.f32.mrf.mxu0
        %v2947 = vadd.f32 0.0, %v2946
        %2948 = vmatmul.f32.gmra.mxu0 %v1238
        %v2949 = vpop.f32.mrf.mxu0
        %v2950 = vadd.f32 0.0, %v2949
        %2951 = vmatmul.f32.gmra.mxu0 %v1240
        %v2952 = vpop.f32.mrf.mxu0
        %v2953 = vadd.f32 0.0, %v2952
        %2954 = vmatmul.f32.gmra.mxu0 %v1242
        %v2955 = vpop.f32.mrf.mxu0
        %v2956 = vadd.f32 0.0, %v2955
        %2957 = vmatmul.f32.gmra.mxu0 %v1244
        %v2958 = vpop.f32.mrf.mxu0
        %v2959 = vadd.f32 0.0, %v2958
        %2960 = vmatmul.f32.gmra.mxu0 %v1246
        %v2961 = vpop.f32.mrf.mxu0
        %v2962 = vadd.f32 0.0, %v2961
        %2963 = vmatmul.f32.gmra.mxu0 %v1248
        %v2964 = vpop.f32.mrf.mxu0
        %v2965 = vadd.f32 0.0, %v2964
        %2966 = vmatmul.f32.gmra.mxu0 %v1250
        %v2967 = vpop.f32.mrf.mxu0
        %v2968 = vadd.f32 0.0, %v2967
        %2969 = vmatmul.f32.gmra.mxu0 %v1252
        %v2970 = vpop.f32.mrf.mxu0
        %v2971 = vadd.f32 0.0, %v2970
        %2972 = vmatmul.f32.gmra.mxu0 %v1254
        %v2973 = vpop.f32.mrf.mxu0
        %v2974 = vadd.f32 0.0, %v2973
        %2975 = vmatmul.f32.gmra.mxu0 %v1485
        %v2976 = vpop.f32.mrf.mxu0
        %v2977 = vadd.f32 0.0, %v2976
        %2978 = vmatmul.f32.gmra.mxu0 %v1487
        %v2979 = vpop.f32.mrf.mxu0
        %v2980 = vadd.f32 0.0, %v2979
        %2981 = vmatmul.f32.gmra.mxu0 %v2916
        %v2982 = vpop.f32.mrf.mxu0
        %v2983 = vadd.f32 0.0, %v2982
        %2984 = vmatmul.f32.gmra.mxu0 %v2918
        %v2985 = vpop.f32.mrf.mxu0
        %v2986 = vadd.f32 0.0, %v2985
        %2987 = vdwg.mxu0
        %v2988 = vadd.f32 %v2893, %v2941
        %v2989 = vadd.f32 %v2894, %v2944
        %v2990 = vadd.f32 %v2895, %v2947
        %v2991 = vadd.f32 %v2896, %v2950
        %v2992 = vadd.f32 %v2897, %v2953
        %v2993 = vadd.f32 %v2898, %v2956
        %v2994 = vadd.f32 %v2899, %v2959
        %v2995 = vadd.f32 %v2900, %v2962
        %v2996 = vadd.f32 %v2901, %v2965
        %v2997 = vadd.f32 %v2902, %v2968
        %v2998 = vadd.f32 %v2903, %v2971
        %v2999 = vadd.f32 %v2904, %v2974
        %v3000 = vadd.f32 %v2905, %v2977
        %v3001 = vadd.f32 %v2906, %v2980
        %v3002 = vadd.f32 %v2907, %v2983
        %v3003 = vadd.f32 %v2908, %v2986
        %v3004 = vadd.f32 %v2988, %v774
        %v3005 = vadd.f32 %v2989, %v774
        %v3006 = vadd.f32 %v2990, %v774
        %v3007 = vadd.f32 %v2991, %v774
        %v3008 = vadd.f32 %v2992, %v774
        %v3009 = vadd.f32 %v2993, %v774
        %v3010 = vadd.f32 %v2994, %v774
        %v3011 = vadd.f32 %v2995, %v774
        %v3012 = vadd.f32 %v2996, %v774
        %v3013 = vadd.f32 %v2997, %v774
        %v3014 = vadd.f32 %v2998, %v774
        %v3015 = vadd.f32 %v2999, %v774
        %v3016 = vadd.f32 %v3000, %v774
        %v3017 = vadd.f32 %v3001, %v774
        %v3018 = vadd.f32 %v3002, %v774
        %v3019 = vadd.f32 %v3003, %v774
        %v3020 = vmax.f32 %v3004, 0.0
        %v3021 = vmax.f32 %v3005, 0.0
        %v3022 = vmax.f32 %v3006, 0.0
        %v3023 = vmax.f32 %v3007, 0.0
        %v3024 = vmax.f32 %v3008, 0.0
        %v3025 = vmax.f32 %v3009, 0.0
        %v3026 = vmax.f32 %v3010, 0.0
        %v3027 = vmax.f32 %v3011, 0.0
        %v3028 = vmax.f32 %v3012, 0.0
        %v3029 = vmax.f32 %v3013, 0.0
        %v3030 = vmax.f32 %v3014, 0.0
        %v3031 = vmax.f32 %v3015, 0.0
        %v3032 = vmax.f32 %v3016, 0.0
        %v3033 = vmax.f32 %v3017, 0.0
        %v3034 = vmax.f32 %v3018, 0.0
        %v3035 = vmax.f32 %v3019, 0.0
        %s3036 = scalar_lea.vmem %s267, 384 [#allocation2]
        %3037 = vst.msk [vmem:[%s3036] sm:$0xff] %vm808, %v3020
        %3038 = vst.msk [vmem:[%s3036 + $0x8] sm:$0xff] %vm808, %v3021
        %3039 = vst.msk [vmem:[%s3036 + $0x10] sm:$0xff] %vm808, %v3022
        %3040 = vst.msk [vmem:[%s3036 + $0x18] sm:$0xff] %vm808, %v3023
        %3041 = vst.msk [vmem:[%s3036 + $0x20] sm:$0xff] %vm808, %v3024
        %3042 = vst.msk [vmem:[%s3036 + $0x28] sm:$0xff] %vm808, %v3025
        %3043 = vst.msk [vmem:[%s3036 + $0x30] sm:$0xff] %vm808, %v3026
        %3044 = vst.msk [vmem:[%s3036 + $0x38] sm:$0xff] %vm808, %v3027
        %3045 = vst.msk [vmem:[%s3036 + $0x40] sm:$0xff] %vm808, %v3028
        %3046 = vst.msk [vmem:[%s3036 + $0x48] sm:$0xff] %vm808, %v3029
        %3047 = vst.msk [vmem:[%s3036 + $0x50] sm:$0xff] %vm808, %v3030
        %3048 = vst.msk [vmem:[%s3036 + $0x58] sm:$0xff] %vm808, %v3031
        %3049 = vst.msk [vmem:[%s3036 + $0x60] sm:$0xff] %vm808, %v3032
        %3050 = vst.msk [vmem:[%s3036 + $0x68] sm:$0xff] %vm808, %v3033
        %3051 = vst.msk [vmem:[%s3036 + $0x70] sm:$0xff] %vm808, %v3034
        %3052 = vst.msk [vmem:[%s3036 + $0x78] sm:$0xff] %vm808, %v3035
        %v3053 = vld [vmem:[%s3] sm:$0x1]
        %v3054 = vperm.slane %v3053, 0
        %v3055 = vmul.f32 %v3020, %v3054
        %v3056 = vmul.f32 %v3021, %v3054
        %v3057 = vmul.f32 %v3022, %v3054
        %v3058 = vmul.f32 %v3023, %v3054
        %v3059 = vmul.f32 %v3024, %v3054
        %v3060 = vmul.f32 %v3025, %v3054
        %v3061 = vmul.f32 %v3026, %v3054
        %v3062 = vmul.f32 %v3027, %v3054
        %v3063 = vmul.f32 %v3028, %v3054
        %v3064 = vmul.f32 %v3029, %v3054
        %v3065 = vmul.f32 %v3030, %v3054
        %v3066 = vmul.f32 %v3031, %v3054
        %v3067 = vmul.f32 %v3032, %v3054
        %v3068 = vmul.f32 %v3033, %v3054
        %v3069 = vmul.f32 %v3034, %v3054
        %v3070 = vmul.f32 %v3035, %v3054
        %v3071 = vsel %vm808, %v3055, 0.0
        %3072 = vadd.xlane.f32.xlu0 %v3071
        %v3073 = vpop.xlane.xlu0 %3072
        %v3074 = vsel %vm808, %v3056, 0.0
        %3075 = vadd.xlane.f32.xlu0 %v3074
        %v3076 = vpop.xlane.xlu0 %3075
        %v3077 = vsel %vm808, %v3057, 0.0
        %3078 = vadd.xlane.f32.xlu0 %v3077
        %v3079 = vpop.xlane.xlu0 %3078
        %v3080 = vsel %vm808, %v3058, 0.0
        %3081 = vadd.xlane.f32.xlu0 %v3080
        %v3082 = vpop.xlane.xlu0 %3081
        %v3083 = vsel %vm808, %v3059, 0.0
        %3084 = vadd.xlane.f32.xlu0 %v3083
        %v3085 = vpop.xlane.xlu0 %3084
        %v3086 = vsel %vm808, %v3060, 0.0
        %3087 = vadd.xlane.f32.xlu0 %v3086
        %v3088 = vpop.xlane.xlu0 %3087
        %v3089 = vsel %vm808, %v3061, 0.0
        %3090 = vadd.xlane.f32.xlu0 %v3089
        %v3091 = vpop.xlane.xlu0 %3090
        %v3092 = vsel %vm808, %v3062, 0.0
        %3093 = vadd.xlane.f32.xlu0 %v3092
        %v3094 = vpop.xlane.xlu0 %3093
        %v3095 = vsel %vm808, %v3063, 0.0
        %3096 = vadd.xlane.f32.xlu0 %v3095
        %v3097 = vpop.xlane.xlu0 %3096
        %v3098 = vsel %vm808, %v3064, 0.0
        %3099 = vadd.xlane.f32.xlu0 %v3098
        %v3100 = vpop.xlane.xlu0 %3099
        %v3101 = vsel %vm808, %v3065, 0.0
        %3102 = vadd.xlane.f32.xlu0 %v3101
        %v3103 = vpop.xlane.xlu0 %3102
        %v3104 = vsel %vm808, %v3066, 0.0
        %3105 = vadd.xlane.f32.xlu0 %v3104
        %v3106 = vpop.xlane.xlu0 %3105
        %v3107 = vsel %vm808, %v3067, 0.0
        %3108 = vadd.xlane.f32.xlu0 %v3107
        %v3109 = vpop.xlane.xlu0 %3108
        %v3110 = vsel %vm808, %v3068, 0.0
        %3111 = vadd.xlane.f32.xlu0 %v3110
        %v3112 = vpop.xlane.xlu0 %3111
        %v3113 = vsel %vm808, %v3069, 0.0
        %3114 = vadd.xlane.f32.xlu0 %v3113
        %v3115 = vpop.xlane.xlu0 %3114
        %v3116 = vsel %vm808, %v3070, 0.0
        %3117 = vadd.xlane.f32.xlu0 %v3116
        %v3118 = vpop.xlane.xlu0 %3117
        %v3119 = vld [vmem:[%s4] sm:$0x1]
        %v3121 = vperm.slane %v3119, 0
        %3122 = vset.pattern.permute.xlu0 0
        %3123 = vperm.xlu0 %3122, %v3121
        %v3124 = vpop.permute.xlu0 %3123
        %v3126 = vadd.f32 %v3073, %v3124
        %v3127 = vadd.f32 %v3076, %v3124
        %v3128 = vadd.f32 %v3079, %v3124
        %v3129 = vadd.f32 %v3082, %v3124
        %v3130 = vadd.f32 %v3085, %v3124
        %v3131 = vadd.f32 %v3088, %v3124
        %v3132 = vadd.f32 %v3091, %v3124
        %v3133 = vadd.f32 %v3094, %v3124
        %v3134 = vadd.f32 %v3097, %v3124
        %v3135 = vadd.f32 %v3100, %v3124
        %v3136 = vadd.f32 %v3103, %v3124
        %v3137 = vadd.f32 %v3106, %v3124
        %v3138 = vadd.f32 %v3109, %v3124
        %v3139 = vadd.f32 %v3112, %v3124
        %v3140 = vadd.f32 %v3115, %v3124
        %v3141 = vadd.f32 %v3118, %v3124
        %v3142 = vtanh.pop %v3126
        %v3143 = vtanh.pop %v3127
        %v3144 = vtanh.pop %v3128
        %v3145 = vtanh.pop %v3129
        %v3146 = vtanh.pop %v3130
        %v3147 = vtanh.pop %v3131
        %v3148 = vtanh.pop %v3132
        %v3149 = vtanh.pop %v3133
        %v3150 = vtanh.pop %v3134
        %v3151 = vtanh.pop %v3135
        %v3152 = vtanh.pop %v3136
        %v3153 = vtanh.pop %v3137
        %v3154 = vtanh.pop %v3138
        %v3155 = vtanh.pop %v3139
        %v3156 = vtanh.pop %v3140
        %v3157 = vtanh.pop %v3141
        %v3158 = vmul.f32 %v3142, 256.0
        %v3159 = vmul.f32 %v3143, 256.0
        %v3160 = vmul.f32 %v3144, 256.0
        %v3161 = vmul.f32 %v3145, 256.0
        %v3162 = vmul.f32 %v3146, 256.0
        %v3163 = vmul.f32 %v3147, 256.0
        %v3164 = vmul.f32 %v3148, 256.0
        %v3165 = vmul.f32 %v3149, 256.0
        %v3166 = vmul.f32 %v3150, 256.0
        %v3167 = vmul.f32 %v3151, 256.0
        %v3168 = vmul.f32 %v3152, 256.0
        %v3169 = vmul.f32 %v3153, 256.0
        %v3170 = vmul.f32 %v3154, 256.0
        %v3171 = vmul.f32 %v3155, 256.0
        %v3172 = vmul.f32 %v3156, 256.0
        %v3173 = vmul.f32 %v3157, 256.0
        %v3190 = vperm.slane %v3158, %v963
        %v3191 = vperm.slane %v3159, %v965
        %v3192 = vsel %vm967, %v3191, %v3190
        %v3193 = vperm.slane %v3160, %v963
        %v3194 = vperm.slane %v3161, %v965
        %v3195 = vsel %vm967, %v3194, %v3193
        %v3196 = vperm.slane %v3162, %v963
        %v3197 = vperm.slane %v3163, %v965
        %v3198 = vsel %vm967, %v3197, %v3196
        %v3199 = vperm.slane %v3164, %v963
        %v3200 = vperm.slane %v3165, %v965
        %v3201 = vsel %vm967, %v3200, %v3199
        %v3202 = vperm.slane %v3166, %v963
        %v3203 = vperm.slane %v3167, %v965
        %v3204 = vsel %vm967, %v3203, %v3202
        %v3205 = vperm.slane %v3168, %v963
        %v3206 = vperm.slane %v3169, %v965
        %v3207 = vsel %vm967, %v3206, %v3205
        %v3208 = vperm.slane %v3170, %v963
        %v3209 = vperm.slane %v3171, %v965
        %v3210 = vsel %vm967, %v3209, %v3208
        %v3211 = vperm.slane %v3172, %v963
        %v3212 = vperm.slane %v3173, %v965
        %v3213 = vsel %vm967, %v3212, %v3211
        %v3214 = vsel %vm990, %v3195, %v3192
        %v3215 = vsel %vm992, %v3198, %v3214
        %v3216 = vsel %vm994, %v3201, %v3215
        %v3217 = vsel %vm996, %v3204, %v3216
        %v3218 = vsel %vm998, %v3207, %v3217
        %v3219 = vsel %vm1000, %v3210, %v3218
        %v3220 = vsel %vm1002, %v3213, %v3219
        %s3222 = scalar_lea.vmem %s273, 24 [#allocation3]
        %3223 = vst.msk [vmem:[%s3222] sm:$0xff] %vm1005, %v3220
        %v3224 = vld [vmem:[%s3 + $0x1] sm:$0x1]
        %v3225 = vperm.slane %v3224, 0
        %v3226 = vmul.f32 %v3020, %v3225
        %v3227 = vmul.f32 %v3021, %v3225
        %v3228 = vmul.f32 %v3022, %v3225
        %v3229 = vmul.f32 %v3023, %v3225
        %v3230 = vmul.f32 %v3024, %v3225
        %v3231 = vmul.f32 %v3025, %v3225
        %v3232 = vmul.f32 %v3026, %v3225
        %v3233 = vmul.f32 %v3027, %v3225
        %v3234 = vmul.f32 %v3028, %v3225
        %v3235 = vmul.f32 %v3029, %v3225
        %v3236 = vmul.f32 %v3030, %v3225
        %v3237 = vmul.f32 %v3031, %v3225
        %v3238 = vmul.f32 %v3032, %v3225
        %v3239 = vmul.f32 %v3033, %v3225
        %v3240 = vmul.f32 %v3034, %v3225
        %v3241 = vmul.f32 %v3035, %v3225
        %v3242 = vsel %vm808, %v3226, 0.0
        %3243 = vadd.xlane.f32.xlu0 %v3242
        %v3244 = vpop.xlane.xlu0 %3243
        %v3245 = vsel %vm808, %v3227, 0.0
        %3246 = vadd.xlane.f32.xlu0 %v3245
        %v3247 = vpop.xlane.xlu0 %3246
        %v3248 = vsel %vm808, %v3228, 0.0
        %3249 = vadd.xlane.f32.xlu0 %v3248
        %v3250 = vpop.xlane.xlu0 %3249
        %v3251 = vsel %vm808, %v3229, 0.0
        %3252 = vadd.xlane.f32.xlu0 %v3251
        %v3253 = vpop.xlane.xlu0 %3252
        %v3254 = vsel %vm808, %v3230, 0.0
        %3255 = vadd.xlane.f32.xlu0 %v3254
        %v3256 = vpop.xlane.xlu0 %3255
        %v3257 = vsel %vm808, %v3231, 0.0
        %3258 = vadd.xlane.f32.xlu0 %v3257
        %v3259 = vpop.xlane.xlu0 %3258
        %v3260 = vsel %vm808, %v3232, 0.0
        %3261 = vadd.xlane.f32.xlu0 %v3260
        %v3262 = vpop.xlane.xlu0 %3261
        %v3263 = vsel %vm808, %v3233, 0.0
        %3264 = vadd.xlane.f32.xlu0 %v3263
        %v3265 = vpop.xlane.xlu0 %3264
        %v3266 = vsel %vm808, %v3234, 0.0
        %3267 = vadd.xlane.f32.xlu0 %v3266
        %v3268 = vpop.xlane.xlu0 %3267
        %v3269 = vsel %vm808, %v3235, 0.0
        %3270 = vadd.xlane.f32.xlu0 %v3269
        %v3271 = vpop.xlane.xlu0 %3270
        %v3272 = vsel %vm808, %v3236, 0.0
        %3273 = vadd.xlane.f32.xlu0 %v3272
        %v3274 = vpop.xlane.xlu0 %3273
        %v3275 = vsel %vm808, %v3237, 0.0
        %3276 = vadd.xlane.f32.xlu0 %v3275
        %v3277 = vpop.xlane.xlu0 %3276
        %v3278 = vsel %vm808, %v3238, 0.0
        %3279 = vadd.xlane.f32.xlu0 %v3278
        %v3280 = vpop.xlane.xlu0 %3279
        %v3281 = vsel %vm808, %v3239, 0.0
        %3282 = vadd.xlane.f32.xlu0 %v3281
        %v3283 = vpop.xlane.xlu0 %3282
        %v3284 = vsel %vm808, %v3240, 0.0
        %3285 = vadd.xlane.f32.xlu0 %v3284
        %v3286 = vpop.xlane.xlu0 %3285
        %v3287 = vsel %vm808, %v3241, 0.0
        %3288 = vadd.xlane.f32.xlu0 %v3287
        %v3289 = vpop.xlane.xlu0 %3288
        %v3290 = vld [vmem:[%s1073] sm:$0x1]
        %v3292 = vperm.slane %v3290, 0
        %3293 = vset.pattern.permute.xlu0 0
        %3294 = vperm.xlu0 %3293, %v3292
        %v3295 = vpop.permute.xlu0 %3294
        %v3297 = vadd.f32 %v3244, %v3295
        %v3298 = vadd.f32 %v3247, %v3295
        %v3299 = vadd.f32 %v3250, %v3295
        %v3300 = vadd.f32 %v3253, %v3295
        %v3301 = vadd.f32 %v3256, %v3295
        %v3302 = vadd.f32 %v3259, %v3295
        %v3303 = vadd.f32 %v3262, %v3295
        %v3304 = vadd.f32 %v3265, %v3295
        %v3305 = vadd.f32 %v3268, %v3295
        %v3306 = vadd.f32 %v3271, %v3295
        %v3307 = vadd.f32 %v3274, %v3295
        %v3308 = vadd.f32 %v3277, %v3295
        %v3309 = vadd.f32 %v3280, %v3295
        %v3310 = vadd.f32 %v3283, %v3295
        %v3311 = vadd.f32 %v3286, %v3295
        %v3312 = vadd.f32 %v3289, %v3295
        %v3313 = vtanh.pop %v3297
        %v3314 = vtanh.pop %v3298
        %v3315 = vtanh.pop %v3299
        %v3316 = vtanh.pop %v3300
        %v3317 = vtanh.pop %v3301
        %v3318 = vtanh.pop %v3302
        %v3319 = vtanh.pop %v3303
        %v3320 = vtanh.pop %v3304
        %v3321 = vtanh.pop %v3305
        %v3322 = vtanh.pop %v3306
        %v3323 = vtanh.pop %v3307
        %v3324 = vtanh.pop %v3308
        %v3325 = vtanh.pop %v3309
        %v3326 = vtanh.pop %v3310
        %v3327 = vtanh.pop %v3311
        %v3328 = vtanh.pop %v3312
        %v3329 = vmul.f32 %v3313, 256.0
        %v3330 = vmul.f32 %v3314, 256.0
        %v3331 = vmul.f32 %v3315, 256.0
        %v3332 = vmul.f32 %v3316, 256.0
        %v3333 = vmul.f32 %v3317, 256.0
        %v3334 = vmul.f32 %v3318, 256.0
        %v3335 = vmul.f32 %v3319, 256.0
        %v3336 = vmul.f32 %v3320, 256.0
        %v3337 = vmul.f32 %v3321, 256.0
        %v3338 = vmul.f32 %v3322, 256.0
        %v3339 = vmul.f32 %v3323, 256.0
        %v3340 = vmul.f32 %v3324, 256.0
        %v3341 = vmul.f32 %v3325, 256.0
        %v3342 = vmul.f32 %v3326, 256.0
        %v3343 = vmul.f32 %v3327, 256.0
        %v3344 = vmul.f32 %v3328, 256.0
        %v3361 = vperm.slane %v3329, %v963
        %v3362 = vperm.slane %v3330, %v965
        %v3363 = vsel %vm967, %v3362, %v3361
        %v3364 = vperm.slane %v3331, %v963
        %v3365 = vperm.slane %v3332, %v965
        %v3366 = vsel %vm967, %v3365, %v3364
        %v3367 = vperm.slane %v3333, %v963
        %v3368 = vperm.slane %v3334, %v965
        %v3369 = vsel %vm967, %v3368, %v3367
        %v3370 = vperm.slane %v3335, %v963
        %v3371 = vperm.slane %v3336, %v965
        %v3372 = vsel %vm967, %v3371, %v3370
        %v3373 = vperm.slane %v3337, %v963
        %v3374 = vperm.slane %v3338, %v965
        %v3375 = vsel %vm967, %v3374, %v3373
        %v3376 = vperm.slane %v3339, %v963
        %v3377 = vperm.slane %v3340, %v965
        %v3378 = vsel %vm967, %v3377, %v3376
        %v3379 = vperm.slane %v3341, %v963
        %v3380 = vperm.slane %v3342, %v965
        %v3381 = vsel %vm967, %v3380, %v3379
        %v3382 = vperm.slane %v3343, %v963
        %v3383 = vperm.slane %v3344, %v965
        %v3384 = vsel %vm967, %v3383, %v3382
        %v3385 = vsel %vm990, %v3366, %v3363
        %v3386 = vsel %vm992, %v3369, %v3385
        %v3387 = vsel %vm994, %v3372, %v3386
        %v3388 = vsel %vm996, %v3375, %v3387
        %v3389 = vsel %vm998, %v3378, %v3388
        %v3390 = vsel %vm1000, %v3381, %v3389
        %v3391 = vsel %vm1002, %v3384, %v3390
        %s3393 = scalar_lea.vmem %s273, 56 [#allocation3]
        %3394 = vst.msk [vmem:[%s3393] sm:$0xff] %vm1005, %v3391
        %s3395 = sand.u32 %s152, 1
        %s3396 = sand.u32 %s152, 1
        %s3397 = smul.addr %s3396, 512
        %s3398 = scalar_lea.vmem [#allocation2], %s3397
        %s3399 = sand.u32 %s180, 1
        %s3400 = sand.u32 %s180, 1
        %s3401 = smul.addr %s3400, 64
        %s3402 = scalar_lea.vmem [#allocation3], %s3401
        // Predicated region
        $region41: #{upsample_conv2d_and_predict_flow.1} parent=39 // pred_check
          %p3403 = pneg %p162
        $region42: #{upsample_conv2d_and_predict_flow.1} parent=39 // pred_check_branch
          %3405 = sbr.rel (%p3403) target = $region44
        $region43: #{upsample_conv2d_and_predict_flow.1} parent=39 // pred_region
          %s3406 = smul.u32 8, %s23
          %s3407 = smul.addr %s3406, 2
          %s3408 = smul.addr %s22, 128
          %s3409 = sadd.s32 %s3407, %s3408
          %s3410 = smul.addr %s3409, 8
          %s3411 = scalar_lea.vmem %s5, %s3410
          // Predicated region
          $region45: #{upsample_conv2d_and_predict_flow.1} parent=43 // pred_check
            _
          $region46: #{upsample_conv2d_and_predict_flow.1} parent=43 // pred_check_branch
            %3413 = sbr.rel (0) target = $region48
          $region47: #{upsample_conv2d_and_predict_flow.1} parent=43 // pred_region
            // Predicated region
            $region49: #{upsample_conv2d_and_predict_flow.1} parent=47 // pred_check
              _
            $region50: #{upsample_conv2d_and_predict_flow.1} parent=47 // pred_check_branch
              %3415 = sbr.rel (0) target = $region52
            $region51: #{upsample_conv2d_and_predict_flow.1} parent=47 // pred_region
              // Predicated region
              $region64: #{upsample_conv2d_and_predict_flow.1} parent=51 // pred_check
                _
              $region65: #{upsample_conv2d_and_predict_flow.1} parent=51 // pred_check_branch
                %3557 = sbr.rel (0) target = $region67
              $region66: #{upsample_conv2d_and_predict_flow.1} parent=51 // pred_region
                loop: start=0, step=1, limit=1
                $region68: #{upsample_conv2d_and_predict_flow.1} parent=66 // loop_pre_header
                  _
                $region69: #{upsample_conv2d_and_predict_flow.1} parent=66 // loop_header
                  %s3559 = sphi 0, %s3563
                  %p3560 = scmp.ge.s32.totalorder %s3559, 1
                  %s3564 = sphi %s3398, %s3398
                  %s3565 = sphi %s3411, %s3411
                $region70: #{upsample_conv2d_and_predict_flow.1} parent=66 // loop_header_branch
                  %3562 = sbr.rel (%p3560) target = $region74
                $region71: #{upsample_conv2d_and_predict_flow.1} parent=66 // loop_body
                  %v3566 = vld [vmem:[%s3564] sm:$0xff]
                  %3567 = vst [vmem:[%s3565] sm:$0xff] %v3566
                  %v3568 = vld [vmem:[%s3564 + $0x8] sm:$0xff]
                  %3569 = vst [vmem:[%s3565 + $0x8] sm:$0xff] %v3568
                  %v3570 = vld [vmem:[%s3564 + $0x10] sm:$0xff]
                  %3571 = vst [vmem:[%s3565 + $0x10] sm:$0xff] %v3570
                  %v3572 = vld [vmem:[%s3564 + $0x18] sm:$0xff]
                  %3573 = vst [vmem:[%s3565 + $0x18] sm:$0xff] %v3572
                  %v3574 = vld [vmem:[%s3564 + $0x20] sm:$0xff]
                  %3575 = vst [vmem:[%s3565 + $0x20] sm:$0xff] %v3574
                  %v3576 = vld [vmem:[%s3564 + $0x28] sm:$0xff]
                  %3577 = vst [vmem:[%s3565 + $0x28] sm:$0xff] %v3576
                  %v3578 = vld [vmem:[%s3564 + $0x30] sm:$0xff]
                  %3579 = vst [vmem:[%s3565 + $0x30] sm:$0xff] %v3578
                  %v3580 = vld [vmem:[%s3564 + $0x38] sm:$0xff]
                  %3581 = vst [vmem:[%s3565 + $0x38] sm:$0xff] %v3580
                  %v3582 = vld [vmem:[%s3564 + $0x40] sm:$0xff]
                  %3583 = vst [vmem:[%s3565 + $0x40] sm:$0xff] %v3582
                  %v3584 = vld [vmem:[%s3564 + $0x48] sm:$0xff]
                  %3585 = vst [vmem:[%s3565 + $0x48] sm:$0xff] %v3584
                  %v3586 = vld [vmem:[%s3564 + $0x50] sm:$0xff]
                  %3587 = vst [vmem:[%s3565 + $0x50] sm:$0xff] %v3586
                  %v3588 = vld [vmem:[%s3564 + $0x58] sm:$0xff]
                  %3589 = vst [vmem:[%s3565 + $0x58] sm:$0xff] %v3588
                  %v3590 = vld [vmem:[%s3564 + $0x60] sm:$0xff]
                  %3591 = vst [vmem:[%s3565 + $0x60] sm:$0xff] %v3590
                  %v3592 = vld [vmem:[%s3564 + $0x68] sm:$0xff]
                  %3593 = vst [vmem:[%s3565 + $0x68] sm:$0xff] %v3592
                  %v3594 = vld [vmem:[%s3564 + $0x70] sm:$0xff]
                  %3595 = vst [vmem:[%s3565 + $0x70] sm:$0xff] %v3594
                  %v3596 = vld [vmem:[%s3564 + $0x78] sm:$0xff]
                  %3597 = vst [vmem:[%s3565 + $0x78] sm:$0xff] %v3596
                  %v3598 = vld [vmem:[%s3564 + $0x80] sm:$0xff]
                  %3599 = vst [vmem:[%s3565 + $0x100] sm:$0xff] %v3598
                  %v3600 = vld [vmem:[%s3564 + $0x88] sm:$0xff]
                  %3601 = vst [vmem:[%s3565 + $0x108] sm:$0xff] %v3600
                  %v3602 = vld [vmem:[%s3564 + $0x90] sm:$0xff]
                  %3603 = vst [vmem:[%s3565 + $0x110] sm:$0xff] %v3602
                  %v3604 = vld [vmem:[%s3564 + $0x98] sm:$0xff]
                  %3605 = vst [vmem:[%s3565 + $0x118] sm:$0xff] %v3604
                  %v3606 = vld [vmem:[%s3564 + $0xa0] sm:$0xff]
                  %3607 = vst [vmem:[%s3565 + $0x120] sm:$0xff] %v3606
                  %v3608 = vld [vmem:[%s3564 + $0xa8] sm:$0xff]
                  %3609 = vst [vmem:[%s3565 + $0x128] sm:$0xff] %v3608
                  %v3610 = vld [vmem:[%s3564 + $0xb0] sm:$0xff]
                  %3611 = vst [vmem:[%s3565 + $0x130] sm:$0xff] %v3610
                  %v3612 = vld [vmem:[%s3564 + $0xb8] sm:$0xff]
                  %3613 = vst [vmem:[%s3565 + $0x138] sm:$0xff] %v3612
                  %v3614 = vld [vmem:[%s3564 + $0xc0] sm:$0xff]
                  %3615 = vst [vmem:[%s3565 + $0x140] sm:$0xff] %v3614
                  %v3616 = vld [vmem:[%s3564 + $0xc8] sm:$0xff]
                  %3617 = vst [vmem:[%s3565 + $0x148] sm:$0xff] %v3616
                  %v3618 = vld [vmem:[%s3564 + $0xd0] sm:$0xff]
                  %3619 = vst [vmem:[%s3565 + $0x150] sm:$0xff] %v3618
                  %v3620 = vld [vmem:[%s3564 + $0xd8] sm:$0xff]
                  %3621 = vst [vmem:[%s3565 + $0x158] sm:$0xff] %v3620
                  %v3622 = vld [vmem:[%s3564 + $0xe0] sm:$0xff]
                  %3623 = vst [vmem:[%s3565 + $0x160] sm:$0xff] %v3622
                  %v3624 = vld [vmem:[%s3564 + $0xe8] sm:$0xff]
                  %3625 = vst [vmem:[%s3565 + $0x168] sm:$0xff] %v3624
                  %v3626 = vld [vmem:[%s3564 + $0xf0] sm:$0xff]
                  %3627 = vst [vmem:[%s3565 + $0x170] sm:$0xff] %v3626
                  %v3628 = vld [vmem:[%s3564 + $0xf8] sm:$0xff]
                  %3629 = vst [vmem:[%s3565 + $0x178] sm:$0xff] %v3628
                  %v3630 = vld [vmem:[%s3564 + $0x100] sm:$0xff]
                  %3631 = vst [vmem:[%s3565 + $0x200] sm:$0xff] %v3630
                  %v3632 = vld [vmem:[%s3564 + $0x108] sm:$0xff]
                  %3633 = vst [vmem:[%s3565 + $0x208] sm:$0xff] %v3632
                  %v3634 = vld [vmem:[%s3564 + $0x110] sm:$0xff]
                  %3635 = vst [vmem:[%s3565 + $0x210] sm:$0xff] %v3634
                  %v3636 = vld [vmem:[%s3564 + $0x118] sm:$0xff]
                  %3637 = vst [vmem:[%s3565 + $0x218] sm:$0xff] %v3636
                  %v3638 = vld [vmem:[%s3564 + $0x120] sm:$0xff]
                  %3639 = vst [vmem:[%s3565 + $0x220] sm:$0xff] %v3638
                  %v3640 = vld [vmem:[%s3564 + $0x128] sm:$0xff]
                  %3641 = vst [vmem:[%s3565 + $0x228] sm:$0xff] %v3640
                  %v3642 = vld [vmem:[%s3564 + $0x130] sm:$0xff]
                  %3643 = vst [vmem:[%s3565 + $0x230] sm:$0xff] %v3642
                  %v3644 = vld [vmem:[%s3564 + $0x138] sm:$0xff]
                  %3645 = vst [vmem:[%s3565 + $0x238] sm:$0xff] %v3644
                  %v3646 = vld [vmem:[%s3564 + $0x140] sm:$0xff]
                  %3647 = vst [vmem:[%s3565 + $0x240] sm:$0xff] %v3646
                  %v3648 = vld [vmem:[%s3564 + $0x148] sm:$0xff]
                  %3649 = vst [vmem:[%s3565 + $0x248] sm:$0xff] %v3648
                  %v3650 = vld [vmem:[%s3564 + $0x150] sm:$0xff]
                  %3651 = vst [vmem:[%s3565 + $0x250] sm:$0xff] %v3650
                  %v3652 = vld [vmem:[%s3564 + $0x158] sm:$0xff]
                  %3653 = vst [vmem:[%s3565 + $0x258] sm:$0xff] %v3652
                  %v3654 = vld [vmem:[%s3564 + $0x160] sm:$0xff]
                  %3655 = vst [vmem:[%s3565 + $0x260] sm:$0xff] %v3654
                  %v3656 = vld [vmem:[%s3564 + $0x168] sm:$0xff]
                  %3657 = vst [vmem:[%s3565 + $0x268] sm:$0xff] %v3656
                  %v3658 = vld [vmem:[%s3564 + $0x170] sm:$0xff]
                  %3659 = vst [vmem:[%s3565 + $0x270] sm:$0xff] %v3658
                  %v3660 = vld [vmem:[%s3564 + $0x178] sm:$0xff]
                  %3661 = vst [vmem:[%s3565 + $0x278] sm:$0xff] %v3660
                  %v3662 = vld [vmem:[%s3564 + $0x180] sm:$0xff]
                  %3663 = vst [vmem:[%s3565 + $0x300] sm:$0xff] %v3662
                  %v3664 = vld [vmem:[%s3564 + $0x188] sm:$0xff]
                  %3665 = vst [vmem:[%s3565 + $0x308] sm:$0xff] %v3664
                  %v3666 = vld [vmem:[%s3564 + $0x190] sm:$0xff]
                  %3667 = vst [vmem:[%s3565 + $0x310] sm:$0xff] %v3666
                  %v3668 = vld [vmem:[%s3564 + $0x198] sm:$0xff]
                  %3669 = vst [vmem:[%s3565 + $0x318] sm:$0xff] %v3668
                  %v3670 = vld [vmem:[%s3564 + $0x1a0] sm:$0xff]
                  %3671 = vst [vmem:[%s3565 + $0x320] sm:$0xff] %v3670
                  %v3672 = vld [vmem:[%s3564 + $0x1a8] sm:$0xff]
                  %3673 = vst [vmem:[%s3565 + $0x328] sm:$0xff] %v3672
                  %v3674 = vld [vmem:[%s3564 + $0x1b0] sm:$0xff]
                  %3675 = vst [vmem:[%s3565 + $0x330] sm:$0xff] %v3674
                  %v3676 = vld [vmem:[%s3564 + $0x1b8] sm:$0xff]
                  %3677 = vst [vmem:[%s3565 + $0x338] sm:$0xff] %v3676
                  %v3678 = vld [vmem:[%s3564 + $0x1c0] sm:$0xff]
                  %3679 = vst [vmem:[%s3565 + $0x340] sm:$0xff] %v3678
                  %v3680 = vld [vmem:[%s3564 + $0x1c8] sm:$0xff]
                  %3681 = vst [vmem:[%s3565 + $0x348] sm:$0xff] %v3680
                  %v3682 = vld [vmem:[%s3564 + $0x1d0] sm:$0xff]
                  %3683 = vst [vmem:[%s3565 + $0x350] sm:$0xff] %v3682
                  %v3684 = vld [vmem:[%s3564 + $0x1d8] sm:$0xff]
                  %3685 = vst [vmem:[%s3565 + $0x358] sm:$0xff] %v3684
                  %v3686 = vld [vmem:[%s3564 + $0x1e0] sm:$0xff]
                  %3687 = vst [vmem:[%s3565 + $0x360] sm:$0xff] %v3686
                  %v3688 = vld [vmem:[%s3564 + $0x1e8] sm:$0xff]
                  %3689 = vst [vmem:[%s3565 + $0x368] sm:$0xff] %v3688
                  %v3690 = vld [vmem:[%s3564 + $0x1f0] sm:$0xff]
                  %3691 = vst [vmem:[%s3565 + $0x370] sm:$0xff] %v3690
                  %v3692 = vld [vmem:[%s3564 + $0x1f8] sm:$0xff]
                  %3693 = vst [vmem:[%s3565 + $0x378] sm:$0xff] %v3692
                $region72: #{upsample_conv2d_and_predict_flow.1} parent=66 // loop_footer
                  %s3563 = sadd.s32 1, %s3559
                $region73: #{upsample_conv2d_and_predict_flow.1} parent=66 // loop_footer_branch
                  %3558 = sbr.rel target = $region69
                $region74: #{upsample_conv2d_and_predict_flow.1} parent=66 // loop_exit
                  _
              $region67: #{upsample_conv2d_and_predict_flow.1} parent=51 // pred_fallthru
                _
              // Predicated region
              $region75: #{upsample_conv2d_and_predict_flow.1} parent=51 // pred_check
                _
              $region76: #{upsample_conv2d_and_predict_flow.1} parent=51 // pred_check_branch
                %3695 = sbr.rel target = $region78
              $region77: #{upsample_conv2d_and_predict_flow.1} parent=51 // pred_region
                _
              $region78: #{upsample_conv2d_and_predict_flow.1} parent=51 // pred_fallthru
                _
            $region52: #{upsample_conv2d_and_predict_flow.1} parent=47 // pred_fallthru
              _
            // Predicated region
            $region53: #{upsample_conv2d_and_predict_flow.1} parent=47 // pred_check
              _
            $region54: #{upsample_conv2d_and_predict_flow.1} parent=47 // pred_check_branch
              %3417 = sbr.rel target = $region56
            $region55: #{upsample_conv2d_and_predict_flow.1} parent=47 // pred_region
              %s3419 = ssub.s32 256, 1
              loop: start=0, step=1, limit=1
              $region57: #{upsample_conv2d_and_predict_flow.1} parent=55 // loop_pre_header
                _
              $region58: #{upsample_conv2d_and_predict_flow.1} parent=55 // loop_header
                %s3421 = sphi 0, %s3425
                %p3422 = scmp.ge.s32.totalorder %s3421, 1
                %s3426 = sphi %s3398, %s3398
                %s3427 = sphi %s3411, %s3411
              $region59: #{upsample_conv2d_and_predict_flow.1} parent=55 // loop_header_branch
                %3424 = sbr.rel (%p3422) target = $region63
              $region60: #{upsample_conv2d_and_predict_flow.1} parent=55 // loop_body
                %v3428 = vld [vmem:[%s3426] sm:%s3419]
                %3429 = vst [vmem:[%s3427] sm:%s3419] %v3428
                %v3430 = vld [vmem:[%s3426 + $0x8] sm:%s3419]
                %3431 = vst [vmem:[%s3427 + $0x8] sm:%s3419] %v3430
                %v3432 = vld [vmem:[%s3426 + $0x10] sm:%s3419]
                %3433 = vst [vmem:[%s3427 + $0x10] sm:%s3419] %v3432
                %v3434 = vld [vmem:[%s3426 + $0x18] sm:%s3419]
                %3435 = vst [vmem:[%s3427 + $0x18] sm:%s3419] %v3434
                %v3436 = vld [vmem:[%s3426 + $0x20] sm:%s3419]
                %3437 = vst [vmem:[%s3427 + $0x20] sm:%s3419] %v3436
                %v3438 = vld [vmem:[%s3426 + $0x28] sm:%s3419]
                %3439 = vst [vmem:[%s3427 + $0x28] sm:%s3419] %v3438
                %v3440 = vld [vmem:[%s3426 + $0x30] sm:%s3419]
                %3441 = vst [vmem:[%s3427 + $0x30] sm:%s3419] %v3440
                %v3442 = vld [vmem:[%s3426 + $0x38] sm:%s3419]
                %3443 = vst [vmem:[%s3427 + $0x38] sm:%s3419] %v3442
                %v3444 = vld [vmem:[%s3426 + $0x40] sm:%s3419]
                %3445 = vst [vmem:[%s3427 + $0x40] sm:%s3419] %v3444
                %v3446 = vld [vmem:[%s3426 + $0x48] sm:%s3419]
                %3447 = vst [vmem:[%s3427 + $0x48] sm:%s3419] %v3446
                %v3448 = vld [vmem:[%s3426 + $0x50] sm:%s3419]
                %3449 = vst [vmem:[%s3427 + $0x50] sm:%s3419] %v3448
                %v3450 = vld [vmem:[%s3426 + $0x58] sm:%s3419]
                %3451 = vst [vmem:[%s3427 + $0x58] sm:%s3419] %v3450
                %v3452 = vld [vmem:[%s3426 + $0x60] sm:%s3419]
                %3453 = vst [vmem:[%s3427 + $0x60] sm:%s3419] %v3452
                %v3454 = vld [vmem:[%s3426 + $0x68] sm:%s3419]
                %3455 = vst [vmem:[%s3427 + $0x68] sm:%s3419] %v3454
                %v3456 = vld [vmem:[%s3426 + $0x70] sm:%s3419]
                %3457 = vst [vmem:[%s3427 + $0x70] sm:%s3419] %v3456
                %v3458 = vld [vmem:[%s3426 + $0x78] sm:%s3419]
                %3459 = vst [vmem:[%s3427 + $0x78] sm:%s3419] %v3458
                %v3460 = vld [vmem:[%s3426 + $0x80] sm:%s3419]
                %3461 = vst [vmem:[%s3427 + $0x100] sm:%s3419] %v3460
                %v3462 = vld [vmem:[%s3426 + $0x88] sm:%s3419]
                %3463 = vst [vmem:[%s3427 + $0x108] sm:%s3419] %v3462
                %v3464 = vld [vmem:[%s3426 + $0x90] sm:%s3419]
                %3465 = vst [vmem:[%s3427 + $0x110] sm:%s3419] %v3464
                %v3466 = vld [vmem:[%s3426 + $0x98] sm:%s3419]
                %3467 = vst [vmem:[%s3427 + $0x118] sm:%s3419] %v3466
                %v3468 = vld [vmem:[%s3426 + $0xa0] sm:%s3419]
                %3469 = vst [vmem:[%s3427 + $0x120] sm:%s3419] %v3468
                %v3470 = vld [vmem:[%s3426 + $0xa8] sm:%s3419]
                %3471 = vst [vmem:[%s3427 + $0x128] sm:%s3419] %v3470
                %v3472 = vld [vmem:[%s3426 + $0xb0] sm:%s3419]
                %3473 = vst [vmem:[%s3427 + $0x130] sm:%s3419] %v3472
                %v3474 = vld [vmem:[%s3426 + $0xb8] sm:%s3419]
                %3475 = vst [vmem:[%s3427 + $0x138] sm:%s3419] %v3474
                %v3476 = vld [vmem:[%s3426 + $0xc0] sm:%s3419]
                %3477 = vst [vmem:[%s3427 + $0x140] sm:%s3419] %v3476
                %v3478 = vld [vmem:[%s3426 + $0xc8] sm:%s3419]
                %3479 = vst [vmem:[%s3427 + $0x148] sm:%s3419] %v3478
                %v3480 = vld [vmem:[%s3426 + $0xd0] sm:%s3419]
                %3481 = vst [vmem:[%s3427 + $0x150] sm:%s3419] %v3480
                %v3482 = vld [vmem:[%s3426 + $0xd8] sm:%s3419]
                %3483 = vst [vmem:[%s3427 + $0x158] sm:%s3419] %v3482
                %v3484 = vld [vmem:[%s3426 + $0xe0] sm:%s3419]
                %3485 = vst [vmem:[%s3427 + $0x160] sm:%s3419] %v3484
                %v3486 = vld [vmem:[%s3426 + $0xe8] sm:%s3419]
                %3487 = vst [vmem:[%s3427 + $0x168] sm:%s3419] %v3486
                %v3488 = vld [vmem:[%s3426 + $0xf0] sm:%s3419]
                %3489 = vst [vmem:[%s3427 + $0x170] sm:%s3419] %v3488
                %v3490 = vld [vmem:[%s3426 + $0xf8] sm:%s3419]
                %3491 = vst [vmem:[%s3427 + $0x178] sm:%s3419] %v3490
                %v3492 = vld [vmem:[%s3426 + $0x100] sm:%s3419]
                %3493 = vst [vmem:[%s3427 + $0x200] sm:%s3419] %v3492
                %v3494 = vld [vmem:[%s3426 + $0x108] sm:%s3419]
                %3495 = vst [vmem:[%s3427 + $0x208] sm:%s3419] %v3494
                %v3496 = vld [vmem:[%s3426 + $0x110] sm:%s3419]
                %3497 = vst [vmem:[%s3427 + $0x210] sm:%s3419] %v3496
                %v3498 = vld [vmem:[%s3426 + $0x118] sm:%s3419]
                %3499 = vst [vmem:[%s3427 + $0x218] sm:%s3419] %v3498
                %v3500 = vld [vmem:[%s3426 + $0x120] sm:%s3419]
                %3501 = vst [vmem:[%s3427 + $0x220] sm:%s3419] %v3500
                %v3502 = vld [vmem:[%s3426 + $0x128] sm:%s3419]
                %3503 = vst [vmem:[%s3427 + $0x228] sm:%s3419] %v3502
                %v3504 = vld [vmem:[%s3426 + $0x130] sm:%s3419]
                %3505 = vst [vmem:[%s3427 + $0x230] sm:%s3419] %v3504
                %v3506 = vld [vmem:[%s3426 + $0x138] sm:%s3419]
                %3507 = vst [vmem:[%s3427 + $0x238] sm:%s3419] %v3506
                %v3508 = vld [vmem:[%s3426 + $0x140] sm:%s3419]
                %3509 = vst [vmem:[%s3427 + $0x240] sm:%s3419] %v3508
                %v3510 = vld [vmem:[%s3426 + $0x148] sm:%s3419]
                %3511 = vst [vmem:[%s3427 + $0x248] sm:%s3419] %v3510
                %v3512 = vld [vmem:[%s3426 + $0x150] sm:%s3419]
                %3513 = vst [vmem:[%s3427 + $0x250] sm:%s3419] %v3512
                %v3514 = vld [vmem:[%s3426 + $0x158] sm:%s3419]
                %3515 = vst [vmem:[%s3427 + $0x258] sm:%s3419] %v3514
                %v3516 = vld [vmem:[%s3426 + $0x160] sm:%s3419]
                %3517 = vst [vmem:[%s3427 + $0x260] sm:%s3419] %v3516
                %v3518 = vld [vmem:[%s3426 + $0x168] sm:%s3419]
                %3519 = vst [vmem:[%s3427 + $0x268] sm:%s3419] %v3518
                %v3520 = vld [vmem:[%s3426 + $0x170] sm:%s3419]
                %3521 = vst [vmem:[%s3427 + $0x270] sm:%s3419] %v3520
                %v3522 = vld [vmem:[%s3426 + $0x178] sm:%s3419]
                %3523 = vst [vmem:[%s3427 + $0x278] sm:%s3419] %v3522
                %v3524 = vld [vmem:[%s3426 + $0x180] sm:%s3419]
                %3525 = vst [vmem:[%s3427 + $0x300] sm:%s3419] %v3524
                %v3526 = vld [vmem:[%s3426 + $0x188] sm:%s3419]
                %3527 = vst [vmem:[%s3427 + $0x308] sm:%s3419] %v3526
                %v3528 = vld [vmem:[%s3426 + $0x190] sm:%s3419]
                %3529 = vst [vmem:[%s3427 + $0x310] sm:%s3419] %v3528
                %v3530 = vld [vmem:[%s3426 + $0x198] sm:%s3419]
                %3531 = vst [vmem:[%s3427 + $0x318] sm:%s3419] %v3530
                %v3532 = vld [vmem:[%s3426 + $0x1a0] sm:%s3419]
                %3533 = vst [vmem:[%s3427 + $0x320] sm:%s3419] %v3532
                %v3534 = vld [vmem:[%s3426 + $0x1a8] sm:%s3419]
                %3535 = vst [vmem:[%s3427 + $0x328] sm:%s3419] %v3534
                %v3536 = vld [vmem:[%s3426 + $0x1b0] sm:%s3419]
                %3537 = vst [vmem:[%s3427 + $0x330] sm:%s3419] %v3536
                %v3538 = vld [vmem:[%s3426 + $0x1b8] sm:%s3419]
                %3539 = vst [vmem:[%s3427 + $0x338] sm:%s3419] %v3538
                %v3540 = vld [vmem:[%s3426 + $0x1c0] sm:%s3419]
                %3541 = vst [vmem:[%s3427 + $0x340] sm:%s3419] %v3540
                %v3542 = vld [vmem:[%s3426 + $0x1c8] sm:%s3419]
                %3543 = vst [vmem:[%s3427 + $0x348] sm:%s3419] %v3542
                %v3544 = vld [vmem:[%s3426 + $0x1d0] sm:%s3419]
                %3545 = vst [vmem:[%s3427 + $0x350] sm:%s3419] %v3544
                %v3546 = vld [vmem:[%s3426 + $0x1d8] sm:%s3419]
                %3547 = vst [vmem:[%s3427 + $0x358] sm:%s3419] %v3546
                %v3548 = vld [vmem:[%s3426 + $0x1e0] sm:%s3419]
                %3549 = vst [vmem:[%s3427 + $0x360] sm:%s3419] %v3548
                %v3550 = vld [vmem:[%s3426 + $0x1e8] sm:%s3419]
                %3551 = vst [vmem:[%s3427 + $0x368] sm:%s3419] %v3550
                %v3552 = vld [vmem:[%s3426 + $0x1f0] sm:%s3419]
                %3553 = vst [vmem:[%s3427 + $0x370] sm:%s3419] %v3552
                %v3554 = vld [vmem:[%s3426 + $0x1f8] sm:%s3419]
                %3555 = vst [vmem:[%s3427 + $0x378] sm:%s3419] %v3554
              $region61: #{upsample_conv2d_and_predict_flow.1} parent=55 // loop_footer
                %s3425 = sadd.s32 1, %s3421
              $region62: #{upsample_conv2d_and_predict_flow.1} parent=55 // loop_footer_branch
                %3420 = sbr.rel target = $region58
              $region63: #{upsample_conv2d_and_predict_flow.1} parent=55 // loop_exit
                _
            $region56: #{upsample_conv2d_and_predict_flow.1} parent=47 // pred_fallthru
              _
          $region48: #{upsample_conv2d_and_predict_flow.1} parent=43 // pred_fallthru
            _
          %3696 = vnop
        $region44: #{upsample_conv2d_and_predict_flow.1} parent=39 // pred_fallthru
          _
        // Predicated region
        $region79: #{upsample_conv2d_and_predict_flow.1} parent=39 // pred_check
          %p3697 = pneg %p190
        $region80: #{upsample_conv2d_and_predict_flow.1} parent=39 // pred_check_branch
          %3699 = sbr.rel (%p3697) target = $region82
        $region81: #{upsample_conv2d_and_predict_flow.1} parent=39 // pred_region
          %s3700 = smul.addr %s22, 16
          %s3701 = sadd.s32 %s23, %s3700
          %s3702 = smul.addr %s3701, 8
          %s3703 = scalar_lea.vmem %s6, %s3702
          // Predicated region
          $region83: #{upsample_conv2d_and_predict_flow.1} parent=81 // pred_check
            _
          $region84: #{upsample_conv2d_and_predict_flow.1} parent=81 // pred_check_branch
            %3705 = sbr.rel (0) target = $region86
          $region85: #{upsample_conv2d_and_predict_flow.1} parent=81 // pred_region
            // Predicated region
            $region87: #{upsample_conv2d_and_predict_flow.1} parent=85 // pred_check
              _
            $region88: #{upsample_conv2d_and_predict_flow.1} parent=85 // pred_check_branch
              %3707 = sbr.rel (0) target = $region90
            $region89: #{upsample_conv2d_and_predict_flow.1} parent=85 // pred_region
              // Predicated region
              $region102: #{upsample_conv2d_and_predict_flow.1} parent=89 // pred_check
                _
              $region103: #{upsample_conv2d_and_predict_flow.1} parent=89 // pred_check_branch
                %3737 = sbr.rel (0) target = $region105
              $region104: #{upsample_conv2d_and_predict_flow.1} parent=89 // pred_region
                loop: start=0, step=1, limit=1
                $region106: #{upsample_conv2d_and_predict_flow.1} parent=104 // loop_pre_header
                  _
                $region107: #{upsample_conv2d_and_predict_flow.1} parent=104 // loop_header
                  %s3739 = sphi 0, %s3743
                  %p3740 = scmp.ge.s32.totalorder %s3739, 1
                  %s3744 = sphi %s3402, %s3402
                  %s3745 = sphi %s3703, %s3703
                $region108: #{upsample_conv2d_and_predict_flow.1} parent=104 // loop_header_branch
                  %3742 = sbr.rel (%p3740) target = $region112
                $region109: #{upsample_conv2d_and_predict_flow.1} parent=104 // loop_body
                  %v3746 = vld [vmem:[%s3744] sm:$0xff]
                  %3747 = vst [vmem:[%s3745] sm:$0xff] %v3746
                  %v3748 = vld [vmem:[%s3744 + $0x8] sm:$0xff]
                  %3749 = vst [vmem:[%s3745 + $0x10] sm:$0xff] %v3748
                  %v3750 = vld [vmem:[%s3744 + $0x10] sm:$0xff]
                  %3751 = vst [vmem:[%s3745 + $0x20] sm:$0xff] %v3750
                  %v3752 = vld [vmem:[%s3744 + $0x18] sm:$0xff]
                  %3753 = vst [vmem:[%s3745 + $0x30] sm:$0xff] %v3752
                  %v3754 = vld [vmem:[%s3744 + $0x20] sm:$0xff]
                  %3755 = vst [vmem:[%s3745 + $0x40] sm:$0xff] %v3754
                  %v3756 = vld [vmem:[%s3744 + $0x28] sm:$0xff]
                  %3757 = vst [vmem:[%s3745 + $0x50] sm:$0xff] %v3756
                  %v3758 = vld [vmem:[%s3744 + $0x30] sm:$0xff]
                  %3759 = vst [vmem:[%s3745 + $0x60] sm:$0xff] %v3758
                  %v3760 = vld [vmem:[%s3744 + $0x38] sm:$0xff]
                  %3761 = vst [vmem:[%s3745 + $0x70] sm:$0xff] %v3760
                $region110: #{upsample_conv2d_and_predict_flow.1} parent=104 // loop_footer
                  %s3743 = sadd.s32 1, %s3739
                $region111: #{upsample_conv2d_and_predict_flow.1} parent=104 // loop_footer_branch
                  %3738 = sbr.rel target = $region107
                $region112: #{upsample_conv2d_and_predict_flow.1} parent=104 // loop_exit
                  _
              $region105: #{upsample_conv2d_and_predict_flow.1} parent=89 // pred_fallthru
                _
              // Predicated region
              $region113: #{upsample_conv2d_and_predict_flow.1} parent=89 // pred_check
                _
              $region114: #{upsample_conv2d_and_predict_flow.1} parent=89 // pred_check_branch
                %3763 = sbr.rel target = $region116
              $region115: #{upsample_conv2d_and_predict_flow.1} parent=89 // pred_region
                _
              $region116: #{upsample_conv2d_and_predict_flow.1} parent=89 // pred_fallthru
                _
            $region90: #{upsample_conv2d_and_predict_flow.1} parent=85 // pred_fallthru
              _
            // Predicated region
            $region91: #{upsample_conv2d_and_predict_flow.1} parent=85 // pred_check
              _
            $region92: #{upsample_conv2d_and_predict_flow.1} parent=85 // pred_check_branch
              %3709 = sbr.rel target = $region94
            $region93: #{upsample_conv2d_and_predict_flow.1} parent=85 // pred_region
              %s3711 = ssub.s32 256, 1
              loop: start=0, step=1, limit=1
              $region95: #{upsample_conv2d_and_predict_flow.1} parent=93 // loop_pre_header
                _
              $region96: #{upsample_conv2d_and_predict_flow.1} parent=93 // loop_header
                %s3713 = sphi 0, %s3717
                %p3714 = scmp.ge.s32.totalorder %s3713, 1
                %s3718 = sphi %s3402, %s3402
                %s3719 = sphi %s3703, %s3703
              $region97: #{upsample_conv2d_and_predict_flow.1} parent=93 // loop_header_branch
                %3716 = sbr.rel (%p3714) target = $region101
              $region98: #{upsample_conv2d_and_predict_flow.1} parent=93 // loop_body
                %v3720 = vld [vmem:[%s3718] sm:%s3711]
                %3721 = vst [vmem:[%s3719] sm:%s3711] %v3720
                %v3722 = vld [vmem:[%s3718 + $0x8] sm:%s3711]
                %3723 = vst [vmem:[%s3719 + $0x10] sm:%s3711] %v3722
                %v3724 = vld [vmem:[%s3718 + $0x10] sm:%s3711]
                %3725 = vst [vmem:[%s3719 + $0x20] sm:%s3711] %v3724
                %v3726 = vld [vmem:[%s3718 + $0x18] sm:%s3711]
                %3727 = vst [vmem:[%s3719 + $0x30] sm:%s3711] %v3726
                %v3728 = vld [vmem:[%s3718 + $0x20] sm:%s3711]
                %3729 = vst [vmem:[%s3719 + $0x40] sm:%s3711] %v3728
                %v3730 = vld [vmem:[%s3718 + $0x28] sm:%s3711]
                %3731 = vst [vmem:[%s3719 + $0x50] sm:%s3711] %v3730
                %v3732 = vld [vmem:[%s3718 + $0x30] sm:%s3711]
                %3733 = vst [vmem:[%s3719 + $0x60] sm:%s3711] %v3732
                %v3734 = vld [vmem:[%s3718 + $0x38] sm:%s3711]
                %3735 = vst [vmem:[%s3719 + $0x70] sm:%s3711] %v3734
              $region99: #{upsample_conv2d_and_predict_flow.1} parent=93 // loop_footer
                %s3717 = sadd.s32 1, %s3713
              $region100: #{upsample_conv2d_and_predict_flow.1} parent=93 // loop_footer_branch
                %3712 = sbr.rel target = $region96
              $region101: #{upsample_conv2d_and_predict_flow.1} parent=93 // loop_exit
                _
            $region94: #{upsample_conv2d_and_predict_flow.1} parent=85 // pred_fallthru
              _
          $region86: #{upsample_conv2d_and_predict_flow.1} parent=81 // pred_fallthru
            _
          %3764 = vnop
        $region82: #{upsample_conv2d_and_predict_flow.1} parent=39 // pred_fallthru
          _
      $region40: #{upsample_conv2d_and_predict_flow.1} parent=5 // pred_fallthru
        _
      %p3765 = scmp.le.s32.totalorder 2, %s13
      // Predicated region
      $region117: #{upsample_conv2d_and_predict_flow.1} parent=5 // pred_check
        %p3766 = pneg %p3765
      $region118: #{upsample_conv2d_and_predict_flow.1} parent=5 // pred_check_branch
        %3768 = sbr.rel (%p3766) target = $region120
      $region119: #{upsample_conv2d_and_predict_flow.1} parent=5 // pred_region
        %s3769 = ssub.s32 %s13, 2
        // Predicated region
        $region121: #{upsample_conv2d_and_predict_flow.1} parent=119 // pred_check
          %p3770 = pneg %p168
        $region122: #{upsample_conv2d_and_predict_flow.1} parent=119 // pred_check_branch
          %3772 = sbr.rel (%p3770) target = $region124
        $region123: #{upsample_conv2d_and_predict_flow.1} parent=119 // pred_region
          %s3773 = sand.u32 %s153, 1
          %s3774 = sand.u32 %s153, 1
          %s3775 = smul.addr %s3774, 512
          %s3776 = scalar_lea.vmem [#allocation2], %s3775
        $region124: #{upsample_conv2d_and_predict_flow.1} parent=119 // pred_fallthru
          _
        // Predicated region
        $region125: #{upsample_conv2d_and_predict_flow.1} parent=119 // pred_check
          %p3777 = pneg %p196
        $region126: #{upsample_conv2d_and_predict_flow.1} parent=119 // pred_check_branch
          %3779 = sbr.rel (%p3777) target = $region128
        $region127: #{upsample_conv2d_and_predict_flow.1} parent=119 // pred_region
          %s3780 = sand.u32 %s181, 1
          %s3781 = sand.u32 %s181, 1
          %s3782 = smul.addr %s3781, 64
          %s3783 = scalar_lea.vmem [#allocation3], %s3782
        $region128: #{upsample_conv2d_and_predict_flow.1} parent=119 // pred_fallthru
          _
      $region120: #{upsample_conv2d_and_predict_flow.1} parent=5 // pred_fallthru
        _
    $region6: #{upsample_conv2d_and_predict_flow.1} parent=1 // loop_footer
      %s17 = sadd.s32 1, %s13
    $region7: #{upsample_conv2d_and_predict_flow.1} parent=1 // loop_footer_branch
      %12 = sbr.rel target = $region3
    $region8: #{upsample_conv2d_and_predict_flow.1} parent=1 // loop_exit
      _

</llo_original>
